<compile_context>
chip_gen: v7x
topology: tpu7x:2x2x1
jax: 0.10.0
libtpu: 0.0.40
codegen_flags: <defaults>
</compile_context>

<pallas_src>
import jax
import jax.numpy as jnp
from jax.experimental import pallas as pl
from jax.experimental.pallas import tpu as pltpu

LANES = 128          # vreg lane width; pad all matmul N dims to this
NUM_CLASSES = 10
CONV1_OUT = 6
CONV2_OUT = 16

_VMEM = pl.BlockSpec(memory_space=pltpu.MemorySpace.VMEM)


def _sigmoid(x):
    # sigmoid(x) == 0.5 * (tanh(x/2) + 1): single EUP tanh, no VPU divide.
    return 0.5 * (jnp.tanh(0.5 * x) + 1.0)


# ----------------------------------------------------------------------------
# Pallas kernels
# ----------------------------------------------------------------------------
def _conv_pool_sigmoid_kernel(p_ref, w_ref, b_ref, o_ref):
    """Fused conv (matmul over im2col patches) + bias + 2x2 maxpool + sigmoid.

    p_ref: (4, tm, K)  im2col patches, leading axis = the 4 pool-window phases
    w_ref: (K, 128)    conv weight, out-channels zero-padded to 128 lanes
    b_ref: (1, 128)    bias (padded)
    o_ref: (tm, 128)   pooled + activated output, channels on the lane axis
    """
    w = w_ref[...]
    d0 = jnp.dot(p_ref[0], w, preferred_element_type=jnp.float32)
    d1 = jnp.dot(p_ref[1], w, preferred_element_type=jnp.float32)
    d2 = jnp.dot(p_ref[2], w, preferred_element_type=jnp.float32)
    d3 = jnp.dot(p_ref[3], w, preferred_element_type=jnp.float32)
    pooled = jnp.maximum(jnp.maximum(d0, d1), jnp.maximum(d2, d3)) + b_ref[...]
    o_ref[...] = _sigmoid(pooled).astype(o_ref.dtype)


def _mlp_head_kernel(x_ref, w1_ref, b1_ref, w2_ref, b2_ref, w3_ref, b3_ref,
                     o_ref):
    """Fused fc1+sigmoid -> fc2+sigmoid -> fc3 -> log_softmax.

    All weights are (K, 128) lane-padded; padded fc3 classes are masked before
    the softmax so the padding never affects the real log-probabilities.
    """
    h = _sigmoid(jnp.dot(x_ref[...], w1_ref[...],
                         preferred_element_type=jnp.float32) + b1_ref[...])
    # TODO(synk): nn.Dropout is identity at inference; a training-mode
    # Bernoulli mask (via pltpu.prng_*) is not implemented here.
    h = _sigmoid(jnp.dot(h, w2_ref[...],
                         preferred_element_type=jnp.float32) + b2_ref[...])
    logits = jnp.dot(h, w3_ref[...],
                     preferred_element_type=jnp.float32) + b3_ref[...]
    col = jax.lax.broadcasted_iota(jnp.int32, logits.shape, 1)
    logits = jnp.where(col < NUM_CLASSES, logits, -1e30)  # mask padded classes
    m = jnp.max(logits, axis=-1, keepdims=True)
    s = logits - m
    lse = jnp.log(jnp.sum(jnp.exp(s), axis=-1, keepdims=True))
    o_ref[...] = (s - lse).astype(o_ref.dtype)


# ----------------------------------------------------------------------------
# pallas_call wrappers
# ----------------------------------------------------------------------------
def conv_pool_sigmoid(patches, w, b, *, tm=256):
    """patches: (4, M, K), w: (K, 128), b: (1, 128) -> (M, 128)."""
    nph, m_rows, k_dim = patches.shape
    n_dim = w.shape[1]

    if m_rows <= tm:
        # Tiny batch: a single full-array block (no grid needed).
        return pl.pallas_call(
            _conv_pool_sigmoid_kernel,
            out_shape=jax.ShapeDtypeStruct((m_rows, n_dim), jnp.float32),
            in_specs=[_VMEM, _VMEM, _VMEM],
            out_specs=_VMEM,
        )(patches, w, b)

    # Larger M: tile rows, pipeline, and let megacore parts run in parallel.
    mp = ((m_rows + tm - 1) // tm) * tm
    if mp != m_rows:
        patches = jnp.pad(patches, ((0, 0), (0, mp - m_rows), (0, 0)))
    out = pl.pallas_call(
        _conv_pool_sigmoid_kernel,
        out_shape=jax.ShapeDtypeStruct((mp, n_dim), jnp.float32),
        grid=(mp // tm,),
        in_specs=[
            pl.BlockSpec((nph, tm, k_dim), lambda i: (0, i, 0)),
            pl.BlockSpec((k_dim, n_dim), lambda i: (0, 0)),
            pl.BlockSpec((1, n_dim), lambda i: (0, 0)),
        ],
        out_specs=pl.BlockSpec((tm, n_dim), lambda i: (i, 0)),
        compiler_params=pltpu.CompilerParams(
            dimension_semantics=("parallel",)),
    )(patches, w, b)
    return out[:m_rows]


def mlp_head(x, p):
    """x: (B, 400) -> (B, 128) log-probs (first NUM_CLASSES columns valid)."""
    b_rows = x.shape[0]
    return pl.pallas_call(
        _mlp_head_kernel,
        out_shape=jax.ShapeDtypeStruct((b_rows, LANES), jnp.float32),
        in_specs=[_VMEM] * 7,
        out_specs=_VMEM,
    )(x, p["fc1_w"], p["fc1_b"], p["fc2_w"], p["fc2_b"], p["fc3_w"], p["fc3_b"])


# ----------------------------------------------------------------------------
# JAX glue: im2col split by pool phase
# ----------------------------------------------------------------------------
def _pool_phase_patches(x_nhwc, k):
    """im2col for a VALID kxk conv (stride 1) followed by a 2x2/2 maxpool.

    Returns (patches, (B, Hp, Wp)) with patches of shape (4, B*Hp*Wp, k*k*C);
    the leading axis enumerates the 4 pool-window phases and the feature axis
    is ordered (kh, kw, C) to match the prepared conv weights.
    """
    bsz, h, w, c = x_nhwc.shape
    ho, wo = h - k + 1, w - k + 1
    hp, wp = ho // 2, wo // 2
    cols = [x_nhwc[:, ki:ki + ho, kj:kj + wo, :]
            for ki in range(k) for kj in range(k)]
    patches = jnp.stack(cols, axis=3)                      # (B, Ho, Wo, k*k, C)
    feat = k * k * c
    patches = patches.reshape(bsz, ho, wo, feat)
    patches = patches[:, :2 * hp, :2 * wp, :].reshape(bsz, hp, 2, wp, 2, feat)
    patches = patches.transpose(2, 4, 0, 1, 3, 5)          # (2, 2, B, Hp, Wp, F)
    return patches.reshape(4, bsz * hp * wp, feat), (bsz, hp, wp)


# ----------------------------------------------------------------------------
# One-time parameter preparation (layout + lane padding)
# ----------------------------------------------------------------------------
def prepare_params(params):
    """Fold PyTorch layouts into MXU-friendly, 128-lane-padded (K, N) weights
    once, so the per-forward path contains no weight transposes."""
    def pad_to(a, shape):
        return jnp.pad(a, [(0, t - s) for s, t in zip(a.shape, shape)])

    k = 5
    # conv weights: (O, C, kh, kw) -> (kh, kw, C, O) -> (kh*kw*C, O), pad N
    w1 = params["conv1_w"].transpose(2, 3, 1, 0).reshape(k * k * 1, CONV1_OUT)
    w2 = params["conv2_w"].transpose(2, 3, 1, 0).reshape(k * k * CONV1_OUT,
                                                         CONV2_OUT)
    # fc1: reorder input features from PyTorch's (C, hp, wp) flatten to our
    # (hp, wp, C) flatten, transpose to (K, N), pad N to 128.
    fc1 = params["fc1_w"].reshape(120, CONV2_OUT, 5, 5) \
                         .transpose(2, 3, 1, 0).reshape(400, 120)
    fc2 = params["fc2_w"].T                                # (120, 84)
    fc3 = params["fc3_w"].T                                # (84, 10)
    return {
        "conv1_w": pad_to(w1, (w1.shape[0], LANES)),
        "conv1_b": pad_to(params["conv1_b"], (LANES,)).reshape(1, LANES),
        "conv2_w": pad_to(w2, (w2.shape[0], LANES)),
        "conv2_b": pad_to(params["conv2_b"], (LANES,)).reshape(1, LANES),
        "fc1_w": pad_to(fc1, (400, LANES)),
        "fc1_b": pad_to(params["fc1_b"], (LANES,)).reshape(1, LANES),
        "fc2_w": pad_to(fc2, (LANES, LANES)),
        "fc2_b": pad_to(params["fc2_b"], (LANES,)).reshape(1, LANES),
        "fc3_w": pad_to(fc3, (LANES, LANES)),
        "fc3_b": pad_to(params["fc3_b"], (LANES,)).reshape(1, LANES),
    }


# ----------------------------------------------------------------------------
# LeNet-5 forward (inference)
# ----------------------------------------------------------------------------
def lenet5_forward(prepared, x):
    """x: (B, 1, 32, 32) NCHW -> (B, 10) log-probabilities."""
    bsz, c, h, w = x.shape
    x = x.reshape(bsz, h, w, c)        # NCHW with C==1 -> NHWC is a pure reshape
    # conv1(5x5) -> maxpool(2,2) -> sigmoid, fused into one kernel
    p1, (_, hp1, wp1) = _pool_phase_patches(x, 5)           # (4, B*14*14, 25)
    h1 = conv_pool_sigmoid(p1, prepared["conv1_w"], prepared["conv1_b"])
    h1 = h1[:, :CONV1_OUT].reshape(bsz, hp1, wp1, CONV1_OUT)
    # conv2(5x5) -> maxpool(2,2) -> sigmoid, fused into one kernel
    p2, (_, hp2, wp2) = _pool_phase_patches(h1, 5)          # (4, B*5*5, 150)
    h2 = conv_pool_sigmoid(p2, prepared["conv2_w"], prepared["conv2_b"])
    feat = h2[:, :CONV2_OUT].reshape(bsz, hp2 * wp2 * CONV2_OUT)   # (B, 400)
    # fc1 -> sigmoid -> (dropout=id) -> fc2 -> sigmoid -> (dropout=id)
    # -> fc3 -> log_softmax, fused into one kernel
    out = mlp_head(feat, prepared)                          # (B, 128) lane-dense
    return out[:, :NUM_CLASSES]


# ----------------------------------------------------------------------------
# Pure-JAX reference (PyTorch semantics) for correctness checking
# ----------------------------------------------------------------------------
def _reference_forward(params, x):
    hi = jax.lax.Precision.HIGHEST

    def conv(t, w, b):
        y = jax.lax.conv_general_dilated(
            t, w, (1, 1), "VALID",
            dimension_numbers=("NCHW", "OIHW", "NCHW"), precision=hi)
        return y + b[None, :, None, None]

    def pool(t):
        b, c, h, w = t.shape
        return jnp.max(t.reshape(b, c, h // 2, 2, w // 2, 2), axis=(3, 5))

    sig = jax.nn.sigmoid
    h = sig(pool(conv(x, params["conv1_w"], params["conv1_b"])))
    h = sig(pool(conv(h, params["conv2_w"], params["conv2_b"])))
    h = h.reshape(h.shape[0], -1)                           # NCHW flatten
    h = sig(jnp.dot(h, params["fc1_w"].T, precision=hi) + params["fc1_b"])
    h = sig(jnp.dot(h, params["fc2_w"].T, precision=hi) + params["fc2_b"])
    logits = jnp.dot(h, params["fc3_w"].T, precision=hi) + params["fc3_b"]
    return jax.nn.log_softmax(logits, axis=-1)


def init_params(key):
    ks = jax.random.split(key, 10)
    scale = 0.1
    return {
        "conv1_w": scale * jax.random.normal(ks[0], (6, 1, 5, 5), jnp.float32),
        "conv1_b": scale * jax.random.normal(ks[1], (6,), jnp.float32),
        "conv2_w": scale * jax.random.normal(ks[2], (16, 6, 5, 5), jnp.float32),
        "conv2_b": scale * jax.random.normal(ks[3], (16,), jnp.float32),
        "fc1_w": scale * jax.random.normal(ks[4], (120, 400), jnp.float32),
        "fc1_b": scale * jax.random.normal(ks[5], (120,), jnp.float32),
        "fc2_w": scale * jax.random.normal(ks[6], (84, 120), jnp.float32),
        "fc2_b": scale * jax.random.normal(ks[7], (84,), jnp.float32),
        "fc3_w": scale * jax.random.normal(ks[8], (10, 84), jnp.float32),
        "fc3_b": scale * jax.random.normal(ks[9], (10,), jnp.float32),
    }


if __name__ == "__main__":
    key = jax.random.PRNGKey(0)
    pkey, xkey = jax.random.split(key)
    params = init_params(pkey)
    prepared = prepare_params(params)        # one-time layout prep / padding
    # LeNet-5 expects 32x32 single-channel images (so 16*5*5 = 400 features).
    x = jax.random.normal(xkey, (2, 1, 32, 32), jnp.float32)

    fwd = jax.jit(lenet5_forward)
    out = jax.block_until_ready(fwd(prepared, x))

    assert out.shape == (2, NUM_CLASSES)
    # log-softmax rows must exponentiate-and-sum to ~1
    assert bool(jnp.all(jnp.abs(jnp.sum(jnp.exp(out), axis=1) - 1.0) < 1e-4))
    # match the pure-JAX (PyTorch-semantics) reference
    ref = _reference_forward(params, x)
    assert float(jnp.max(jnp.abs(out - ref))) < 5e-3
    print("KERNEL_OK")
</pallas_src>

<mosaic_0001>
module attributes {stable_mosaic.version = 11 : i64} {
  func.func @_conv_pool_sigmoid_kernel(%arg0: i32, %arg1: memref<4x256x25xf32, #tpu.memory_space<vmem>>, %arg2: memref<25x128xf32, #tpu.memory_space<vmem>>, %arg3: memref<1x128xf32, #tpu.memory_space<vmem>>, %arg4: memref<256x128xf32, #tpu.memory_space<vmem>>) attributes {dimension_semantics = [#tpu.dimension_semantics<parallel>], iteration_bounds = array<i64: 2>, scalar_prefetch = 0 : i64, scratch_operands = 0 : i64, tpu.core_type = #tpu.core_type<tc>, window_params = [{transform_indices = @transform_0, window_bounds = array<i64: 4, 256, 25>}, {pipeline_mode = #tpu.pipeline_mode<synchronous>, transform_indices = @transform_1, window_bounds = array<i64: 25, 128>}, {pipeline_mode = #tpu.pipeline_mode<synchronous>, transform_indices = @transform_2, window_bounds = array<i64: 1, 128>}, {transform_indices = @transform_3, window_bounds = array<i64: 256, 128>}]} {
    %c0 = arith.constant 0 : index
    %c0_0 = arith.constant 0 : index
    %0 = vector.load %arg2[%c0, %c0_0] : memref<25x128xf32, #tpu.memory_space<vmem>>, vector<25x128xf32>
    %c0_1 = arith.constant 0 : index
    %c0_2 = arith.constant 0 : index
    %c0_3 = arith.constant 0 : index
    %1 = vector.load %arg1[%c0_1, %c0_2, %c0_3] : memref<4x256x25xf32, #tpu.memory_space<vmem>>, vector<1x256x25xf32>
    %2 = vector.shape_cast %1 : vector<1x256x25xf32> to vector<256x25xf32>
    %cst = arith.constant dense<0.000000e+00> : vector<256x128xf32>
    %3 = tpu.matmul %2, %0, %cst {dimension_numbers = #tpu.dot_dimension_numbers<[1], [0], [0], [1], [0, 0, 1, 1], [], []>} : vector<256x25xf32>, vector<25x128xf32>, vector<256x128xf32> -> vector<256x128xf32>
    %c1 = arith.constant 1 : index
    %c0_4 = arith.constant 0 : index
    %c0_5 = arith.constant 0 : index
    %4 = vector.load %arg1[%c1, %c0_4, %c0_5] : memref<4x256x25xf32, #tpu.memory_space<vmem>>, vector<1x256x25xf32>
    %5 = vector.shape_cast %4 : vector<1x256x25xf32> to vector<256x25xf32>
    %cst_6 = arith.constant dense<0.000000e+00> : vector<256x128xf32>
    %6 = tpu.matmul %5, %0, %cst_6 {dimension_numbers = #tpu.dot_dimension_numbers<[1], [0], [0], [1], [0, 0, 1, 1], [], []>} : vector<256x25xf32>, vector<25x128xf32>, vector<256x128xf32> -> vector<256x128xf32>
    %c2 = arith.constant 2 : index
    %c0_7 = arith.constant 0 : index
    %c0_8 = arith.constant 0 : index
    %7 = vector.load %arg1[%c2, %c0_7, %c0_8] : memref<4x256x25xf32, #tpu.memory_space<vmem>>, vector<1x256x25xf32>
    %8 = vector.shape_cast %7 : vector<1x256x25xf32> to vector<256x25xf32>
    %cst_9 = arith.constant dense<0.000000e+00> : vector<256x128xf32>
    %9 = tpu.matmul %8, %0, %cst_9 {dimension_numbers = #tpu.dot_dimension_numbers<[1], [0], [0], [1], [0, 0, 1, 1], [], []>} : vector<256x25xf32>, vector<25x128xf32>, vector<256x128xf32> -> vector<256x128xf32>
    %c3 = arith.constant 3 : index
    %c0_10 = arith.constant 0 : index
    %c0_11 = arith.constant 0 : index
    %10 = vector.load %arg1[%c3, %c0_10, %c0_11] : memref<4x256x25xf32, #tpu.memory_space<vmem>>, vector<1x256x25xf32>
    %11 = vector.shape_cast %10 : vector<1x256x25xf32> to vector<256x25xf32>
    %cst_12 = arith.constant dense<0.000000e+00> : vector<256x128xf32>
    %12 = tpu.matmul %11, %0, %cst_12 {dimension_numbers = #tpu.dot_dimension_numbers<[1], [0], [0], [1], [0, 0, 1, 1], [], []>} : vector<256x25xf32>, vector<25x128xf32>, vector<256x128xf32> -> vector<256x128xf32>
    %13 = arith.maximumf %3, %6 : vector<256x128xf32>
    %14 = arith.maximumf %9, %12 : vector<256x128xf32>
    %15 = arith.maximumf %13, %14 : vector<256x128xf32>
    %c0_13 = arith.constant 0 : index
    %c0_14 = arith.constant 0 : index
    %16 = vector.load %arg3[%c0_13, %c0_14] : memref<1x128xf32, #tpu.memory_space<vmem>>, vector<1x128xf32>
    %17 = vector.broadcast %16 : vector<1x128xf32> to vector<256x128xf32>
    %18 = arith.addf %15, %17 : vector<256x128xf32>
    %cst_15 = arith.constant 5.000000e-01 : f32
    %19 = vector.broadcast %cst_15 : f32 to vector<256x128xf32>
    %20 = arith.mulf %19, %18 : vector<256x128xf32>
    %21 = math.tanh %20 : vector<256x128xf32>
    %cst_16 = arith.constant 1.000000e+00 : f32
    %22 = vector.broadcast %cst_16 : f32 to vector<256x128xf32>
    %23 = arith.addf %21, %22 : vector<256x128xf32>
    %cst_17 = arith.constant 5.000000e-01 : f32
    %24 = vector.broadcast %cst_17 : f32 to vector<256x128xf32>
    %25 = arith.mulf %24, %23 : vector<256x128xf32>
    %c0_18 = arith.constant 0 : index
    %c0_19 = arith.constant 0 : index
    %26 = vector.load %arg4[%c0_18, %c0_19] : memref<256x128xf32, #tpu.memory_space<vmem>>, vector<256x128xf32>
    tpu.vector_store %arg4[%c0_18, %c0_19], %25 {strides = array<i32>} : memref<256x128xf32, #tpu.memory_space<vmem>>, vector<256x128xf32>,
    return
  }
  func.func @transform_0(%arg0: i32) -> (i32, i32, i32) {
    %c0_i32 = arith.constant 0 : i32
    %c0_i32_0 = arith.constant 0 : i32
    %c0_i32_1 = arith.constant 0 : i32
    return %c0_i32, %arg0, %c0_i32_0 : i32, i32, i32
  }
  func.func @transform_1(%arg0: i32) -> (i32, i32) {
    %c0_i32 = arith.constant 0 : i32
    %c0_i32_0 = arith.constant 0 : i32
    %c0_i32_1 = arith.constant 0 : i32
    return %c0_i32, %c0_i32_0 : i32, i32
  }
  func.func @transform_2(%arg0: i32) -> (i32, i32) {
    %c0_i32 = arith.constant 0 : i32
    %c0_i32_0 = arith.constant 0 : i32
    %c0_i32_1 = arith.constant 0 : i32
    return %c0_i32, %c0_i32_0 : i32, i32
  }
  func.func @transform_3(%arg0: i32) -> (i32, i32) {
    %c0_i32 = arith.constant 0 : i32
    %c0_i32_0 = arith.constant 0 : i32
    return %arg0, %c0_i32 : i32, i32
  }
}

module attributes {stable_mosaic.version = 11 : i64} {
  func.func @_conv_pool_sigmoid_kernel(%arg0: memref<4x50x150xf32, #tpu.memory_space<vmem>>, %arg1: memref<150x128xf32, #tpu.memory_space<vmem>>, %arg2: memref<1x128xf32, #tpu.memory_space<vmem>>, %arg3: memref<50x128xf32, #tpu.memory_space<vmem>>) attributes {dimension_semantics = [], scalar_prefetch = 0 : i64, scratch_operands = 0 : i64, tpu.core_type = #tpu.core_type<tc>} {
    %c0 = arith.constant 0 : index
    %c0_0 = arith.constant 0 : index
    %0 = vector.load %arg1[%c0, %c0_0] : memref<150x128xf32, #tpu.memory_space<vmem>>, vector<150x128xf32>
    %c0_1 = arith.constant 0 : index
    %c0_2 = arith.constant 0 : index
    %c0_3 = arith.constant 0 : index
    %1 = vector.load %arg0[%c0_1, %c0_2, %c0_3] : memref<4x50x150xf32, #tpu.memory_space<vmem>>, vector<1x50x150xf32>
    %2 = vector.shape_cast %1 : vector<1x50x150xf32> to vector<50x150xf32>
    %cst = arith.constant dense<0.000000e+00> : vector<50x128xf32>
    %3 = tpu.matmul %2, %0, %cst {dimension_numbers = #tpu.dot_dimension_numbers<[1], [0], [0], [1], [0, 0, 1, 1], [], []>} : vector<50x150xf32>, vector<150x128xf32>, vector<50x128xf32> -> vector<50x128xf32>
    %c1 = arith.constant 1 : index
    %c0_4 = arith.constant 0 : index
    %c0_5 = arith.constant 0 : index
    %4 = vector.load %arg0[%c1, %c0_4, %c0_5] : memref<4x50x150xf32, #tpu.memory_space<vmem>>, vector<1x50x150xf32>
    %5 = vector.shape_cast %4 : vector<1x50x150xf32> to vector<50x150xf32>
    %cst_6 = arith.constant dense<0.000000e+00> : vector<50x128xf32>
    %6 = tpu.matmul %5, %0, %cst_6 {dimension_numbers = #tpu.dot_dimension_numbers<[1], [0], [0], [1], [0, 0, 1, 1], [], []>} : vector<50x150xf32>, vector<150x128xf32>, vector<50x128xf32> -> vector<50x128xf32>
    %c2 = arith.constant 2 : index
    %c0_7 = arith.constant 0 : index
    %c0_8 = arith.constant 0 : index
    %7 = vector.load %arg0[%c2, %c0_7, %c0_8] : memref<4x50x150xf32, #tpu.memory_space<vmem>>, vector<1x50x150xf32>
    %8 = vector.shape_cast %7 : vector<1x50x150xf32> to vector<50x150xf32>
    %cst_9 = arith.constant dense<0.000000e+00> : vector<50x128xf32>
    %9 = tpu.matmul %8, %0, %cst_9 {dimension_numbers = #tpu.dot_dimension_numbers<[1], [0], [0], [1], [0, 0, 1, 1], [], []>} : vector<50x150xf32>, vector<150x128xf32>, vector<50x128xf32> -> vector<50x128xf32>
    %c3 = arith.constant 3 : index
    %c0_10 = arith.constant 0 : index
    %c0_11 = arith.constant 0 : index
    %10 = vector.load %arg0[%c3, %c0_10, %c0_11] : memref<4x50x150xf32, #tpu.memory_space<vmem>>, vector<1x50x150xf32>
    %11 = vector.shape_cast %10 : vector<1x50x150xf32> to vector<50x150xf32>
    %cst_12 = arith.constant dense<0.000000e+00> : vector<50x128xf32>
    %12 = tpu.matmul %11, %0, %cst_12 {dimension_numbers = #tpu.dot_dimension_numbers<[1], [0], [0], [1], [0, 0, 1, 1], [], []>} : vector<50x150xf32>, vector<150x128xf32>, vector<50x128xf32> -> vector<50x128xf32>
    %13 = arith.maximumf %3, %6 : vector<50x128xf32>
    %14 = arith.maximumf %9, %12 : vector<50x128xf32>
    %15 = arith.maximumf %13, %14 : vector<50x128xf32>
    %c0_13 = arith.constant 0 : index
    %c0_14 = arith.constant 0 : index
    %16 = vector.load %arg2[%c0_13, %c0_14] : memref<1x128xf32, #tpu.memory_space<vmem>>, vector<1x128xf32>
    %17 = vector.broadcast %16 : vector<1x128xf32> to vector<50x128xf32>
    %18 = arith.addf %15, %17 : vector<50x128xf32>
    %cst_15 = arith.constant 5.000000e-01 : f32
    %19 = vector.broadcast %cst_15 : f32 to vector<50x128xf32>
    %20 = arith.mulf %19, %18 : vector<50x128xf32>
    %21 = math.tanh %20 : vector<50x128xf32>
    %cst_16 = arith.constant 1.000000e+00 : f32
    %22 = vector.broadcast %cst_16 : f32 to vector<50x128xf32>
    %23 = arith.addf %21, %22 : vector<50x128xf32>
    %cst_17 = arith.constant 5.000000e-01 : f32
    %24 = vector.broadcast %cst_17 : f32 to vector<50x128xf32>
    %25 = arith.mulf %24, %23 : vector<50x128xf32>
    %c0_18 = arith.constant 0 : index
    %c0_19 = arith.constant 0 : index
    %26 = vector.load %arg3[%c0_18, %c0_19] : memref<50x128xf32, #tpu.memory_space<vmem>>, vector<50x128xf32>
    tpu.vector_store %arg3[%c0_18, %c0_19], %25 {strides = array<i32>} : memref<50x128xf32, #tpu.memory_space<vmem>>, vector<50x128xf32>,
    return
  }
}

module attributes {stable_mosaic.version = 11 : i64} {
  func.func @_mlp_head_kernel(%arg0: memref<2x400xf32, #tpu.memory_space<vmem>>, %arg1: memref<400x128xf32, #tpu.memory_space<vmem>>, %arg2: memref<1x128xf32, #tpu.memory_space<vmem>>, %arg3: memref<128x128xf32, #tpu.memory_space<vmem>>, %arg4: memref<1x128xf32, #tpu.memory_space<vmem>>, %arg5: memref<128x128xf32, #tpu.memory_space<vmem>>, %arg6: memref<1x128xf32, #tpu.memory_space<vmem>>, %arg7: memref<2x128xf32, #tpu.memory_space<vmem>>) attributes {dimension_semantics = [], scalar_prefetch = 0 : i64, scratch_operands = 0 : i64, tpu.core_type = #tpu.core_type<tc>} {
    %c0 = arith.constant 0 : index
    %c0_0 = arith.constant 0 : index
    %0 = vector.load %arg0[%c0, %c0_0] : memref<2x400xf32, #tpu.memory_space<vmem>>, vector<2x400xf32>
    %c0_1 = arith.constant 0 : index
    %c0_2 = arith.constant 0 : index
    %1 = vector.load %arg1[%c0_1, %c0_2] : memref<400x128xf32, #tpu.memory_space<vmem>>, vector<400x128xf32>
    %cst = arith.constant dense<0.000000e+00> : vector<2x128xf32>
    %2 = tpu.matmul %0, %1, %cst {dimension_numbers = #tpu.dot_dimension_numbers<[1], [0], [0], [1], [0, 0, 1, 1], [], []>} : vector<2x400xf32>, vector<400x128xf32>, vector<2x128xf32> -> vector<2x128xf32>
    %c0_3 = arith.constant 0 : index
    %c0_4 = arith.constant 0 : index
    %3 = vector.load %arg2[%c0_3, %c0_4] : memref<1x128xf32, #tpu.memory_space<vmem>>, vector<1x128xf32>
    %4 = vector.broadcast %3 : vector<1x128xf32> to vector<2x128xf32>
    %5 = arith.addf %2, %4 : vector<2x128xf32>
    %cst_5 = arith.constant 5.000000e-01 : f32
    %6 = vector.broadcast %cst_5 : f32 to vector<2x128xf32>
    %7 = arith.mulf %6, %5 : vector<2x128xf32>
    %8 = math.tanh %7 : vector<2x128xf32>
    %cst_6 = arith.constant 1.000000e+00 : f32
    %9 = vector.broadcast %cst_6 : f32 to vector<2x128xf32>
    %10 = arith.addf %8, %9 : vector<2x128xf32>
    %cst_7 = arith.constant 5.000000e-01 : f32
    %11 = vector.broadcast %cst_7 : f32 to vector<2x128xf32>
    %12 = arith.mulf %11, %10 : vector<2x128xf32>
    %c0_8 = arith.constant 0 : index
    %c0_9 = arith.constant 0 : index
    %13 = vector.load %arg3[%c0_8, %c0_9] : memref<128x128xf32, #tpu.memory_space<vmem>>, vector<128x128xf32>
    %cst_10 = arith.constant dense<0.000000e+00> : vector<2x128xf32>
    %14 = tpu.matmul %12, %13, %cst_10 {dimension_numbers = #tpu.dot_dimension_numbers<[1], [0], [0], [1], [0, 0, 1, 1], [], []>} : vector<2x128xf32>, vector<128x128xf32>, vector<2x128xf32> -> vector<2x128xf32>
    %c0_11 = arith.constant 0 : index
    %c0_12 = arith.constant 0 : index
    %15 = vector.load %arg4[%c0_11, %c0_12] : memref<1x128xf32, #tpu.memory_space<vmem>>, vector<1x128xf32>
    %16 = vector.broadcast %15 : vector<1x128xf32> to vector<2x128xf32>
    %17 = arith.addf %14, %16 : vector<2x128xf32>
    %cst_13 = arith.constant 5.000000e-01 : f32
    %18 = vector.broadcast %cst_13 : f32 to vector<2x128xf32>
    %19 = arith.mulf %18, %17 : vector<2x128xf32>
    %20 = math.tanh %19 : vector<2x128xf32>
    %cst_14 = arith.constant 1.000000e+00 : f32
    %21 = vector.broadcast %cst_14 : f32 to vector<2x128xf32>
    %22 = arith.addf %20, %21 : vector<2x128xf32>
    %cst_15 = arith.constant 5.000000e-01 : f32
    %23 = vector.broadcast %cst_15 : f32 to vector<2x128xf32>
    %24 = arith.mulf %23, %22 : vector<2x128xf32>
    %c0_16 = arith.constant 0 : index
    %c0_17 = arith.constant 0 : index
    %25 = vector.load %arg5[%c0_16, %c0_17] : memref<128x128xf32, #tpu.memory_space<vmem>>, vector<128x128xf32>
    %cst_18 = arith.constant dense<0.000000e+00> : vector<2x128xf32>
    %26 = tpu.matmul %24, %25, %cst_18 {dimension_numbers = #tpu.dot_dimension_numbers<[1], [0], [0], [1], [0, 0, 1, 1], [], []>} : vector<2x128xf32>, vector<128x128xf32>, vector<2x128xf32> -> vector<2x128xf32>
    %c0_19 = arith.constant 0 : index
    %c0_20 = arith.constant 0 : index
    %27 = vector.load %arg6[%c0_19, %c0_20] : memref<1x128xf32, #tpu.memory_space<vmem>>, vector<1x128xf32>
    %28 = vector.broadcast %27 : vector<1x128xf32> to vector<2x128xf32>
    %29 = arith.addf %26, %28 : vector<2x128xf32>
    %30 = tpu.iota {dimensions = array<i32: 1>} : vector<2x128xi32>
    %c10_i32 = arith.constant 10 : i32
    %31 = vector.broadcast %c10_i32 : i32 to vector<2x128xi32>
    %32 = arith.cmpi slt, %30, %31 : vector<2x128xi32>
    %cst_21 = arith.constant -1.000000e+30 : f32
    %33 = vector.broadcast %cst_21 : f32 to vector<2x128xf32>
    %34 = arith.select %32, %29, %33 : vector<2x128xi1>, vector<2x128xf32>
    %cst_22 = arith.constant dense<0xFF800000> : vector<2xf32>
    %35 = vector.multi_reduction <maximumf>, %34, %cst_22 [1] : vector<2x128xf32> to vector<2xf32>
    %36 = vector.shape_cast %35 : vector<2xf32> to vector<2x1xf32>
    %37 = vector.broadcast %36 : vector<2x1xf32> to vector<2x128xf32>
    %38 = arith.subf %34, %37 : vector<2x128xf32>
    %39 = math.exp %38 : vector<2x128xf32>
    %cst_23 = arith.constant dense<0.000000e+00> : vector<2xf32>
    %40 = vector.multi_reduction <add>, %39, %cst_23 [1] : vector<2x128xf32> to vector<2xf32>
    %41 = vector.shape_cast %40 : vector<2xf32> to vector<2x1xf32>
    %42 = math.log %41 : vector<2x1xf32>
    %43 = vector.broadcast %42 : vector<2x1xf32> to vector<2x128xf32>
    %44 = arith.subf %38, %43 : vector<2x128xf32>
    %c0_24 = arith.constant 0 : index
    %c0_25 = arith.constant 0 : index
    %45 = vector.load %arg7[%c0_24, %c0_25] : memref<2x128xf32, #tpu.memory_space<vmem>>, vector<2x128xf32>
    tpu.vector_store %arg7[%c0_24, %c0_25], %44 {strides = array<i32>} : memref<2x128xf32, #tpu.memory_space<vmem>>, vector<2x128xf32>,
    return
  }
}

</mosaic_0001>

<llo_original>
// kernel: lenet5_forward.3
$region0: #{lenet5_forward.3}
  #allocation0 [shape = 'u32[]', space=smem, size = 0x4, offset = 0x4, fixed_abs, tag = 'smem constant byte address 0x4 - core index']
  #allocation1 [shape = 'u32[144,128]{1,0:T(1,128)}', space=vmem, size = 0x12000, scoped, tag = 'internal scratch']
  %s0 = inlined_call_operand.vmem [shape: f32[4,512,25], index: 0, kind: input, shape index: {}]
  %s1 = inlined_call_operand.vmem [shape: f32[25,128], index: 1, kind: input, shape index: {}]
  %s2 = inlined_call_operand.vmem [shape: f32[1,128], index: 2, kind: input, shape index: {}]
  %s3 = inlined_call_operand.vmem [shape: f32[512,128], index: 3, kind: output, shape index: {}]
  %s4 = sld [smem:[#allocation0]]
  $region83: #{lenet5_forward.3} parent=0
    _
  %s6 = ssub.s32 1, %s4
  %s7 = scalar_select 0, %s6, %s4
  $region1: #{lenet5_forward.3} parent=0
    #allocation2 [shape = 'u8[1048576]{0}', space=vmem, size = 0x100000, scoped, tag = 'input window, operand 0']
    loop: start=0, step=1, limit=4
    $region2: #{lenet5_forward.3} parent=1 // loop_pre_header
      _
    $region3: #{lenet5_forward.3} parent=1 // loop_header
      %s9 = sphi 0, %s13
      %p10 = scmp.ge.s32.totalorder %s9, 4
      %s19 = sphi 0, %s21
      %s22 = sphi 0, %s19
      %s23 = sphi 0, %s22
      %s39 = sphi 0, %s23
      %s43 = sphi 0, %s43
      %s45 = sphi 0, %s43
      %s46 = sphi 0, %s45
      %s60 = sphi 0, %s46
      %s64 = sphi 0, %s64
      %s66 = sphi 0, %s64
      %s67 = sphi 0, %s66
      %s81 = sphi 0, %s67
      %s87 = sphi 0, %s89
      %s90 = sphi 0, %s87
      %s91 = sphi 0, %s90
      %s107 = sphi 0, %s91
    $region4: #{lenet5_forward.3} parent=1 // loop_header_branch
      %12 = sbr.rel (%p10) target = $region8
    $region5: #{lenet5_forward.3} parent=1 // loop_body
      %s14 = ssub.s32 %s9, 1
      %s15 = ssub.s32 %s9, 2
      %s16 = sadd.s32 %s9, 1
      %s17 = ssub.s32 %s9, %s16
      %p18 = scmp.eq.s32.totalorder %s17, 0
      %s20 = sadd.s32 %s19, 1
      %s21 = scalar_select %p18, %s19, %s20
      %p24 = pneg %p18
      %p25 = scmp.eq.s32.totalorder %s9, 1
      %p26 = por %p24, %p25
      %p27 = scmp.ne.s32.totalorder %s19, %s22
      %p28 = scmp.eq.s32.totalorder %s9, 0
      %p29 = por %p27, %p28
      %p30 = scmp.ne.s32.totalorder %s19, %s22
      %p31 = scmp.eq.s32.totalorder %s14, 1
      %p32 = por %p30, %p31
      %p33 = scmp.ne.s32.totalorder %s22, %s23
      %p34 = scmp.eq.s32.totalorder %s14, 0
      %p35 = por %p33, %p34
      %p36 = scmp.ne.s32.totalorder %s22, %s23
      %p37 = scmp.eq.s32.totalorder %s15, 1
      %p38 = por %p36, %p37
      %p40 = scmp.ne.s32.totalorder %s23, %s39
      %p41 = scmp.eq.s32.totalorder %s15, 0
      %p42 = por %p40, %p41
      %s44 = sadd.s32 %s43, 1
      %p47 = scmp.eq.s32.totalorder %s9, 1
      %p48 = scmp.ne.s32.totalorder %s43, %s45
      %p49 = scmp.eq.s32.totalorder %s9, 0
      %p50 = por %p48, %p49
      %p51 = scmp.ne.s32.totalorder %s43, %s45
      %p52 = scmp.eq.s32.totalorder %s14, 1
      %p53 = por %p51, %p52
      %p54 = scmp.ne.s32.totalorder %s45, %s46
      %p55 = scmp.eq.s32.totalorder %s14, 0
      %p56 = por %p54, %p55
      %p57 = scmp.ne.s32.totalorder %s45, %s46
      %p58 = scmp.eq.s32.totalorder %s15, 1
      %p59 = por %p57, %p58
      %p61 = scmp.ne.s32.totalorder %s46, %s60
      %p62 = scmp.eq.s32.totalorder %s15, 0
      %p63 = por %p61, %p62
      %s65 = sadd.s32 %s64, 1
      %p68 = scmp.eq.s32.totalorder %s9, 1
      %p69 = scmp.ne.s32.totalorder %s64, %s66
      %p70 = scmp.eq.s32.totalorder %s9, 0
      %p71 = por %p69, %p70
      %p72 = scmp.ne.s32.totalorder %s64, %s66
      %p73 = scmp.eq.s32.totalorder %s14, 1
      %p74 = por %p72, %p73
      %p75 = scmp.ne.s32.totalorder %s66, %s67
      %p76 = scmp.eq.s32.totalorder %s14, 0
      %p77 = por %p75, %p76
      %p78 = scmp.ne.s32.totalorder %s66, %s67
      %p79 = scmp.eq.s32.totalorder %s15, 1
      %p80 = por %p78, %p79
      %p82 = scmp.ne.s32.totalorder %s67, %s81
      %p83 = scmp.eq.s32.totalorder %s15, 0
      %p84 = por %p82, %p83
      %s85 = ssub.s32 %s9, %s16
      %p86 = scmp.eq.s32.totalorder %s85, 0
      %s88 = sadd.s32 %s87, 1
      %s89 = scalar_select %p86, %s87, %s88
      %p92 = pneg %p86
      %p93 = scmp.eq.s32.totalorder %s9, 1
      %p94 = por %p92, %p93
      %p95 = scmp.ne.s32.totalorder %s87, %s90
      %p96 = scmp.eq.s32.totalorder %s9, 0
      %p97 = por %p95, %p96
      %p98 = scmp.ne.s32.totalorder %s87, %s90
      %p99 = scmp.eq.s32.totalorder %s14, 1
      %p100 = por %p98, %p99
      %p101 = scmp.ne.s32.totalorder %s90, %s91
      %p102 = scmp.eq.s32.totalorder %s14, 0
      %p103 = por %p101, %p102
      %p104 = scmp.ne.s32.totalorder %s90, %s91
      %p105 = scmp.eq.s32.totalorder %s15, 1
      %p106 = por %p104, %p105
      %p108 = scmp.ne.s32.totalorder %s91, %s107
      %p109 = scmp.eq.s32.totalorder %s15, 0
      %p110 = por %p108, %p109
      %p111 = scmp.le.s32.totalorder 1, %s9
      %p112 = scmp.lt.s32.totalorder %s9, 3
      %p113 = pnand %p111, %p112
      %p114 = pneg %p113
      // Predicated region
      $region9: #{lenet5_forward.3} parent=5 // pred_check
        _
      $region10: #{lenet5_forward.3} parent=5 // pred_check_branch
        %116 = sbr.rel (%p113) target = $region12
      $region11: #{lenet5_forward.3} parent=5 // pred_region
        %s117 = ssub.s32 %s9, 1
        // Predicated region
        $region13: #{lenet5_forward.3} parent=11 // pred_check
          %p118 = pneg %p56
        $region14: #{lenet5_forward.3} parent=11 // pred_check_branch
          %120 = sbr.rel (%p118) target = $region16
        $region15: #{lenet5_forward.3} parent=11 // pred_region
          _
        $region16: #{lenet5_forward.3} parent=11 // pred_fallthru
          _
        // Predicated region
        $region17: #{lenet5_forward.3} parent=11 // pred_check
          %p121 = pneg %p77
        $region18: #{lenet5_forward.3} parent=11 // pred_check_branch
          %123 = sbr.rel (%p121) target = $region20
        $region19: #{lenet5_forward.3} parent=11 // pred_region
          _
        $region20: #{lenet5_forward.3} parent=11 // pred_fallthru
          _
      $region12: #{lenet5_forward.3} parent=5 // pred_fallthru
        _
      %p124 = scmp.lt.s32.totalorder %s9, 2
      // Predicated region
      $region21: #{lenet5_forward.3} parent=5 // pred_check
        %p125 = pneg %p124
      $region22: #{lenet5_forward.3} parent=5 // pred_check_branch
        %127 = sbr.rel (%p125) target = $region24
      $region23: #{lenet5_forward.3} parent=5 // pred_region
        // Predicated region
        $region25: #{lenet5_forward.3} parent=23 // pred_check
          %p128 = pneg %p29
        $region26: #{lenet5_forward.3} parent=23 // pred_check_branch
          %130 = sbr.rel (%p128) target = $region28
        $region27: #{lenet5_forward.3} parent=23 // pred_region
          %s131 = sand.u32 %s19, 1
          %s132 = sand.u32 %s19, 1
          %s133 = smul.addr %s132, 1024
          %s134 = scalar_lea.vmem [#allocation2], %s133
          %s135 = smul.u32 32, %s9
          %s136 = smul.addr %s135, 8
          %s137 = scalar_lea.vmem %s0, %s136
          // Predicated region
          $region29: #{lenet5_forward.3} parent=27 // pred_check
            _
          $region30: #{lenet5_forward.3} parent=27 // pred_check_branch
            %139 = sbr.rel (0) target = $region32
          $region31: #{lenet5_forward.3} parent=27 // pred_region
            // Predicated region
            $region33: #{lenet5_forward.3} parent=31 // pred_check
              _
            $region34: #{lenet5_forward.3} parent=31 // pred_check_branch
              %141 = sbr.rel (0) target = $region36
            $region35: #{lenet5_forward.3} parent=31 // pred_region
              // Predicated region
              $region48: #{lenet5_forward.3} parent=35 // pred_check
                _
              $region49: #{lenet5_forward.3} parent=35 // pred_check_branch
                %410 = sbr.rel (0) target = $region51
              $region50: #{lenet5_forward.3} parent=35 // pred_region
                loop: start=0, step=1, limit=1
                $region52: #{lenet5_forward.3} parent=50 // loop_pre_header
                  _
                $region53: #{lenet5_forward.3} parent=50 // loop_header
                  %s412 = sphi 0, %s416
                  %p413 = scmp.ge.s32.totalorder %s412, 1
                  %s417 = sphi %s137, %s137
                  %s418 = sphi %s134, %s134
                $region54: #{lenet5_forward.3} parent=50 // loop_header_branch
                  %415 = sbr.rel (%p413) target = $region58
                $region55: #{lenet5_forward.3} parent=50 // loop_body
                  %v419 = vld [vmem:[%s417] sm:$0xff]
                  %420 = vst [vmem:[%s418] sm:$0xff] %v419
                  %v421 = vld [vmem:[%s417 + $0x8] sm:$0xff]
                  %422 = vst [vmem:[%s418 + $0x8] sm:$0xff] %v421
                  %v423 = vld [vmem:[%s417 + $0x10] sm:$0xff]
                  %424 = vst [vmem:[%s418 + $0x10] sm:$0xff] %v423
                  %v425 = vld [vmem:[%s417 + $0x18] sm:$0xff]
                  %426 = vst [vmem:[%s418 + $0x18] sm:$0xff] %v425
                  %v427 = vld [vmem:[%s417 + $0x20] sm:$0xff]
                  %428 = vst [vmem:[%s418 + $0x20] sm:$0xff] %v427
                  %v429 = vld [vmem:[%s417 + $0x28] sm:$0xff]
                  %430 = vst [vmem:[%s418 + $0x28] sm:$0xff] %v429
                  %v431 = vld [vmem:[%s417 + $0x30] sm:$0xff]
                  %432 = vst [vmem:[%s418 + $0x30] sm:$0xff] %v431
                  %v433 = vld [vmem:[%s417 + $0x38] sm:$0xff]
                  %434 = vst [vmem:[%s418 + $0x38] sm:$0xff] %v433
                  %v435 = vld [vmem:[%s417 + $0x40] sm:$0xff]
                  %436 = vst [vmem:[%s418 + $0x40] sm:$0xff] %v435
                  %v437 = vld [vmem:[%s417 + $0x48] sm:$0xff]
                  %438 = vst [vmem:[%s418 + $0x48] sm:$0xff] %v437
                  %v439 = vld [vmem:[%s417 + $0x50] sm:$0xff]
                  %440 = vst [vmem:[%s418 + $0x50] sm:$0xff] %v439
                  %v441 = vld [vmem:[%s417 + $0x58] sm:$0xff]
                  %442 = vst [vmem:[%s418 + $0x58] sm:$0xff] %v441
                  %v443 = vld [vmem:[%s417 + $0x60] sm:$0xff]
                  %444 = vst [vmem:[%s418 + $0x60] sm:$0xff] %v443
                  %v445 = vld [vmem:[%s417 + $0x68] sm:$0xff]
                  %446 = vst [vmem:[%s418 + $0x68] sm:$0xff] %v445
                  %v447 = vld [vmem:[%s417 + $0x70] sm:$0xff]
                  %448 = vst [vmem:[%s418 + $0x70] sm:$0xff] %v447
                  %v449 = vld [vmem:[%s417 + $0x78] sm:$0xff]
                  %450 = vst [vmem:[%s418 + $0x78] sm:$0xff] %v449
                  %v451 = vld [vmem:[%s417 + $0x80] sm:$0xff]
                  %452 = vst [vmem:[%s418 + $0x80] sm:$0xff] %v451
                  %v453 = vld [vmem:[%s417 + $0x88] sm:$0xff]
                  %454 = vst [vmem:[%s418 + $0x88] sm:$0xff] %v453
                  %v455 = vld [vmem:[%s417 + $0x90] sm:$0xff]
                  %456 = vst [vmem:[%s418 + $0x90] sm:$0xff] %v455
                  %v457 = vld [vmem:[%s417 + $0x98] sm:$0xff]
                  %458 = vst [vmem:[%s418 + $0x98] sm:$0xff] %v457
                  %v459 = vld [vmem:[%s417 + $0xa0] sm:$0xff]
                  %460 = vst [vmem:[%s418 + $0xa0] sm:$0xff] %v459
                  %v461 = vld [vmem:[%s417 + $0xa8] sm:$0xff]
                  %462 = vst [vmem:[%s418 + $0xa8] sm:$0xff] %v461
                  %v463 = vld [vmem:[%s417 + $0xb0] sm:$0xff]
                  %464 = vst [vmem:[%s418 + $0xb0] sm:$0xff] %v463
                  %v465 = vld [vmem:[%s417 + $0xb8] sm:$0xff]
                  %466 = vst [vmem:[%s418 + $0xb8] sm:$0xff] %v465
                  %v467 = vld [vmem:[%s417 + $0xc0] sm:$0xff]
                  %468 = vst [vmem:[%s418 + $0xc0] sm:$0xff] %v467
                  %v469 = vld [vmem:[%s417 + $0xc8] sm:$0xff]
                  %470 = vst [vmem:[%s418 + $0xc8] sm:$0xff] %v469
                  %v471 = vld [vmem:[%s417 + $0xd0] sm:$0xff]
                  %472 = vst [vmem:[%s418 + $0xd0] sm:$0xff] %v471
                  %v473 = vld [vmem:[%s417 + $0xd8] sm:$0xff]
                  %474 = vst [vmem:[%s418 + $0xd8] sm:$0xff] %v473
                  %v475 = vld [vmem:[%s417 + $0xe0] sm:$0xff]
                  %476 = vst [vmem:[%s418 + $0xe0] sm:$0xff] %v475
                  %v477 = vld [vmem:[%s417 + $0xe8] sm:$0xff]
                  %478 = vst [vmem:[%s418 + $0xe8] sm:$0xff] %v477
                  %v479 = vld [vmem:[%s417 + $0xf0] sm:$0xff]
                  %480 = vst [vmem:[%s418 + $0xf0] sm:$0xff] %v479
                  %v481 = vld [vmem:[%s417 + $0xf8] sm:$0xff]
                  %482 = vst [vmem:[%s418 + $0xf8] sm:$0xff] %v481
                  %v483 = vld [vmem:[%s417 + $0x200] sm:$0xff]
                  %484 = vst [vmem:[%s418 + $0x100] sm:$0xff] %v483
                  %v485 = vld [vmem:[%s417 + $0x208] sm:$0xff]
                  %486 = vst [vmem:[%s418 + $0x108] sm:$0xff] %v485
                  %v487 = vld [vmem:[%s417 + $0x210] sm:$0xff]
                  %488 = vst [vmem:[%s418 + $0x110] sm:$0xff] %v487
                  %v489 = vld [vmem:[%s417 + $0x218] sm:$0xff]
                  %490 = vst [vmem:[%s418 + $0x118] sm:$0xff] %v489
                  %v491 = vld [vmem:[%s417 + $0x220] sm:$0xff]
                  %492 = vst [vmem:[%s418 + $0x120] sm:$0xff] %v491
                  %v493 = vld [vmem:[%s417 + $0x228] sm:$0xff]
                  %494 = vst [vmem:[%s418 + $0x128] sm:$0xff] %v493
                  %v495 = vld [vmem:[%s417 + $0x230] sm:$0xff]
                  %496 = vst [vmem:[%s418 + $0x130] sm:$0xff] %v495
                  %v497 = vld [vmem:[%s417 + $0x238] sm:$0xff]
                  %498 = vst [vmem:[%s418 + $0x138] sm:$0xff] %v497
                  %v499 = vld [vmem:[%s417 + $0x240] sm:$0xff]
                  %500 = vst [vmem:[%s418 + $0x140] sm:$0xff] %v499
                  %v501 = vld [vmem:[%s417 + $0x248] sm:$0xff]
                  %502 = vst [vmem:[%s418 + $0x148] sm:$0xff] %v501
                  %v503 = vld [vmem:[%s417 + $0x250] sm:$0xff]
                  %504 = vst [vmem:[%s418 + $0x150] sm:$0xff] %v503
                  %v505 = vld [vmem:[%s417 + $0x258] sm:$0xff]
                  %506 = vst [vmem:[%s418 + $0x158] sm:$0xff] %v505
                  %v507 = vld [vmem:[%s417 + $0x260] sm:$0xff]
                  %508 = vst [vmem:[%s418 + $0x160] sm:$0xff] %v507
                  %v509 = vld [vmem:[%s417 + $0x268] sm:$0xff]
                  %510 = vst [vmem:[%s418 + $0x168] sm:$0xff] %v509
                  %v511 = vld [vmem:[%s417 + $0x270] sm:$0xff]
                  %512 = vst [vmem:[%s418 + $0x170] sm:$0xff] %v511
                  %v513 = vld [vmem:[%s417 + $0x278] sm:$0xff]
                  %514 = vst [vmem:[%s418 + $0x178] sm:$0xff] %v513
                  %v515 = vld [vmem:[%s417 + $0x280] sm:$0xff]
                  %516 = vst [vmem:[%s418 + $0x180] sm:$0xff] %v515
                  %v517 = vld [vmem:[%s417 + $0x288] sm:$0xff]
                  %518 = vst [vmem:[%s418 + $0x188] sm:$0xff] %v517
                  %v519 = vld [vmem:[%s417 + $0x290] sm:$0xff]
                  %520 = vst [vmem:[%s418 + $0x190] sm:$0xff] %v519
                  %v521 = vld [vmem:[%s417 + $0x298] sm:$0xff]
                  %522 = vst [vmem:[%s418 + $0x198] sm:$0xff] %v521
                  %v523 = vld [vmem:[%s417 + $0x2a0] sm:$0xff]
                  %524 = vst [vmem:[%s418 + $0x1a0] sm:$0xff] %v523
                  %v525 = vld [vmem:[%s417 + $0x2a8] sm:$0xff]
                  %526 = vst [vmem:[%s418 + $0x1a8] sm:$0xff] %v525
                  %v527 = vld [vmem:[%s417 + $0x2b0] sm:$0xff]
                  %528 = vst [vmem:[%s418 + $0x1b0] sm:$0xff] %v527
                  %v529 = vld [vmem:[%s417 + $0x2b8] sm:$0xff]
                  %530 = vst [vmem:[%s418 + $0x1b8] sm:$0xff] %v529
                  %v531 = vld [vmem:[%s417 + $0x2c0] sm:$0xff]
                  %532 = vst [vmem:[%s418 + $0x1c0] sm:$0xff] %v531
                  %v533 = vld [vmem:[%s417 + $0x2c8] sm:$0xff]
                  %534 = vst [vmem:[%s418 + $0x1c8] sm:$0xff] %v533
                  %v535 = vld [vmem:[%s417 + $0x2d0] sm:$0xff]
                  %536 = vst [vmem:[%s418 + $0x1d0] sm:$0xff] %v535
                  %v537 = vld [vmem:[%s417 + $0x2d8] sm:$0xff]
                  %538 = vst [vmem:[%s418 + $0x1d8] sm:$0xff] %v537
                  %v539 = vld [vmem:[%s417 + $0x2e0] sm:$0xff]
                  %540 = vst [vmem:[%s418 + $0x1e0] sm:$0xff] %v539
                  %v541 = vld [vmem:[%s417 + $0x2e8] sm:$0xff]
                  %542 = vst [vmem:[%s418 + $0x1e8] sm:$0xff] %v541
                  %v543 = vld [vmem:[%s417 + $0x2f0] sm:$0xff]
                  %544 = vst [vmem:[%s418 + $0x1f0] sm:$0xff] %v543
                  %v545 = vld [vmem:[%s417 + $0x2f8] sm:$0xff]
                  %546 = vst [vmem:[%s418 + $0x1f8] sm:$0xff] %v545
                  %v547 = vld [vmem:[%s417 + $0x400] sm:$0xff]
                  %548 = vst [vmem:[%s418 + $0x200] sm:$0xff] %v547
                  %v549 = vld [vmem:[%s417 + $0x408] sm:$0xff]
                  %550 = vst [vmem:[%s418 + $0x208] sm:$0xff] %v549
                  %v551 = vld [vmem:[%s417 + $0x410] sm:$0xff]
                  %552 = vst [vmem:[%s418 + $0x210] sm:$0xff] %v551
                  %v553 = vld [vmem:[%s417 + $0x418] sm:$0xff]
                  %554 = vst [vmem:[%s418 + $0x218] sm:$0xff] %v553
                  %v555 = vld [vmem:[%s417 + $0x420] sm:$0xff]
                  %556 = vst [vmem:[%s418 + $0x220] sm:$0xff] %v555
                  %v557 = vld [vmem:[%s417 + $0x428] sm:$0xff]
                  %558 = vst [vmem:[%s418 + $0x228] sm:$0xff] %v557
                  %v559 = vld [vmem:[%s417 + $0x430] sm:$0xff]
                  %560 = vst [vmem:[%s418 + $0x230] sm:$0xff] %v559
                  %v561 = vld [vmem:[%s417 + $0x438] sm:$0xff]
                  %562 = vst [vmem:[%s418 + $0x238] sm:$0xff] %v561
                  %v563 = vld [vmem:[%s417 + $0x440] sm:$0xff]
                  %564 = vst [vmem:[%s418 + $0x240] sm:$0xff] %v563
                  %v565 = vld [vmem:[%s417 + $0x448] sm:$0xff]
                  %566 = vst [vmem:[%s418 + $0x248] sm:$0xff] %v565
                  %v567 = vld [vmem:[%s417 + $0x450] sm:$0xff]
                  %568 = vst [vmem:[%s418 + $0x250] sm:$0xff] %v567
                  %v569 = vld [vmem:[%s417 + $0x458] sm:$0xff]
                  %570 = vst [vmem:[%s418 + $0x258] sm:$0xff] %v569
                  %v571 = vld [vmem:[%s417 + $0x460] sm:$0xff]
                  %572 = vst [vmem:[%s418 + $0x260] sm:$0xff] %v571
                  %v573 = vld [vmem:[%s417 + $0x468] sm:$0xff]
                  %574 = vst [vmem:[%s418 + $0x268] sm:$0xff] %v573
                  %v575 = vld [vmem:[%s417 + $0x470] sm:$0xff]
                  %576 = vst [vmem:[%s418 + $0x270] sm:$0xff] %v575
                  %v577 = vld [vmem:[%s417 + $0x478] sm:$0xff]
                  %578 = vst [vmem:[%s418 + $0x278] sm:$0xff] %v577
                  %v579 = vld [vmem:[%s417 + $0x480] sm:$0xff]
                  %580 = vst [vmem:[%s418 + $0x280] sm:$0xff] %v579
                  %v581 = vld [vmem:[%s417 + $0x488] sm:$0xff]
                  %582 = vst [vmem:[%s418 + $0x288] sm:$0xff] %v581
                  %v583 = vld [vmem:[%s417 + $0x490] sm:$0xff]
                  %584 = vst [vmem:[%s418 + $0x290] sm:$0xff] %v583
                  %v585 = vld [vmem:[%s417 + $0x498] sm:$0xff]
                  %586 = vst [vmem:[%s418 + $0x298] sm:$0xff] %v585
                  %v587 = vld [vmem:[%s417 + $0x4a0] sm:$0xff]
                  %588 = vst [vmem:[%s418 + $0x2a0] sm:$0xff] %v587
                  %v589 = vld [vmem:[%s417 + $0x4a8] sm:$0xff]
                  %590 = vst [vmem:[%s418 + $0x2a8] sm:$0xff] %v589
                  %v591 = vld [vmem:[%s417 + $0x4b0] sm:$0xff]
                  %592 = vst [vmem:[%s418 + $0x2b0] sm:$0xff] %v591
                  %v593 = vld [vmem:[%s417 + $0x4b8] sm:$0xff]
                  %594 = vst [vmem:[%s418 + $0x2b8] sm:$0xff] %v593
                  %v595 = vld [vmem:[%s417 + $0x4c0] sm:$0xff]
                  %596 = vst [vmem:[%s418 + $0x2c0] sm:$0xff] %v595
                  %v597 = vld [vmem:[%s417 + $0x4c8] sm:$0xff]
                  %598 = vst [vmem:[%s418 + $0x2c8] sm:$0xff] %v597
                  %v599 = vld [vmem:[%s417 + $0x4d0] sm:$0xff]
                  %600 = vst [vmem:[%s418 + $0x2d0] sm:$0xff] %v599
                  %v601 = vld [vmem:[%s417 + $0x4d8] sm:$0xff]
                  %602 = vst [vmem:[%s418 + $0x2d8] sm:$0xff] %v601
                  %v603 = vld [vmem:[%s417 + $0x4e0] sm:$0xff]
                  %604 = vst [vmem:[%s418 + $0x2e0] sm:$0xff] %v603
                  %v605 = vld [vmem:[%s417 + $0x4e8] sm:$0xff]
                  %606 = vst [vmem:[%s418 + $0x2e8] sm:$0xff] %v605
                  %v607 = vld [vmem:[%s417 + $0x4f0] sm:$0xff]
                  %608 = vst [vmem:[%s418 + $0x2f0] sm:$0xff] %v607
                  %v609 = vld [vmem:[%s417 + $0x4f8] sm:$0xff]
                  %610 = vst [vmem:[%s418 + $0x2f8] sm:$0xff] %v609
                  %v611 = vld [vmem:[%s417 + $0x600] sm:$0xff]
                  %612 = vst [vmem:[%s418 + $0x300] sm:$0xff] %v611
                  %v613 = vld [vmem:[%s417 + $0x608] sm:$0xff]
                  %614 = vst [vmem:[%s418 + $0x308] sm:$0xff] %v613
                  %v615 = vld [vmem:[%s417 + $0x610] sm:$0xff]
                  %616 = vst [vmem:[%s418 + $0x310] sm:$0xff] %v615
                  %v617 = vld [vmem:[%s417 + $0x618] sm:$0xff]
                  %618 = vst [vmem:[%s418 + $0x318] sm:$0xff] %v617
                  %v619 = vld [vmem:[%s417 + $0x620] sm:$0xff]
                  %620 = vst [vmem:[%s418 + $0x320] sm:$0xff] %v619
                  %v621 = vld [vmem:[%s417 + $0x628] sm:$0xff]
                  %622 = vst [vmem:[%s418 + $0x328] sm:$0xff] %v621
                  %v623 = vld [vmem:[%s417 + $0x630] sm:$0xff]
                  %624 = vst [vmem:[%s418 + $0x330] sm:$0xff] %v623
                  %v625 = vld [vmem:[%s417 + $0x638] sm:$0xff]
                  %626 = vst [vmem:[%s418 + $0x338] sm:$0xff] %v625
                  %v627 = vld [vmem:[%s417 + $0x640] sm:$0xff]
                  %628 = vst [vmem:[%s418 + $0x340] sm:$0xff] %v627
                  %v629 = vld [vmem:[%s417 + $0x648] sm:$0xff]
                  %630 = vst [vmem:[%s418 + $0x348] sm:$0xff] %v629
                  %v631 = vld [vmem:[%s417 + $0x650] sm:$0xff]
                  %632 = vst [vmem:[%s418 + $0x350] sm:$0xff] %v631
                  %v633 = vld [vmem:[%s417 + $0x658] sm:$0xff]
                  %634 = vst [vmem:[%s418 + $0x358] sm:$0xff] %v633
                  %v635 = vld [vmem:[%s417 + $0x660] sm:$0xff]
                  %636 = vst [vmem:[%s418 + $0x360] sm:$0xff] %v635
                  %v637 = vld [vmem:[%s417 + $0x668] sm:$0xff]
                  %638 = vst [vmem:[%s418 + $0x368] sm:$0xff] %v637
                  %v639 = vld [vmem:[%s417 + $0x670] sm:$0xff]
                  %640 = vst [vmem:[%s418 + $0x370] sm:$0xff] %v639
                  %v641 = vld [vmem:[%s417 + $0x678] sm:$0xff]
                  %642 = vst [vmem:[%s418 + $0x378] sm:$0xff] %v641
                  %v643 = vld [vmem:[%s417 + $0x680] sm:$0xff]
                  %644 = vst [vmem:[%s418 + $0x380] sm:$0xff] %v643
                  %v645 = vld [vmem:[%s417 + $0x688] sm:$0xff]
                  %646 = vst [vmem:[%s418 + $0x388] sm:$0xff] %v645
                  %v647 = vld [vmem:[%s417 + $0x690] sm:$0xff]
                  %648 = vst [vmem:[%s418 + $0x390] sm:$0xff] %v647
                  %v649 = vld [vmem:[%s417 + $0x698] sm:$0xff]
                  %650 = vst [vmem:[%s418 + $0x398] sm:$0xff] %v649
                  %v651 = vld [vmem:[%s417 + $0x6a0] sm:$0xff]
                  %652 = vst [vmem:[%s418 + $0x3a0] sm:$0xff] %v651
                  %v653 = vld [vmem:[%s417 + $0x6a8] sm:$0xff]
                  %654 = vst [vmem:[%s418 + $0x3a8] sm:$0xff] %v653
                  %v655 = vld [vmem:[%s417 + $0x6b0] sm:$0xff]
                  %656 = vst [vmem:[%s418 + $0x3b0] sm:$0xff] %v655
                  %v657 = vld [vmem:[%s417 + $0x6b8] sm:$0xff]
                  %658 = vst [vmem:[%s418 + $0x3b8] sm:$0xff] %v657
                  %v659 = vld [vmem:[%s417 + $0x6c0] sm:$0xff]
                  %660 = vst [vmem:[%s418 + $0x3c0] sm:$0xff] %v659
                  %v661 = vld [vmem:[%s417 + $0x6c8] sm:$0xff]
                  %662 = vst [vmem:[%s418 + $0x3c8] sm:$0xff] %v661
                  %v663 = vld [vmem:[%s417 + $0x6d0] sm:$0xff]
                  %664 = vst [vmem:[%s418 + $0x3d0] sm:$0xff] %v663
                  %v665 = vld [vmem:[%s417 + $0x6d8] sm:$0xff]
                  %666 = vst [vmem:[%s418 + $0x3d8] sm:$0xff] %v665
                  %v667 = vld [vmem:[%s417 + $0x6e0] sm:$0xff]
                  %668 = vst [vmem:[%s418 + $0x3e0] sm:$0xff] %v667
                  %v669 = vld [vmem:[%s417 + $0x6e8] sm:$0xff]
                  %670 = vst [vmem:[%s418 + $0x3e8] sm:$0xff] %v669
                  %v671 = vld [vmem:[%s417 + $0x6f0] sm:$0xff]
                  %672 = vst [vmem:[%s418 + $0x3f0] sm:$0xff] %v671
                  %v673 = vld [vmem:[%s417 + $0x6f8] sm:$0xff]
                  %674 = vst [vmem:[%s418 + $0x3f8] sm:$0xff] %v673
                $region56: #{lenet5_forward.3} parent=50 // loop_footer
                  %s416 = sadd.s32 1, %s412
                $region57: #{lenet5_forward.3} parent=50 // loop_footer_branch
                  %411 = sbr.rel target = $region53
                $region58: #{lenet5_forward.3} parent=50 // loop_exit
                  _
              $region51: #{lenet5_forward.3} parent=35 // pred_fallthru
                _
              // Predicated region
              $region59: #{lenet5_forward.3} parent=35 // pred_check
                _
              $region60: #{lenet5_forward.3} parent=35 // pred_check_branch
                %676 = sbr.rel target = $region62
              $region61: #{lenet5_forward.3} parent=35 // pred_region
                _
              $region62: #{lenet5_forward.3} parent=35 // pred_fallthru
                _
            $region36: #{lenet5_forward.3} parent=31 // pred_fallthru
              _
            // Predicated region
            $region37: #{lenet5_forward.3} parent=31 // pred_check
              _
            $region38: #{lenet5_forward.3} parent=31 // pred_check_branch
              %143 = sbr.rel target = $region40
            $region39: #{lenet5_forward.3} parent=31 // pred_region
              loop: start=0, step=1, limit=1
              $region41: #{lenet5_forward.3} parent=39 // loop_pre_header
                _
              $region42: #{lenet5_forward.3} parent=39 // loop_header
                %s146 = sphi 0, %s150
                %p147 = scmp.ge.s32.totalorder %s146, 1
                %s151 = sphi %s137, %s137
                %s152 = sphi %s134, %s134
              $region43: #{lenet5_forward.3} parent=39 // loop_header_branch
                %149 = sbr.rel (%p147) target = $region47
              $region44: #{lenet5_forward.3} parent=39 // loop_body
                %v153 = vld [vmem:[%s151] sm:$0xff]
                %154 = vst [vmem:[%s152] sm:$0xff] %v153
                %v155 = vld [vmem:[%s151 + $0x8] sm:$0xff]
                %156 = vst [vmem:[%s152 + $0x8] sm:$0xff] %v155
                %v157 = vld [vmem:[%s151 + $0x10] sm:$0xff]
                %158 = vst [vmem:[%s152 + $0x10] sm:$0xff] %v157
                %v159 = vld [vmem:[%s151 + $0x18] sm:$0xff]
                %160 = vst [vmem:[%s152 + $0x18] sm:$0xff] %v159
                %v161 = vld [vmem:[%s151 + $0x20] sm:$0xff]
                %162 = vst [vmem:[%s152 + $0x20] sm:$0xff] %v161
                %v163 = vld [vmem:[%s151 + $0x28] sm:$0xff]
                %164 = vst [vmem:[%s152 + $0x28] sm:$0xff] %v163
                %v165 = vld [vmem:[%s151 + $0x30] sm:$0xff]
                %166 = vst [vmem:[%s152 + $0x30] sm:$0xff] %v165
                %v167 = vld [vmem:[%s151 + $0x38] sm:$0xff]
                %168 = vst [vmem:[%s152 + $0x38] sm:$0xff] %v167
                %v169 = vld [vmem:[%s151 + $0x40] sm:$0xff]
                %170 = vst [vmem:[%s152 + $0x40] sm:$0xff] %v169
                %v171 = vld [vmem:[%s151 + $0x48] sm:$0xff]
                %172 = vst [vmem:[%s152 + $0x48] sm:$0xff] %v171
                %v173 = vld [vmem:[%s151 + $0x50] sm:$0xff]
                %174 = vst [vmem:[%s152 + $0x50] sm:$0xff] %v173
                %v175 = vld [vmem:[%s151 + $0x58] sm:$0xff]
                %176 = vst [vmem:[%s152 + $0x58] sm:$0xff] %v175
                %v177 = vld [vmem:[%s151 + $0x60] sm:$0xff]
                %178 = vst [vmem:[%s152 + $0x60] sm:$0xff] %v177
                %v179 = vld [vmem:[%s151 + $0x68] sm:$0xff]
                %180 = vst [vmem:[%s152 + $0x68] sm:$0xff] %v179
                %v181 = vld [vmem:[%s151 + $0x70] sm:$0xff]
                %182 = vst [vmem:[%s152 + $0x70] sm:$0xff] %v181
                %v183 = vld [vmem:[%s151 + $0x78] sm:$0xff]
                %184 = vst [vmem:[%s152 + $0x78] sm:$0xff] %v183
                %v185 = vld [vmem:[%s151 + $0x80] sm:$0xff]
                %186 = vst [vmem:[%s152 + $0x80] sm:$0xff] %v185
                %v187 = vld [vmem:[%s151 + $0x88] sm:$0xff]
                %188 = vst [vmem:[%s152 + $0x88] sm:$0xff] %v187
                %v189 = vld [vmem:[%s151 + $0x90] sm:$0xff]
                %190 = vst [vmem:[%s152 + $0x90] sm:$0xff] %v189
                %v191 = vld [vmem:[%s151 + $0x98] sm:$0xff]
                %192 = vst [vmem:[%s152 + $0x98] sm:$0xff] %v191
                %v193 = vld [vmem:[%s151 + $0xa0] sm:$0xff]
                %194 = vst [vmem:[%s152 + $0xa0] sm:$0xff] %v193
                %v195 = vld [vmem:[%s151 + $0xa8] sm:$0xff]
                %196 = vst [vmem:[%s152 + $0xa8] sm:$0xff] %v195
                %v197 = vld [vmem:[%s151 + $0xb0] sm:$0xff]
                %198 = vst [vmem:[%s152 + $0xb0] sm:$0xff] %v197
                %v199 = vld [vmem:[%s151 + $0xb8] sm:$0xff]
                %200 = vst [vmem:[%s152 + $0xb8] sm:$0xff] %v199
                %v201 = vld [vmem:[%s151 + $0xc0] sm:$0xff]
                %202 = vst [vmem:[%s152 + $0xc0] sm:$0xff] %v201
                %v203 = vld [vmem:[%s151 + $0xc8] sm:$0xff]
                %204 = vst [vmem:[%s152 + $0xc8] sm:$0xff] %v203
                %v205 = vld [vmem:[%s151 + $0xd0] sm:$0xff]
                %206 = vst [vmem:[%s152 + $0xd0] sm:$0xff] %v205
                %v207 = vld [vmem:[%s151 + $0xd8] sm:$0xff]
                %208 = vst [vmem:[%s152 + $0xd8] sm:$0xff] %v207
                %v209 = vld [vmem:[%s151 + $0xe0] sm:$0xff]
                %210 = vst [vmem:[%s152 + $0xe0] sm:$0xff] %v209
                %v211 = vld [vmem:[%s151 + $0xe8] sm:$0xff]
                %212 = vst [vmem:[%s152 + $0xe8] sm:$0xff] %v211
                %v213 = vld [vmem:[%s151 + $0xf0] sm:$0xff]
                %214 = vst [vmem:[%s152 + $0xf0] sm:$0xff] %v213
                %v215 = vld [vmem:[%s151 + $0xf8] sm:$0xff]
                %216 = vst [vmem:[%s152 + $0xf8] sm:$0xff] %v215
                %v217 = vld [vmem:[%s151 + $0x200] sm:$0xff]
                %218 = vst [vmem:[%s152 + $0x100] sm:$0xff] %v217
                %v219 = vld [vmem:[%s151 + $0x208] sm:$0xff]
                %220 = vst [vmem:[%s152 + $0x108] sm:$0xff] %v219
                %v221 = vld [vmem:[%s151 + $0x210] sm:$0xff]
                %222 = vst [vmem:[%s152 + $0x110] sm:$0xff] %v221
                %v223 = vld [vmem:[%s151 + $0x218] sm:$0xff]
                %224 = vst [vmem:[%s152 + $0x118] sm:$0xff] %v223
                %v225 = vld [vmem:[%s151 + $0x220] sm:$0xff]
                %226 = vst [vmem:[%s152 + $0x120] sm:$0xff] %v225
                %v227 = vld [vmem:[%s151 + $0x228] sm:$0xff]
                %228 = vst [vmem:[%s152 + $0x128] sm:$0xff] %v227
                %v229 = vld [vmem:[%s151 + $0x230] sm:$0xff]
                %230 = vst [vmem:[%s152 + $0x130] sm:$0xff] %v229
                %v231 = vld [vmem:[%s151 + $0x238] sm:$0xff]
                %232 = vst [vmem:[%s152 + $0x138] sm:$0xff] %v231
                %v233 = vld [vmem:[%s151 + $0x240] sm:$0xff]
                %234 = vst [vmem:[%s152 + $0x140] sm:$0xff] %v233
                %v235 = vld [vmem:[%s151 + $0x248] sm:$0xff]
                %236 = vst [vmem:[%s152 + $0x148] sm:$0xff] %v235
                %v237 = vld [vmem:[%s151 + $0x250] sm:$0xff]
                %238 = vst [vmem:[%s152 + $0x150] sm:$0xff] %v237
                %v239 = vld [vmem:[%s151 + $0x258] sm:$0xff]
                %240 = vst [vmem:[%s152 + $0x158] sm:$0xff] %v239
                %v241 = vld [vmem:[%s151 + $0x260] sm:$0xff]
                %242 = vst [vmem:[%s152 + $0x160] sm:$0xff] %v241
                %v243 = vld [vmem:[%s151 + $0x268] sm:$0xff]
                %244 = vst [vmem:[%s152 + $0x168] sm:$0xff] %v243
                %v245 = vld [vmem:[%s151 + $0x270] sm:$0xff]
                %246 = vst [vmem:[%s152 + $0x170] sm:$0xff] %v245
                %v247 = vld [vmem:[%s151 + $0x278] sm:$0xff]
                %248 = vst [vmem:[%s152 + $0x178] sm:$0xff] %v247
                %v249 = vld [vmem:[%s151 + $0x280] sm:$0xff]
                %250 = vst [vmem:[%s152 + $0x180] sm:$0xff] %v249
                %v251 = vld [vmem:[%s151 + $0x288] sm:$0xff]
                %252 = vst [vmem:[%s152 + $0x188] sm:$0xff] %v251
                %v253 = vld [vmem:[%s151 + $0x290] sm:$0xff]
                %254 = vst [vmem:[%s152 + $0x190] sm:$0xff] %v253
                %v255 = vld [vmem:[%s151 + $0x298] sm:$0xff]
                %256 = vst [vmem:[%s152 + $0x198] sm:$0xff] %v255
                %v257 = vld [vmem:[%s151 + $0x2a0] sm:$0xff]
                %258 = vst [vmem:[%s152 + $0x1a0] sm:$0xff] %v257
                %v259 = vld [vmem:[%s151 + $0x2a8] sm:$0xff]
                %260 = vst [vmem:[%s152 + $0x1a8] sm:$0xff] %v259
                %v261 = vld [vmem:[%s151 + $0x2b0] sm:$0xff]
                %262 = vst [vmem:[%s152 + $0x1b0] sm:$0xff] %v261
                %v263 = vld [vmem:[%s151 + $0x2b8] sm:$0xff]
                %264 = vst [vmem:[%s152 + $0x1b8] sm:$0xff] %v263
                %v265 = vld [vmem:[%s151 + $0x2c0] sm:$0xff]
                %266 = vst [vmem:[%s152 + $0x1c0] sm:$0xff] %v265
                %v267 = vld [vmem:[%s151 + $0x2c8] sm:$0xff]
                %268 = vst [vmem:[%s152 + $0x1c8] sm:$0xff] %v267
                %v269 = vld [vmem:[%s151 + $0x2d0] sm:$0xff]
                %270 = vst [vmem:[%s152 + $0x1d0] sm:$0xff] %v269
                %v271 = vld [vmem:[%s151 + $0x2d8] sm:$0xff]
                %272 = vst [vmem:[%s152 + $0x1d8] sm:$0xff] %v271
                %v273 = vld [vmem:[%s151 + $0x2e0] sm:$0xff]
                %274 = vst [vmem:[%s152 + $0x1e0] sm:$0xff] %v273
                %v275 = vld [vmem:[%s151 + $0x2e8] sm:$0xff]
                %276 = vst [vmem:[%s152 + $0x1e8] sm:$0xff] %v275
                %v277 = vld [vmem:[%s151 + $0x2f0] sm:$0xff]
                %278 = vst [vmem:[%s152 + $0x1f0] sm:$0xff] %v277
                %v279 = vld [vmem:[%s151 + $0x2f8] sm:$0xff]
                %280 = vst [vmem:[%s152 + $0x1f8] sm:$0xff] %v279
                %v281 = vld [vmem:[%s151 + $0x400] sm:$0xff]
                %282 = vst [vmem:[%s152 + $0x200] sm:$0xff] %v281
                %v283 = vld [vmem:[%s151 + $0x408] sm:$0xff]
                %284 = vst [vmem:[%s152 + $0x208] sm:$0xff] %v283
                %v285 = vld [vmem:[%s151 + $0x410] sm:$0xff]
                %286 = vst [vmem:[%s152 + $0x210] sm:$0xff] %v285
                %v287 = vld [vmem:[%s151 + $0x418] sm:$0xff]
                %288 = vst [vmem:[%s152 + $0x218] sm:$0xff] %v287
                %v289 = vld [vmem:[%s151 + $0x420] sm:$0xff]
                %290 = vst [vmem:[%s152 + $0x220] sm:$0xff] %v289
                %v291 = vld [vmem:[%s151 + $0x428] sm:$0xff]
                %292 = vst [vmem:[%s152 + $0x228] sm:$0xff] %v291
                %v293 = vld [vmem:[%s151 + $0x430] sm:$0xff]
                %294 = vst [vmem:[%s152 + $0x230] sm:$0xff] %v293
                %v295 = vld [vmem:[%s151 + $0x438] sm:$0xff]
                %296 = vst [vmem:[%s152 + $0x238] sm:$0xff] %v295
                %v297 = vld [vmem:[%s151 + $0x440] sm:$0xff]
                %298 = vst [vmem:[%s152 + $0x240] sm:$0xff] %v297
                %v299 = vld [vmem:[%s151 + $0x448] sm:$0xff]
                %300 = vst [vmem:[%s152 + $0x248] sm:$0xff] %v299
                %v301 = vld [vmem:[%s151 + $0x450] sm:$0xff]
                %302 = vst [vmem:[%s152 + $0x250] sm:$0xff] %v301
                %v303 = vld [vmem:[%s151 + $0x458] sm:$0xff]
                %304 = vst [vmem:[%s152 + $0x258] sm:$0xff] %v303
                %v305 = vld [vmem:[%s151 + $0x460] sm:$0xff]
                %306 = vst [vmem:[%s152 + $0x260] sm:$0xff] %v305
                %v307 = vld [vmem:[%s151 + $0x468] sm:$0xff]
                %308 = vst [vmem:[%s152 + $0x268] sm:$0xff] %v307
                %v309 = vld [vmem:[%s151 + $0x470] sm:$0xff]
                %310 = vst [vmem:[%s152 + $0x270] sm:$0xff] %v309
                %v311 = vld [vmem:[%s151 + $0x478] sm:$0xff]
                %312 = vst [vmem:[%s152 + $0x278] sm:$0xff] %v311
                %v313 = vld [vmem:[%s151 + $0x480] sm:$0xff]
                %314 = vst [vmem:[%s152 + $0x280] sm:$0xff] %v313
                %v315 = vld [vmem:[%s151 + $0x488] sm:$0xff]
                %316 = vst [vmem:[%s152 + $0x288] sm:$0xff] %v315
                %v317 = vld [vmem:[%s151 + $0x490] sm:$0xff]
                %318 = vst [vmem:[%s152 + $0x290] sm:$0xff] %v317
                %v319 = vld [vmem:[%s151 + $0x498] sm:$0xff]
                %320 = vst [vmem:[%s152 + $0x298] sm:$0xff] %v319
                %v321 = vld [vmem:[%s151 + $0x4a0] sm:$0xff]
                %322 = vst [vmem:[%s152 + $0x2a0] sm:$0xff] %v321
                %v323 = vld [vmem:[%s151 + $0x4a8] sm:$0xff]
                %324 = vst [vmem:[%s152 + $0x2a8] sm:$0xff] %v323
                %v325 = vld [vmem:[%s151 + $0x4b0] sm:$0xff]
                %326 = vst [vmem:[%s152 + $0x2b0] sm:$0xff] %v325
                %v327 = vld [vmem:[%s151 + $0x4b8] sm:$0xff]
                %328 = vst [vmem:[%s152 + $0x2b8] sm:$0xff] %v327
                %v329 = vld [vmem:[%s151 + $0x4c0] sm:$0xff]
                %330 = vst [vmem:[%s152 + $0x2c0] sm:$0xff] %v329
                %v331 = vld [vmem:[%s151 + $0x4c8] sm:$0xff]
                %332 = vst [vmem:[%s152 + $0x2c8] sm:$0xff] %v331
                %v333 = vld [vmem:[%s151 + $0x4d0] sm:$0xff]
                %334 = vst [vmem:[%s152 + $0x2d0] sm:$0xff] %v333
                %v335 = vld [vmem:[%s151 + $0x4d8] sm:$0xff]
                %336 = vst [vmem:[%s152 + $0x2d8] sm:$0xff] %v335
                %v337 = vld [vmem:[%s151 + $0x4e0] sm:$0xff]
                %338 = vst [vmem:[%s152 + $0x2e0] sm:$0xff] %v337
                %v339 = vld [vmem:[%s151 + $0x4e8] sm:$0xff]
                %340 = vst [vmem:[%s152 + $0x2e8] sm:$0xff] %v339
                %v341 = vld [vmem:[%s151 + $0x4f0] sm:$0xff]
                %342 = vst [vmem:[%s152 + $0x2f0] sm:$0xff] %v341
                %v343 = vld [vmem:[%s151 + $0x4f8] sm:$0xff]
                %344 = vst [vmem:[%s152 + $0x2f8] sm:$0xff] %v343
                %v345 = vld [vmem:[%s151 + $0x600] sm:$0xff]
                %346 = vst [vmem:[%s152 + $0x300] sm:$0xff] %v345
                %v347 = vld [vmem:[%s151 + $0x608] sm:$0xff]
                %348 = vst [vmem:[%s152 + $0x308] sm:$0xff] %v347
                %v349 = vld [vmem:[%s151 + $0x610] sm:$0xff]
                %350 = vst [vmem:[%s152 + $0x310] sm:$0xff] %v349
                %v351 = vld [vmem:[%s151 + $0x618] sm:$0xff]
                %352 = vst [vmem:[%s152 + $0x318] sm:$0xff] %v351
                %v353 = vld [vmem:[%s151 + $0x620] sm:$0xff]
                %354 = vst [vmem:[%s152 + $0x320] sm:$0xff] %v353
                %v355 = vld [vmem:[%s151 + $0x628] sm:$0xff]
                %356 = vst [vmem:[%s152 + $0x328] sm:$0xff] %v355
                %v357 = vld [vmem:[%s151 + $0x630] sm:$0xff]
                %358 = vst [vmem:[%s152 + $0x330] sm:$0xff] %v357
                %v359 = vld [vmem:[%s151 + $0x638] sm:$0xff]
                %360 = vst [vmem:[%s152 + $0x338] sm:$0xff] %v359
                %v361 = vld [vmem:[%s151 + $0x640] sm:$0xff]
                %362 = vst [vmem:[%s152 + $0x340] sm:$0xff] %v361
                %v363 = vld [vmem:[%s151 + $0x648] sm:$0xff]
                %364 = vst [vmem:[%s152 + $0x348] sm:$0xff] %v363
                %v365 = vld [vmem:[%s151 + $0x650] sm:$0xff]
                %366 = vst [vmem:[%s152 + $0x350] sm:$0xff] %v365
                %v367 = vld [vmem:[%s151 + $0x658] sm:$0xff]
                %368 = vst [vmem:[%s152 + $0x358] sm:$0xff] %v367
                %v369 = vld [vmem:[%s151 + $0x660] sm:$0xff]
                %370 = vst [vmem:[%s152 + $0x360] sm:$0xff] %v369
                %v371 = vld [vmem:[%s151 + $0x668] sm:$0xff]
                %372 = vst [vmem:[%s152 + $0x368] sm:$0xff] %v371
                %v373 = vld [vmem:[%s151 + $0x670] sm:$0xff]
                %374 = vst [vmem:[%s152 + $0x370] sm:$0xff] %v373
                %v375 = vld [vmem:[%s151 + $0x678] sm:$0xff]
                %376 = vst [vmem:[%s152 + $0x378] sm:$0xff] %v375
                %v377 = vld [vmem:[%s151 + $0x680] sm:$0xff]
                %378 = vst [vmem:[%s152 + $0x380] sm:$0xff] %v377
                %v379 = vld [vmem:[%s151 + $0x688] sm:$0xff]
                %380 = vst [vmem:[%s152 + $0x388] sm:$0xff] %v379
                %v381 = vld [vmem:[%s151 + $0x690] sm:$0xff]
                %382 = vst [vmem:[%s152 + $0x390] sm:$0xff] %v381
                %v383 = vld [vmem:[%s151 + $0x698] sm:$0xff]
                %384 = vst [vmem:[%s152 + $0x398] sm:$0xff] %v383
                %v385 = vld [vmem:[%s151 + $0x6a0] sm:$0xff]
                %386 = vst [vmem:[%s152 + $0x3a0] sm:$0xff] %v385
                %v387 = vld [vmem:[%s151 + $0x6a8] sm:$0xff]
                %388 = vst [vmem:[%s152 + $0x3a8] sm:$0xff] %v387
                %v389 = vld [vmem:[%s151 + $0x6b0] sm:$0xff]
                %390 = vst [vmem:[%s152 + $0x3b0] sm:$0xff] %v389
                %v391 = vld [vmem:[%s151 + $0x6b8] sm:$0xff]
                %392 = vst [vmem:[%s152 + $0x3b8] sm:$0xff] %v391
                %v393 = vld [vmem:[%s151 + $0x6c0] sm:$0xff]
                %394 = vst [vmem:[%s152 + $0x3c0] sm:$0xff] %v393
                %v395 = vld [vmem:[%s151 + $0x6c8] sm:$0xff]
                %396 = vst [vmem:[%s152 + $0x3c8] sm:$0xff] %v395
                %v397 = vld [vmem:[%s151 + $0x6d0] sm:$0xff]
                %398 = vst [vmem:[%s152 + $0x3d0] sm:$0xff] %v397
                %v399 = vld [vmem:[%s151 + $0x6d8] sm:$0xff]
                %400 = vst [vmem:[%s152 + $0x3d8] sm:$0xff] %v399
                %v401 = vld [vmem:[%s151 + $0x6e0] sm:$0xff]
                %402 = vst [vmem:[%s152 + $0x3e0] sm:$0xff] %v401
                %v403 = vld [vmem:[%s151 + $0x6e8] sm:$0xff]
                %404 = vst [vmem:[%s152 + $0x3e8] sm:$0xff] %v403
                %v405 = vld [vmem:[%s151 + $0x6f0] sm:$0xff]
                %406 = vst [vmem:[%s152 + $0x3f0] sm:$0xff] %v405
                %v407 = vld [vmem:[%s151 + $0x6f8] sm:$0xff]
                %408 = vst [vmem:[%s152 + $0x3f8] sm:$0xff] %v407
              $region45: #{lenet5_forward.3} parent=39 // loop_footer
                %s150 = sadd.s32 1, %s146
              $region46: #{lenet5_forward.3} parent=39 // loop_footer_branch
                %145 = sbr.rel target = $region42
              $region47: #{lenet5_forward.3} parent=39 // loop_exit
                _
            $region40: #{lenet5_forward.3} parent=31 // pred_fallthru
              _
          $region32: #{lenet5_forward.3} parent=27 // pred_fallthru
            _
          %677 = vnop
        $region28: #{lenet5_forward.3} parent=23 // pred_fallthru
          _
      $region24: #{lenet5_forward.3} parent=5 // pred_fallthru
        _
      %p678 = scmp.le.s32.totalorder 1, %s9
      %p679 = scmp.lt.s32.totalorder %s9, 3
      %p680 = pnand %p678, %p679
      %p681 = pneg %p680
      // Predicated region
      $region63: #{lenet5_forward.3} parent=5 // pred_check
        _
      $region64: #{lenet5_forward.3} parent=5 // pred_check_branch
        %683 = sbr.rel (%p680) target = $region66
      $region65: #{lenet5_forward.3} parent=5 // pred_region
        %s684 = ssub.s32 %s9, 1
        %s685 = sand.u32 %s22, 1
        %s686 = sand.u32 %s22, 1
        %s687 = smul.addr %s686, 1024
        %s688 = scalar_lea.vmem [#allocation2], %s687
        // Predicated region
        $region67: #{lenet5_forward.3} parent=65 // pred_check
          %p689 = pneg %p35
        $region68: #{lenet5_forward.3} parent=65 // pred_check_branch
          %691 = sbr.rel (%p689) target = $region70
        $region69: #{lenet5_forward.3} parent=65 // pred_region
          _
        $region70: #{lenet5_forward.3} parent=65 // pred_fallthru
          _
        %s692 = sand.u32 %s22, 1
        %s693 = sand.u32 %s22, 1
        %s694 = smul.addr %s693, 1024
        %s695 = scalar_lea.vmem [#allocation2], %s694
        %p696 = pneg %p35
        %p697 = pneg %p32
        %p698 = pneg %p56
        %p699 = pneg %p53
        %p700 = pneg %p77
        %p701 = pneg %p74
        %p702 = pneg %p103
        %p703 = pneg %p100
        %s704 = smul.u32 32, %s14
        %p705 = scmp.lt.s32.totalorder %s704, 63
        %s706 = scalar_select %p705, %s704, 63
        %s707 = smul.addr %s706, 8
        %s708 = scalar_lea.vmem %s3, %s707
        %s709 = smul.u32 32, %s14
        %s710 = smul.u32 32, %s14
        %p711 = scmp.lt.s32.totalorder %s710, 63
        %s712 = scalar_select %p711, %s710, 63
        %s713 = smul.addr %s712, 8
        %s714 = scalar_lea.vmem %s3, %s713
        %s715 = smul.u32 32, %s14
        %v716 = vld [vmem:[%s1] sm:$0xff]
        %v717 = vld [vmem:[%s1 + $0x8] sm:$0xff]
        %v718 = vld [vmem:[%s1 + $0x10] sm:$0xff]
        %v719 = vld [vmem:[%s1 + $0x18] sm:$0x1]
        %v720 = vld [vmem:[%s688] sm:$0xff]
        %v721 = vld [vmem:[%s688 + $0x8] sm:$0xff]
        %v722 = vld [vmem:[%s688 + $0x10] sm:$0xff]
        %v723 = vld [vmem:[%s688 + $0x18] sm:$0xff]
        %v724 = vld [vmem:[%s688 + $0x20] sm:$0xff]
        %v725 = vld [vmem:[%s688 + $0x28] sm:$0xff]
        %v726 = vld [vmem:[%s688 + $0x30] sm:$0xff]
        %v727 = vld [vmem:[%s688 + $0x38] sm:$0xff]
        %v728 = vld [vmem:[%s688 + $0x40] sm:$0xff]
        %v729 = vld [vmem:[%s688 + $0x48] sm:$0xff]
        %v730 = vld [vmem:[%s688 + $0x50] sm:$0xff]
        %v731 = vld [vmem:[%s688 + $0x58] sm:$0xff]
        %v732 = vld [vmem:[%s688 + $0x60] sm:$0xff]
        %v733 = vld [vmem:[%s688 + $0x68] sm:$0xff]
        %v734 = vld [vmem:[%s688 + $0x70] sm:$0xff]
        %v735 = vld [vmem:[%s688 + $0x78] sm:$0xff]
        %v736 = vld [vmem:[%s688 + $0x80] sm:$0xff]
        %v737 = vld [vmem:[%s688 + $0x88] sm:$0xff]
        %v738 = vld [vmem:[%s688 + $0x90] sm:$0xff]
        %v739 = vld [vmem:[%s688 + $0x98] sm:$0xff]
        %v740 = vld [vmem:[%s688 + $0xa0] sm:$0xff]
        %v741 = vld [vmem:[%s688 + $0xa8] sm:$0xff]
        %v742 = vld [vmem:[%s688 + $0xb0] sm:$0xff]
        %v743 = vld [vmem:[%s688 + $0xb8] sm:$0xff]
        %v744 = vld [vmem:[%s688 + $0xc0] sm:$0xff]
        %v745 = vld [vmem:[%s688 + $0xc8] sm:$0xff]
        %v746 = vld [vmem:[%s688 + $0xd0] sm:$0xff]
        %v747 = vld [vmem:[%s688 + $0xd8] sm:$0xff]
        %v748 = vld [vmem:[%s688 + $0xe0] sm:$0xff]
        %v749 = vld [vmem:[%s688 + $0xe8] sm:$0xff]
        %v750 = vld [vmem:[%s688 + $0xf0] sm:$0xff]
        %v751 = vld [vmem:[%s688 + $0xf8] sm:$0xff]
        %vm752 = vcmask 203776
        %v754 = vsel %vm752, %v720, 0
        %v757 = vsel %vm752, %v721, 0
        %v760 = vsel %vm752, %v722, 0
        %v763 = vsel %vm752, %v723, 0
        %v766 = vsel %vm752, %v724, 0
        %v769 = vsel %vm752, %v725, 0
        %v772 = vsel %vm752, %v726, 0
        %v775 = vsel %vm752, %v727, 0
        %v778 = vsel %vm752, %v728, 0
        %v781 = vsel %vm752, %v729, 0
        %v784 = vsel %vm752, %v730, 0
        %v787 = vsel %vm752, %v731, 0
        %v790 = vsel %vm752, %v732, 0
        %v793 = vsel %vm752, %v733, 0
        %v796 = vsel %vm752, %v734, 0
        %v799 = vsel %vm752, %v735, 0
        %v802 = vsel %vm752, %v736, 0
        %v805 = vsel %vm752, %v737, 0
        %v808 = vsel %vm752, %v738, 0
        %v811 = vsel %vm752, %v739, 0
        %v814 = vsel %vm752, %v740, 0
        %v817 = vsel %vm752, %v741, 0
        %v820 = vsel %vm752, %v742, 0
        %v823 = vsel %vm752, %v743, 0
        %v826 = vsel %vm752, %v744, 0
        %v829 = vsel %vm752, %v745, 0
        %v832 = vsel %vm752, %v746, 0
        %v835 = vsel %vm752, %v747, 0
        %v838 = vsel %vm752, %v748, 0
        %v841 = vsel %vm752, %v749, 0
        %v844 = vsel %vm752, %v750, 0
        %v847 = vsel %vm752, %v751, 0
        %vm849 = vcmask 1040384
        %v851 = vsel %vm849, %v719, 0
        %853 = vmatprep.subr.mxu0 0.0
        %854 = vmatpush1.msra.mxu0 %v716
        %855 = vmatprep.subr.mxu0 0.0
        %856 = vmatpush1.msra.mxu0 %v717
        %857 = vmatprep.subr.mxu0 0.0
        %858 = vmatpush1.msra.mxu0 %v718
        %859 = vmatprep.subr.mxu0 0.0
        %860 = vmatpush1.msra.mxu0 %v851
        %861 = vmatprep.subr.mxu0 0.0
        %862 = vmatpush1.msra.mxu0 0.0
        %863 = vmatprep.subr.mxu0 0.0
        %864 = vmatpush1.msra.mxu0 0.0
        %865 = vmatprep.subr.mxu0 0.0
        %866 = vmatpush1.msra.mxu0 0.0
        %867 = vmatprep.subr.mxu0 0.0
        %868 = vmatpush1.msra.mxu0 0.0
        %869 = vmatprep.subr.mxu0 0.0
        %870 = vmatpush1.msra.mxu0 0.0
        %871 = vmatprep.subr.mxu0 0.0
        %872 = vmatpush1.msra.mxu0 0.0
        %873 = vmatprep.subr.mxu0 0.0
        %874 = vmatpush1.msra.mxu0 0.0
        %875 = vmatprep.subr.mxu0 0.0
        %876 = vmatpush1.msra.mxu0 0.0
        %877 = vmatprep.subr.mxu0 0.0
        %878 = vmatpush1.msra.mxu0 0.0
        %879 = vmatprep.subr.mxu0 0.0
        %880 = vmatpush1.msra.mxu0 0.0
        %881 = vmatprep.subr.mxu0 0.0
        %882 = vmatpush1.msra.mxu0 0.0
        %883 = vmatprep.subr.mxu0 0.0
        %884 = vmatpush1.msra.mxu0 0.0
        %885 = vmatprep.subr.mxu0 0.0
        %886 = vmatpush1.msra.mxu0 0.0
        %887 = vmatprep.subr.mxu0 0.0
        %888 = vmatpush1.msra.mxu0 0.0
        %889 = vmatprep.subr.mxu0 0.0
        %890 = vmatpush1.msra.mxu0 0.0
        %891 = vmatprep.subr.mxu0 0.0
        %892 = vmatpush1.msra.mxu0 0.0
        %893 = vmatprep.subr.mxu0 0.0
        %894 = vmatpush1.msra.mxu0 0.0
        %895 = vmatprep.subr.mxu0 0.0
        %896 = vmatpush1.msra.mxu0 0.0
        %897 = vmatprep.subr.mxu0 0.0
        %898 = vmatpush1.msra.mxu0 0.0
        %899 = vmatprep.subr.mxu0 0.0
        %900 = vmatpush1.msra.mxu0 0.0
        %901 = vmatprep.subr.mxu0 0.0
        %902 = vmatpush1.msra.mxu0 0.0
        %903 = vmatprep.subr.mxu0 0.0
        %904 = vmatpush1.msra.mxu0 0.0
        %905 = vmatprep.subr.mxu0 0.0
        %906 = vmatpush1.msra.mxu0 0.0
        %907 = vmatprep.subr.mxu0 0.0
        %908 = vmatpush1.msra.mxu0 0.0
        %909 = vmatprep.subr.mxu0 0.0
        %910 = vmatpush1.msra.mxu0 0.0
        %911 = vmatprep.subr.mxu0 0.0
        %912 = vmatpush1.msra.mxu0 0.0
        %913 = vmatprep.subr.mxu0 0.0
        %914 = vmatpush1.msra.mxu0 0.0
        %915 = vmatprep.subr.mxu0 0.0
        %916 = vmatpush1.msra.mxu0 0.0
        %917 = vmatprep.mubr.f32.mxu0 0.0
        %918 = vmatmul.mubr.f32.gmra.mrb[0].mxu0 %v754
        %v919 = vpop.f32.mrb[0].mxu0
        %v920 = vadd.f32 0.0, %v919
        %v921 = vpop.f32.mrb[0].mxu0
        %922 = vmatprep.mubr.f32.mxu0 0.0
        %923 = vmatmul.mubr.f32.gmra.mrb[0].mxu0 %v757
        %v924 = vpop.f32.mrb[0].mxu0
        %v925 = vadd.f32 0.0, %v924
        %v926 = vpop.f32.mrb[0].mxu0
        %927 = vmatprep.mubr.f32.mxu0 0.0
        %928 = vmatmul.mubr.f32.gmra.mrb[0].mxu0 %v760
        %v929 = vpop.f32.mrb[0].mxu0
        %v930 = vadd.f32 0.0, %v929
        %v931 = vpop.f32.mrb[0].mxu0
        %932 = vmatprep.mubr.f32.mxu0 0.0
        %933 = vmatmul.mubr.f32.gmra.mrb[0].mxu0 %v763
        %v934 = vpop.f32.mrb[0].mxu0
        %v935 = vadd.f32 0.0, %v934
        %v936 = vpop.f32.mrb[0].mxu0
        %937 = vmatprep.mubr.f32.mxu0 0.0
        %938 = vmatmul.mubr.f32.gmra.mrb[0].mxu0 %v766
        %v939 = vpop.f32.mrb[0].mxu0
        %v940 = vadd.f32 0.0, %v939
        %v941 = vpop.f32.mrb[0].mxu0
        %942 = vmatprep.mubr.f32.mxu0 0.0
        %943 = vmatmul.mubr.f32.gmra.mrb[0].mxu0 %v769
        %v944 = vpop.f32.mrb[0].mxu0
        %v945 = vadd.f32 0.0, %v944
        %v946 = vpop.f32.mrb[0].mxu0
        %947 = vmatprep.mubr.f32.mxu0 0.0
        %948 = vmatmul.mubr.f32.gmra.mrb[0].mxu0 %v772
        %v949 = vpop.f32.mrb[0].mxu0
        %v950 = vadd.f32 0.0, %v949
        %v951 = vpop.f32.mrb[0].mxu0
        %952 = vmatprep.mubr.f32.mxu0 0.0
        %953 = vmatmul.mubr.f32.gmra.mrb[0].mxu0 %v775
        %v954 = vpop.f32.mrb[0].mxu0
        %v955 = vadd.f32 0.0, %v954
        %v956 = vpop.f32.mrb[0].mxu0
        %957 = vmatprep.mubr.f32.mxu0 0.0
        %958 = vmatmul.mubr.f32.gmra.mrb[0].mxu0 %v778
        %v959 = vpop.f32.mrb[0].mxu0
        %v960 = vadd.f32 0.0, %v959
        %v961 = vpop.f32.mrb[0].mxu0
        %962 = vmatprep.mubr.f32.mxu0 0.0
        %963 = vmatmul.mubr.f32.gmra.mrb[0].mxu0 %v781
        %v964 = vpop.f32.mrb[0].mxu0
        %v965 = vadd.f32 0.0, %v964
        %v966 = vpop.f32.mrb[0].mxu0
        %967 = vmatprep.mubr.f32.mxu0 0.0
        %968 = vmatmul.mubr.f32.gmra.mrb[0].mxu0 %v784
        %v969 = vpop.f32.mrb[0].mxu0
        %v970 = vadd.f32 0.0, %v969
        %v971 = vpop.f32.mrb[0].mxu0
        %972 = vmatprep.mubr.f32.mxu0 0.0
        %973 = vmatmul.mubr.f32.gmra.mrb[0].mxu0 %v787
        %v974 = vpop.f32.mrb[0].mxu0
        %v975 = vadd.f32 0.0, %v974
        %v976 = vpop.f32.mrb[0].mxu0
        %977 = vmatprep.mubr.f32.mxu0 0.0
        %978 = vmatmul.mubr.f32.gmra.mrb[0].mxu0 %v790
        %v979 = vpop.f32.mrb[0].mxu0
        %v980 = vadd.f32 0.0, %v979
        %v981 = vpop.f32.mrb[0].mxu0
        %982 = vmatprep.mubr.f32.mxu0 0.0
        %983 = vmatmul.mubr.f32.gmra.mrb[0].mxu0 %v793
        %v984 = vpop.f32.mrb[0].mxu0
        %v985 = vadd.f32 0.0, %v984
        %v986 = vpop.f32.mrb[0].mxu0
        %987 = vmatprep.mubr.f32.mxu0 0.0
        %988 = vmatmul.mubr.f32.gmra.mrb[0].mxu0 %v796
        %v989 = vpop.f32.mrb[0].mxu0
        %v990 = vadd.f32 0.0, %v989
        %v991 = vpop.f32.mrb[0].mxu0
        %992 = vmatprep.mubr.f32.mxu0 0.0
        %993 = vmatmul.mubr.f32.gmra.mrb[0].mxu0 %v799
        %v994 = vpop.f32.mrb[0].mxu0
        %v995 = vadd.f32 0.0, %v994
        %v996 = vpop.f32.mrb[0].mxu0
        %997 = vmatprep.mubr.f32.mxu0 0.0
        %998 = vmatmul.mubr.f32.gmra.mrb[0].mxu0 %v802
        %v999 = vpop.f32.mrb[0].mxu0
        %v1000 = vadd.f32 0.0, %v999
        %v1001 = vpop.f32.mrb[0].mxu0
        %1002 = vmatprep.mubr.f32.mxu0 0.0
        %1003 = vmatmul.mubr.f32.gmra.mrb[0].mxu0 %v805
        %v1004 = vpop.f32.mrb[0].mxu0
        %v1005 = vadd.f32 0.0, %v1004
        %v1006 = vpop.f32.mrb[0].mxu0
        %1007 = vmatprep.mubr.f32.mxu0 0.0
        %1008 = vmatmul.mubr.f32.gmra.mrb[0].mxu0 %v808
        %v1009 = vpop.f32.mrb[0].mxu0
        %v1010 = vadd.f32 0.0, %v1009
        %v1011 = vpop.f32.mrb[0].mxu0
        %1012 = vmatprep.mubr.f32.mxu0 0.0
        %1013 = vmatmul.mubr.f32.gmra.mrb[0].mxu0 %v811
        %v1014 = vpop.f32.mrb[0].mxu0
        %v1015 = vadd.f32 0.0, %v1014
        %v1016 = vpop.f32.mrb[0].mxu0
        %1017 = vmatprep.mubr.f32.mxu0 0.0
        %1018 = vmatmul.mubr.f32.gmra.mrb[0].mxu0 %v814
        %v1019 = vpop.f32.mrb[0].mxu0
        %v1020 = vadd.f32 0.0, %v1019
        %v1021 = vpop.f32.mrb[0].mxu0
        %1022 = vmatprep.mubr.f32.mxu0 0.0
        %1023 = vmatmul.mubr.f32.gmra.mrb[0].mxu0 %v817
        %v1024 = vpop.f32.mrb[0].mxu0
        %v1025 = vadd.f32 0.0, %v1024
        %v1026 = vpop.f32.mrb[0].mxu0
        %1027 = vmatprep.mubr.f32.mxu0 0.0
        %1028 = vmatmul.mubr.f32.gmra.mrb[0].mxu0 %v820
        %v1029 = vpop.f32.mrb[0].mxu0
        %v1030 = vadd.f32 0.0, %v1029
        %v1031 = vpop.f32.mrb[0].mxu0
        %1032 = vmatprep.mubr.f32.mxu0 0.0
        %1033 = vmatmul.mubr.f32.gmra.mrb[0].mxu0 %v823
        %v1034 = vpop.f32.mrb[0].mxu0
        %v1035 = vadd.f32 0.0, %v1034
        %v1036 = vpop.f32.mrb[0].mxu0
        %1037 = vmatprep.mubr.f32.mxu0 0.0
        %1038 = vmatmul.mubr.f32.gmra.mrb[0].mxu0 %v826
        %v1039 = vpop.f32.mrb[0].mxu0
        %v1040 = vadd.f32 0.0, %v1039
        %v1041 = vpop.f32.mrb[0].mxu0
        %1042 = vmatprep.mubr.f32.mxu0 0.0
        %1043 = vmatmul.mubr.f32.gmra.mrb[0].mxu0 %v829
        %v1044 = vpop.f32.mrb[0].mxu0
        %v1045 = vadd.f32 0.0, %v1044
        %v1046 = vpop.f32.mrb[0].mxu0
        %1047 = vmatprep.mubr.f32.mxu0 0.0
        %1048 = vmatmul.mubr.f32.gmra.mrb[0].mxu0 %v832
        %v1049 = vpop.f32.mrb[0].mxu0
        %v1050 = vadd.f32 0.0, %v1049
        %v1051 = vpop.f32.mrb[0].mxu0
        %1052 = vmatprep.mubr.f32.mxu0 0.0
        %1053 = vmatmul.mubr.f32.gmra.mrb[0].mxu0 %v835
        %v1054 = vpop.f32.mrb[0].mxu0
        %v1055 = vadd.f32 0.0, %v1054
        %v1056 = vpop.f32.mrb[0].mxu0
        %1057 = vmatprep.mubr.f32.mxu0 0.0
        %1058 = vmatmul.mubr.f32.gmra.mrb[0].mxu0 %v838
        %v1059 = vpop.f32.mrb[0].mxu0
        %v1060 = vadd.f32 0.0, %v1059
        %v1061 = vpop.f32.mrb[0].mxu0
        %1062 = vmatprep.mubr.f32.mxu0 0.0
        %1063 = vmatmul.mubr.f32.gmra.mrb[0].mxu0 %v841
        %v1064 = vpop.f32.mrb[0].mxu0
        %v1065 = vadd.f32 0.0, %v1064
        %v1066 = vpop.f32.mrb[0].mxu0
        %1067 = vmatprep.mubr.f32.mxu0 0.0
        %1068 = vmatmul.mubr.f32.gmra.mrb[0].mxu0 %v844
        %v1069 = vpop.f32.mrb[0].mxu0
        %v1070 = vadd.f32 0.0, %v1069
        %v1071 = vpop.f32.mrb[0].mxu0
        %1072 = vmatprep.mubr.f32.mxu0 0.0
        %1073 = vmatmul.mubr.f32.gmra.mrb[0].mxu0 %v847
        %v1074 = vpop.f32.mrb[0].mxu0
        %v1075 = vadd.f32 0.0, %v1074
        %v1076 = vpop.f32.mrb[0].mxu0
        %1077 = vdwg.mxu0
        %s1078 = scalar_lea.vmem %s688, 256 [#allocation2]
        %v1079 = vld [vmem:[%s1078] sm:$0xff]
        %v1080 = vld [vmem:[%s1078 + $0x8] sm:$0xff]
        %v1081 = vld [vmem:[%s1078 + $0x10] sm:$0xff]
        %v1082 = vld [vmem:[%s1078 + $0x18] sm:$0xff]
        %v1083 = vld [vmem:[%s1078 + $0x20] sm:$0xff]
        %v1084 = vld [vmem:[%s1078 + $0x28] sm:$0xff]
        %v1085 = vld [vmem:[%s1078 + $0x30] sm:$0xff]
        %v1086 = vld [vmem:[%s1078 + $0x38] sm:$0xff]
        %v1087 = vld [vmem:[%s1078 + $0x40] sm:$0xff]
        %v1088 = vld [vmem:[%s1078 + $0x48] sm:$0xff]
        %v1089 = vld [vmem:[%s1078 + $0x50] sm:$0xff]
        %v1090 = vld [vmem:[%s1078 + $0x58] sm:$0xff]
        %v1091 = vld [vmem:[%s1078 + $0x60] sm:$0xff]
        %v1092 = vld [vmem:[%s1078 + $0x68] sm:$0xff]
        %v1093 = vld [vmem:[%s1078 + $0x70] sm:$0xff]
        %v1094 = vld [vmem:[%s1078 + $0x78] sm:$0xff]
        %v1095 = vld [vmem:[%s1078 + $0x80] sm:$0xff]
        %v1096 = vld [vmem:[%s1078 + $0x88] sm:$0xff]
        %v1097 = vld [vmem:[%s1078 + $0x90] sm:$0xff]
        %v1098 = vld [vmem:[%s1078 + $0x98] sm:$0xff]
        %v1099 = vld [vmem:[%s1078 + $0xa0] sm:$0xff]
        %v1100 = vld [vmem:[%s1078 + $0xa8] sm:$0xff]
        %v1101 = vld [vmem:[%s1078 + $0xb0] sm:$0xff]
        %v1102 = vld [vmem:[%s1078 + $0xb8] sm:$0xff]
        %v1103 = vld [vmem:[%s1078 + $0xc0] sm:$0xff]
        %v1104 = vld [vmem:[%s1078 + $0xc8] sm:$0xff]
        %v1105 = vld [vmem:[%s1078 + $0xd0] sm:$0xff]
        %v1106 = vld [vmem:[%s1078 + $0xd8] sm:$0xff]
        %v1107 = vld [vmem:[%s1078 + $0xe0] sm:$0xff]
        %v1108 = vld [vmem:[%s1078 + $0xe8] sm:$0xff]
        %v1109 = vld [vmem:[%s1078 + $0xf0] sm:$0xff]
        %v1110 = vld [vmem:[%s1078 + $0xf8] sm:$0xff]
        %v1112 = vsel %vm752, %v1079, 0
        %v1115 = vsel %vm752, %v1080, 0
        %v1118 = vsel %vm752, %v1081, 0
        %v1121 = vsel %vm752, %v1082, 0
        %v1124 = vsel %vm752, %v1083, 0
        %v1127 = vsel %vm752, %v1084, 0
        %v1130 = vsel %vm752, %v1085, 0
        %v1133 = vsel %vm752, %v1086, 0
        %v1136 = vsel %vm752, %v1087, 0
        %v1139 = vsel %vm752, %v1088, 0
        %v1142 = vsel %vm752, %v1089, 0
        %v1145 = vsel %vm752, %v1090, 0
        %v1148 = vsel %vm752, %v1091, 0
        %v1151 = vsel %vm752, %v1092, 0
        %v1154 = vsel %vm752, %v1093, 0
        %v1157 = vsel %vm752, %v1094, 0
        %v1160 = vsel %vm752, %v1095, 0
        %v1163 = vsel %vm752, %v1096, 0
        %v1166 = vsel %vm752, %v1097, 0
        %v1169 = vsel %vm752, %v1098, 0
        %v1172 = vsel %vm752, %v1099, 0
        %v1175 = vsel %vm752, %v1100, 0
        %v1178 = vsel %vm752, %v1101, 0
        %v1181 = vsel %vm752, %v1102, 0
        %v1184 = vsel %vm752, %v1103, 0
        %v1187 = vsel %vm752, %v1104, 0
        %v1190 = vsel %vm752, %v1105, 0
        %v1193 = vsel %vm752, %v1106, 0
        %v1196 = vsel %vm752, %v1107, 0
        %v1199 = vsel %vm752, %v1108, 0
        %v1202 = vsel %vm752, %v1109, 0
        %v1205 = vsel %vm752, %v1110, 0
        %1207 = vmatprep.subr.mxu0 0.0
        %1208 = vmatpush1.msra.mxu0 %v716
        %1209 = vmatprep.subr.mxu0 0.0
        %1210 = vmatpush1.msra.mxu0 %v717
        %1211 = vmatprep.subr.mxu0 0.0
        %1212 = vmatpush1.msra.mxu0 %v718
        %1213 = vmatprep.subr.mxu0 0.0
        %1214 = vmatpush1.msra.mxu0 %v851
        %1215 = vmatprep.subr.mxu0 0.0
        %1216 = vmatpush1.msra.mxu0 0.0
        %1217 = vmatprep.subr.mxu0 0.0
        %1218 = vmatpush1.msra.mxu0 0.0
        %1219 = vmatprep.subr.mxu0 0.0
        %1220 = vmatpush1.msra.mxu0 0.0
        %1221 = vmatprep.subr.mxu0 0.0
        %1222 = vmatpush1.msra.mxu0 0.0
        %1223 = vmatprep.subr.mxu0 0.0
        %1224 = vmatpush1.msra.mxu0 0.0
        %1225 = vmatprep.subr.mxu0 0.0
        %1226 = vmatpush1.msra.mxu0 0.0
        %1227 = vmatprep.subr.mxu0 0.0
        %1228 = vmatpush1.msra.mxu0 0.0
        %1229 = vmatprep.subr.mxu0 0.0
        %1230 = vmatpush1.msra.mxu0 0.0
        %1231 = vmatprep.subr.mxu0 0.0
        %1232 = vmatpush1.msra.mxu0 0.0
        %1233 = vmatprep.subr.mxu0 0.0
        %1234 = vmatpush1.msra.mxu0 0.0
        %1235 = vmatprep.subr.mxu0 0.0
        %1236 = vmatpush1.msra.mxu0 0.0
        %1237 = vmatprep.subr.mxu0 0.0
        %1238 = vmatpush1.msra.mxu0 0.0
        %1239 = vmatprep.subr.mxu0 0.0
        %1240 = vmatpush1.msra.mxu0 0.0
        %1241 = vmatprep.subr.mxu0 0.0
        %1242 = vmatpush1.msra.mxu0 0.0
        %1243 = vmatprep.subr.mxu0 0.0
        %1244 = vmatpush1.msra.mxu0 0.0
        %1245 = vmatprep.subr.mxu0 0.0
        %1246 = vmatpush1.msra.mxu0 0.0
        %1247 = vmatprep.subr.mxu0 0.0
        %1248 = vmatpush1.msra.mxu0 0.0
        %1249 = vmatprep.subr.mxu0 0.0
        %1250 = vmatpush1.msra.mxu0 0.0
        %1251 = vmatprep.subr.mxu0 0.0
        %1252 = vmatpush1.msra.mxu0 0.0
        %1253 = vmatprep.subr.mxu0 0.0
        %1254 = vmatpush1.msra.mxu0 0.0
        %1255 = vmatprep.subr.mxu0 0.0
        %1256 = vmatpush1.msra.mxu0 0.0
        %1257 = vmatprep.subr.mxu0 0.0
        %1258 = vmatpush1.msra.mxu0 0.0
        %1259 = vmatprep.subr.mxu0 0.0
        %1260 = vmatpush1.msra.mxu0 0.0
        %1261 = vmatprep.subr.mxu0 0.0
        %1262 = vmatpush1.msra.mxu0 0.0
        %1263 = vmatprep.subr.mxu0 0.0
        %1264 = vmatpush1.msra.mxu0 0.0
        %1265 = vmatprep.subr.mxu0 0.0
        %1266 = vmatpush1.msra.mxu0 0.0
        %1267 = vmatprep.subr.mxu0 0.0
        %1268 = vmatpush1.msra.mxu0 0.0
        %1269 = vmatprep.subr.mxu0 0.0
        %1270 = vmatpush1.msra.mxu0 0.0
        %1271 = vmatprep.mubr.f32.mxu0 0.0
        %1272 = vmatmul.mubr.f32.gmra.mrb[0].mxu0 %v1112
        %v1273 = vpop.f32.mrb[0].mxu0
        %v1274 = vadd.f32 0.0, %v1273
        %v1275 = vpop.f32.mrb[0].mxu0
        %1276 = vmatprep.mubr.f32.mxu0 0.0
        %1277 = vmatmul.mubr.f32.gmra.mrb[0].mxu0 %v1115
        %v1278 = vpop.f32.mrb[0].mxu0
        %v1279 = vadd.f32 0.0, %v1278
        %v1280 = vpop.f32.mrb[0].mxu0
        %1281 = vmatprep.mubr.f32.mxu0 0.0
        %1282 = vmatmul.mubr.f32.gmra.mrb[0].mxu0 %v1118
        %v1283 = vpop.f32.mrb[0].mxu0
        %v1284 = vadd.f32 0.0, %v1283
        %v1285 = vpop.f32.mrb[0].mxu0
        %1286 = vmatprep.mubr.f32.mxu0 0.0
        %1287 = vmatmul.mubr.f32.gmra.mrb[0].mxu0 %v1121
        %v1288 = vpop.f32.mrb[0].mxu0
        %v1289 = vadd.f32 0.0, %v1288
        %v1290 = vpop.f32.mrb[0].mxu0
        %1291 = vmatprep.mubr.f32.mxu0 0.0
        %1292 = vmatmul.mubr.f32.gmra.mrb[0].mxu0 %v1124
        %v1293 = vpop.f32.mrb[0].mxu0
        %v1294 = vadd.f32 0.0, %v1293
        %v1295 = vpop.f32.mrb[0].mxu0
        %1296 = vmatprep.mubr.f32.mxu0 0.0
        %1297 = vmatmul.mubr.f32.gmra.mrb[0].mxu0 %v1127
        %v1298 = vpop.f32.mrb[0].mxu0
        %v1299 = vadd.f32 0.0, %v1298
        %v1300 = vpop.f32.mrb[0].mxu0
        %1301 = vmatprep.mubr.f32.mxu0 0.0
        %1302 = vmatmul.mubr.f32.gmra.mrb[0].mxu0 %v1130
        %v1303 = vpop.f32.mrb[0].mxu0
        %v1304 = vadd.f32 0.0, %v1303
        %v1305 = vpop.f32.mrb[0].mxu0
        %1306 = vmatprep.mubr.f32.mxu0 0.0
        %1307 = vmatmul.mubr.f32.gmra.mrb[0].mxu0 %v1133
        %v1308 = vpop.f32.mrb[0].mxu0
        %v1309 = vadd.f32 0.0, %v1308
        %v1310 = vpop.f32.mrb[0].mxu0
        %1311 = vmatprep.mubr.f32.mxu0 0.0
        %1312 = vmatmul.mubr.f32.gmra.mrb[0].mxu0 %v1136
        %v1313 = vpop.f32.mrb[0].mxu0
        %v1314 = vadd.f32 0.0, %v1313
        %v1315 = vpop.f32.mrb[0].mxu0
        %1316 = vmatprep.mubr.f32.mxu0 0.0
        %1317 = vmatmul.mubr.f32.gmra.mrb[0].mxu0 %v1139
        %v1318 = vpop.f32.mrb[0].mxu0
        %v1319 = vadd.f32 0.0, %v1318
        %v1320 = vpop.f32.mrb[0].mxu0
        %1321 = vmatprep.mubr.f32.mxu0 0.0
        %1322 = vmatmul.mubr.f32.gmra.mrb[0].mxu0 %v1142
        %v1323 = vpop.f32.mrb[0].mxu0
        %v1324 = vadd.f32 0.0, %v1323
        %v1325 = vpop.f32.mrb[0].mxu0
        %1326 = vmatprep.mubr.f32.mxu0 0.0
        %1327 = vmatmul.mubr.f32.gmra.mrb[0].mxu0 %v1145
        %v1328 = vpop.f32.mrb[0].mxu0
        %v1329 = vadd.f32 0.0, %v1328
        %v1330 = vpop.f32.mrb[0].mxu0
        %1331 = vmatprep.mubr.f32.mxu0 0.0
        %1332 = vmatmul.mubr.f32.gmra.mrb[0].mxu0 %v1148
        %v1333 = vpop.f32.mrb[0].mxu0
        %v1334 = vadd.f32 0.0, %v1333
        %v1335 = vpop.f32.mrb[0].mxu0
        %1336 = vmatprep.mubr.f32.mxu0 0.0
        %1337 = vmatmul.mubr.f32.gmra.mrb[0].mxu0 %v1151
        %v1338 = vpop.f32.mrb[0].mxu0
        %v1339 = vadd.f32 0.0, %v1338
        %v1340 = vpop.f32.mrb[0].mxu0
        %1341 = vmatprep.mubr.f32.mxu0 0.0
        %1342 = vmatmul.mubr.f32.gmra.mrb[0].mxu0 %v1154
        %v1343 = vpop.f32.mrb[0].mxu0
        %v1344 = vadd.f32 0.0, %v1343
        %v1345 = vpop.f32.mrb[0].mxu0
        %1346 = vmatprep.mubr.f32.mxu0 0.0
        %1347 = vmatmul.mubr.f32.gmra.mrb[0].mxu0 %v1157
        %v1348 = vpop.f32.mrb[0].mxu0
        %v1349 = vadd.f32 0.0, %v1348
        %v1350 = vpop.f32.mrb[0].mxu0
        %1351 = vmatprep.mubr.f32.mxu0 0.0
        %1352 = vmatmul.mubr.f32.gmra.mrb[0].mxu0 %v1160
        %v1353 = vpop.f32.mrb[0].mxu0
        %v1354 = vadd.f32 0.0, %v1353
        %v1355 = vpop.f32.mrb[0].mxu0
        %1356 = vmatprep.mubr.f32.mxu0 0.0
        %1357 = vmatmul.mubr.f32.gmra.mrb[0].mxu0 %v1163
        %v1358 = vpop.f32.mrb[0].mxu0
        %v1359 = vadd.f32 0.0, %v1358
        %v1360 = vpop.f32.mrb[0].mxu0
        %1361 = vmatprep.mubr.f32.mxu0 0.0
        %1362 = vmatmul.mubr.f32.gmra.mrb[0].mxu0 %v1166
        %v1363 = vpop.f32.mrb[0].mxu0
        %v1364 = vadd.f32 0.0, %v1363
        %v1365 = vpop.f32.mrb[0].mxu0
        %1366 = vmatprep.mubr.f32.mxu0 0.0
        %1367 = vmatmul.mubr.f32.gmra.mrb[0].mxu0 %v1169
        %v1368 = vpop.f32.mrb[0].mxu0
        %v1369 = vadd.f32 0.0, %v1368
        %v1370 = vpop.f32.mrb[0].mxu0
        %1371 = vmatprep.mubr.f32.mxu0 0.0
        %1372 = vmatmul.mubr.f32.gmra.mrb[0].mxu0 %v1172
        %v1373 = vpop.f32.mrb[0].mxu0
        %v1374 = vadd.f32 0.0, %v1373
        %v1375 = vpop.f32.mrb[0].mxu0
        %1376 = vmatprep.mubr.f32.mxu0 0.0
        %1377 = vmatmul.mubr.f32.gmra.mrb[0].mxu0 %v1175
        %v1378 = vpop.f32.mrb[0].mxu0
        %v1379 = vadd.f32 0.0, %v1378
        %v1380 = vpop.f32.mrb[0].mxu0
        %1381 = vmatprep.mubr.f32.mxu0 0.0
        %1382 = vmatmul.mubr.f32.gmra.mrb[0].mxu0 %v1178
        %v1383 = vpop.f32.mrb[0].mxu0
        %v1384 = vadd.f32 0.0, %v1383
        %v1385 = vpop.f32.mrb[0].mxu0
        %1386 = vmatprep.mubr.f32.mxu0 0.0
        %1387 = vmatmul.mubr.f32.gmra.mrb[0].mxu0 %v1181
        %v1388 = vpop.f32.mrb[0].mxu0
        %v1389 = vadd.f32 0.0, %v1388
        %v1390 = vpop.f32.mrb[0].mxu0
        %1391 = vmatprep.mubr.f32.mxu0 0.0
        %1392 = vmatmul.mubr.f32.gmra.mrb[0].mxu0 %v1184
        %v1393 = vpop.f32.mrb[0].mxu0
        %v1394 = vadd.f32 0.0, %v1393
        %v1395 = vpop.f32.mrb[0].mxu0
        %1396 = vmatprep.mubr.f32.mxu0 0.0
        %1397 = vmatmul.mubr.f32.gmra.mrb[0].mxu0 %v1187
        %v1398 = vpop.f32.mrb[0].mxu0
        %v1399 = vadd.f32 0.0, %v1398
        %v1400 = vpop.f32.mrb[0].mxu0
        %1401 = vmatprep.mubr.f32.mxu0 0.0
        %1402 = vmatmul.mubr.f32.gmra.mrb[0].mxu0 %v1190
        %v1403 = vpop.f32.mrb[0].mxu0
        %v1404 = vadd.f32 0.0, %v1403
        %v1405 = vpop.f32.mrb[0].mxu0
        %1406 = vmatprep.mubr.f32.mxu0 0.0
        %1407 = vmatmul.mubr.f32.gmra.mrb[0].mxu0 %v1193
        %v1408 = vpop.f32.mrb[0].mxu0
        %v1409 = vadd.f32 0.0, %v1408
        %v1410 = vpop.f32.mrb[0].mxu0
        %1411 = vmatprep.mubr.f32.mxu0 0.0
        %1412 = vmatmul.mubr.f32.gmra.mrb[0].mxu0 %v1196
        %v1413 = vpop.f32.mrb[0].mxu0
        %v1414 = vadd.f32 0.0, %v1413
        %v1415 = vpop.f32.mrb[0].mxu0
        %1416 = vmatprep.mubr.f32.mxu0 0.0
        %1417 = vmatmul.mubr.f32.gmra.mrb[0].mxu0 %v1199
        %v1418 = vpop.f32.mrb[0].mxu0
        %v1419 = vadd.f32 0.0, %v1418
        %v1420 = vpop.f32.mrb[0].mxu0
        %1421 = vmatprep.mubr.f32.mxu0 0.0
        %1422 = vmatmul.mubr.f32.gmra.mrb[0].mxu0 %v1202
        %v1423 = vpop.f32.mrb[0].mxu0
        %v1424 = vadd.f32 0.0, %v1423
        %v1425 = vpop.f32.mrb[0].mxu0
        %1426 = vmatprep.mubr.f32.mxu0 0.0
        %1427 = vmatmul.mubr.f32.gmra.mrb[0].mxu0 %v1205
        %v1428 = vpop.f32.mrb[0].mxu0
        %v1429 = vadd.f32 0.0, %v1428
        %v1430 = vpop.f32.mrb[0].mxu0
        %1431 = vdwg.mxu0
        %s1432 = scalar_lea.vmem %s688, 512 [#allocation2]
        %v1433 = vld [vmem:[%s1432] sm:$0xff]
        %v1434 = vld [vmem:[%s1432 + $0x8] sm:$0xff]
        %v1435 = vld [vmem:[%s1432 + $0x10] sm:$0xff]
        %v1436 = vld [vmem:[%s1432 + $0x18] sm:$0xff]
        %v1437 = vld [vmem:[%s1432 + $0x20] sm:$0xff]
        %v1438 = vld [vmem:[%s1432 + $0x28] sm:$0xff]
        %v1439 = vld [vmem:[%s1432 + $0x30] sm:$0xff]
        %v1440 = vld [vmem:[%s1432 + $0x38] sm:$0xff]
        %v1441 = vld [vmem:[%s1432 + $0x40] sm:$0xff]
        %v1442 = vld [vmem:[%s1432 + $0x48] sm:$0xff]
        %v1443 = vld [vmem:[%s1432 + $0x50] sm:$0xff]
        %v1444 = vld [vmem:[%s1432 + $0x58] sm:$0xff]
        %v1445 = vld [vmem:[%s1432 + $0x60] sm:$0xff]
        %v1446 = vld [vmem:[%s1432 + $0x68] sm:$0xff]
        %v1447 = vld [vmem:[%s1432 + $0x70] sm:$0xff]
        %v1448 = vld [vmem:[%s1432 + $0x78] sm:$0xff]
        %v1449 = vld [vmem:[%s1432 + $0x80] sm:$0xff]
        %v1450 = vld [vmem:[%s1432 + $0x88] sm:$0xff]
        %v1451 = vld [vmem:[%s1432 + $0x90] sm:$0xff]
        %v1452 = vld [vmem:[%s1432 + $0x98] sm:$0xff]
        %v1453 = vld [vmem:[%s1432 + $0xa0] sm:$0xff]
        %v1454 = vld [vmem:[%s1432 + $0xa8] sm:$0xff]
        %v1455 = vld [vmem:[%s1432 + $0xb0] sm:$0xff]
        %v1456 = vld [vmem:[%s1432 + $0xb8] sm:$0xff]
        %v1457 = vld [vmem:[%s1432 + $0xc0] sm:$0xff]
        %v1458 = vld [vmem:[%s1432 + $0xc8] sm:$0xff]
        %v1459 = vld [vmem:[%s1432 + $0xd0] sm:$0xff]
        %v1460 = vld [vmem:[%s1432 + $0xd8] sm:$0xff]
        %v1461 = vld [vmem:[%s1432 + $0xe0] sm:$0xff]
        %v1462 = vld [vmem:[%s1432 + $0xe8] sm:$0xff]
        %v1463 = vld [vmem:[%s1432 + $0xf0] sm:$0xff]
        %v1464 = vld [vmem:[%s1432 + $0xf8] sm:$0xff]
        %v1466 = vsel %vm752, %v1433, 0
        %v1469 = vsel %vm752, %v1434, 0
        %v1472 = vsel %vm752, %v1435, 0
        %v1475 = vsel %vm752, %v1436, 0
        %v1478 = vsel %vm752, %v1437, 0
        %v1481 = vsel %vm752, %v1438, 0
        %v1484 = vsel %vm752, %v1439, 0
        %v1487 = vsel %vm752, %v1440, 0
        %v1490 = vsel %vm752, %v1441, 0
        %v1493 = vsel %vm752, %v1442, 0
        %v1496 = vsel %vm752, %v1443, 0
        %v1499 = vsel %vm752, %v1444, 0
        %v1502 = vsel %vm752, %v1445, 0
        %v1505 = vsel %vm752, %v1446, 0
        %v1508 = vsel %vm752, %v1447, 0
        %v1511 = vsel %vm752, %v1448, 0
        %v1514 = vsel %vm752, %v1449, 0
        %v1517 = vsel %vm752, %v1450, 0
        %v1520 = vsel %vm752, %v1451, 0
        %v1523 = vsel %vm752, %v1452, 0
        %v1526 = vsel %vm752, %v1453, 0
        %v1529 = vsel %vm752, %v1454, 0
        %v1532 = vsel %vm752, %v1455, 0
        %v1535 = vsel %vm752, %v1456, 0
        %v1538 = vsel %vm752, %v1457, 0
        %v1541 = vsel %vm752, %v1458, 0
        %v1544 = vsel %vm752, %v1459, 0
        %v1547 = vsel %vm752, %v1460, 0
        %v1550 = vsel %vm752, %v1461, 0
        %v1553 = vsel %vm752, %v1462, 0
        %v1556 = vsel %vm752, %v1463, 0
        %v1559 = vsel %vm752, %v1464, 0
        %1561 = vmatprep.subr.mxu0 0.0
        %1562 = vmatpush1.msra.mxu0 %v716
        %1563 = vmatprep.subr.mxu0 0.0
        %1564 = vmatpush1.msra.mxu0 %v717
        %1565 = vmatprep.subr.mxu0 0.0
        %1566 = vmatpush1.msra.mxu0 %v718
        %1567 = vmatprep.subr.mxu0 0.0
        %1568 = vmatpush1.msra.mxu0 %v851
        %1569 = vmatprep.subr.mxu0 0.0
        %1570 = vmatpush1.msra.mxu0 0.0
        %1571 = vmatprep.subr.mxu0 0.0
        %1572 = vmatpush1.msra.mxu0 0.0
        %1573 = vmatprep.subr.mxu0 0.0
        %1574 = vmatpush1.msra.mxu0 0.0
        %1575 = vmatprep.subr.mxu0 0.0
        %1576 = vmatpush1.msra.mxu0 0.0
        %1577 = vmatprep.subr.mxu0 0.0
        %1578 = vmatpush1.msra.mxu0 0.0
        %1579 = vmatprep.subr.mxu0 0.0
        %1580 = vmatpush1.msra.mxu0 0.0
        %1581 = vmatprep.subr.mxu0 0.0
        %1582 = vmatpush1.msra.mxu0 0.0
        %1583 = vmatprep.subr.mxu0 0.0
        %1584 = vmatpush1.msra.mxu0 0.0
        %1585 = vmatprep.subr.mxu0 0.0
        %1586 = vmatpush1.msra.mxu0 0.0
        %1587 = vmatprep.subr.mxu0 0.0
        %1588 = vmatpush1.msra.mxu0 0.0
        %1589 = vmatprep.subr.mxu0 0.0
        %1590 = vmatpush1.msra.mxu0 0.0
        %1591 = vmatprep.subr.mxu0 0.0
        %1592 = vmatpush1.msra.mxu0 0.0
        %1593 = vmatprep.subr.mxu0 0.0
        %1594 = vmatpush1.msra.mxu0 0.0
        %1595 = vmatprep.subr.mxu0 0.0
        %1596 = vmatpush1.msra.mxu0 0.0
        %1597 = vmatprep.subr.mxu0 0.0
        %1598 = vmatpush1.msra.mxu0 0.0
        %1599 = vmatprep.subr.mxu0 0.0
        %1600 = vmatpush1.msra.mxu0 0.0
        %1601 = vmatprep.subr.mxu0 0.0
        %1602 = vmatpush1.msra.mxu0 0.0
        %1603 = vmatprep.subr.mxu0 0.0
        %1604 = vmatpush1.msra.mxu0 0.0
        %1605 = vmatprep.subr.mxu0 0.0
        %1606 = vmatpush1.msra.mxu0 0.0
        %1607 = vmatprep.subr.mxu0 0.0
        %1608 = vmatpush1.msra.mxu0 0.0
        %1609 = vmatprep.subr.mxu0 0.0
        %1610 = vmatpush1.msra.mxu0 0.0
        %1611 = vmatprep.subr.mxu0 0.0
        %1612 = vmatpush1.msra.mxu0 0.0
        %1613 = vmatprep.subr.mxu0 0.0
        %1614 = vmatpush1.msra.mxu0 0.0
        %1615 = vmatprep.subr.mxu0 0.0
        %1616 = vmatpush1.msra.mxu0 0.0
        %1617 = vmatprep.subr.mxu0 0.0
        %1618 = vmatpush1.msra.mxu0 0.0
        %1619 = vmatprep.subr.mxu0 0.0
        %1620 = vmatpush1.msra.mxu0 0.0
        %1621 = vmatprep.subr.mxu0 0.0
        %1622 = vmatpush1.msra.mxu0 0.0
        %1623 = vmatprep.subr.mxu0 0.0
        %1624 = vmatpush1.msra.mxu0 0.0
        %1625 = vmatprep.mubr.f32.mxu0 0.0
        %1626 = vmatmul.mubr.f32.gmra.mrb[0].mxu0 %v1466
        %v1627 = vpop.f32.mrb[0].mxu0
        %v1628 = vadd.f32 0.0, %v1627
        %v1629 = vpop.f32.mrb[0].mxu0
        %1630 = vmatprep.mubr.f32.mxu0 0.0
        %1631 = vmatmul.mubr.f32.gmra.mrb[0].mxu0 %v1469
        %v1632 = vpop.f32.mrb[0].mxu0
        %v1633 = vadd.f32 0.0, %v1632
        %v1634 = vpop.f32.mrb[0].mxu0
        %1635 = vmatprep.mubr.f32.mxu0 0.0
        %1636 = vmatmul.mubr.f32.gmra.mrb[0].mxu0 %v1472
        %v1637 = vpop.f32.mrb[0].mxu0
        %v1638 = vadd.f32 0.0, %v1637
        %v1639 = vpop.f32.mrb[0].mxu0
        %1640 = vmatprep.mubr.f32.mxu0 0.0
        %1641 = vmatmul.mubr.f32.gmra.mrb[0].mxu0 %v1475
        %v1642 = vpop.f32.mrb[0].mxu0
        %v1643 = vadd.f32 0.0, %v1642
        %v1644 = vpop.f32.mrb[0].mxu0
        %1645 = vmatprep.mubr.f32.mxu0 0.0
        %1646 = vmatmul.mubr.f32.gmra.mrb[0].mxu0 %v1478
        %v1647 = vpop.f32.mrb[0].mxu0
        %v1648 = vadd.f32 0.0, %v1647
        %v1649 = vpop.f32.mrb[0].mxu0
        %1650 = vmatprep.mubr.f32.mxu0 0.0
        %1651 = vmatmul.mubr.f32.gmra.mrb[0].mxu0 %v1481
        %v1652 = vpop.f32.mrb[0].mxu0
        %v1653 = vadd.f32 0.0, %v1652
        %v1654 = vpop.f32.mrb[0].mxu0
        %1655 = vmatprep.mubr.f32.mxu0 0.0
        %1656 = vmatmul.mubr.f32.gmra.mrb[0].mxu0 %v1484
        %v1657 = vpop.f32.mrb[0].mxu0
        %v1658 = vadd.f32 0.0, %v1657
        %v1659 = vpop.f32.mrb[0].mxu0
        %1660 = vmatprep.mubr.f32.mxu0 0.0
        %1661 = vmatmul.mubr.f32.gmra.mrb[0].mxu0 %v1487
        %v1662 = vpop.f32.mrb[0].mxu0
        %v1663 = vadd.f32 0.0, %v1662
        %v1664 = vpop.f32.mrb[0].mxu0
        %1665 = vmatprep.mubr.f32.mxu0 0.0
        %1666 = vmatmul.mubr.f32.gmra.mrb[0].mxu0 %v1490
        %v1667 = vpop.f32.mrb[0].mxu0
        %v1668 = vadd.f32 0.0, %v1667
        %v1669 = vpop.f32.mrb[0].mxu0
        %1670 = vmatprep.mubr.f32.mxu0 0.0
        %1671 = vmatmul.mubr.f32.gmra.mrb[0].mxu0 %v1493
        %v1672 = vpop.f32.mrb[0].mxu0
        %v1673 = vadd.f32 0.0, %v1672
        %v1674 = vpop.f32.mrb[0].mxu0
        %1675 = vmatprep.mubr.f32.mxu0 0.0
        %1676 = vmatmul.mubr.f32.gmra.mrb[0].mxu0 %v1496
        %v1677 = vpop.f32.mrb[0].mxu0
        %v1678 = vadd.f32 0.0, %v1677
        %v1679 = vpop.f32.mrb[0].mxu0
        %1680 = vmatprep.mubr.f32.mxu0 0.0
        %1681 = vmatmul.mubr.f32.gmra.mrb[0].mxu0 %v1499
        %v1682 = vpop.f32.mrb[0].mxu0
        %v1683 = vadd.f32 0.0, %v1682
        %v1684 = vpop.f32.mrb[0].mxu0
        %1685 = vmatprep.mubr.f32.mxu0 0.0
        %1686 = vmatmul.mubr.f32.gmra.mrb[0].mxu0 %v1502
        %v1687 = vpop.f32.mrb[0].mxu0
        %v1688 = vadd.f32 0.0, %v1687
        %v1689 = vpop.f32.mrb[0].mxu0
        %1690 = vmatprep.mubr.f32.mxu0 0.0
        %1691 = vmatmul.mubr.f32.gmra.mrb[0].mxu0 %v1505
        %v1692 = vpop.f32.mrb[0].mxu0
        %v1693 = vadd.f32 0.0, %v1692
        %v1694 = vpop.f32.mrb[0].mxu0
        %1695 = vmatprep.mubr.f32.mxu0 0.0
        %1696 = vmatmul.mubr.f32.gmra.mrb[0].mxu0 %v1508
        %v1697 = vpop.f32.mrb[0].mxu0
        %v1698 = vadd.f32 0.0, %v1697
        %v1699 = vpop.f32.mrb[0].mxu0
        %1700 = vmatprep.mubr.f32.mxu0 0.0
        %1701 = vmatmul.mubr.f32.gmra.mrb[0].mxu0 %v1511
        %v1702 = vpop.f32.mrb[0].mxu0
        %v1703 = vadd.f32 0.0, %v1702
        %v1704 = vpop.f32.mrb[0].mxu0
        %1705 = vmatprep.mubr.f32.mxu0 0.0
        %1706 = vmatmul.mubr.f32.gmra.mrb[0].mxu0 %v1514
        %v1707 = vpop.f32.mrb[0].mxu0
        %v1708 = vadd.f32 0.0, %v1707
        %v1709 = vpop.f32.mrb[0].mxu0
        %1710 = vmatprep.mubr.f32.mxu0 0.0
        %1711 = vmatmul.mubr.f32.gmra.mrb[0].mxu0 %v1517
        %v1712 = vpop.f32.mrb[0].mxu0
        %v1713 = vadd.f32 0.0, %v1712
        %v1714 = vpop.f32.mrb[0].mxu0
        %1715 = vmatprep.mubr.f32.mxu0 0.0
        %1716 = vmatmul.mubr.f32.gmra.mrb[0].mxu0 %v1520
        %v1717 = vpop.f32.mrb[0].mxu0
        %v1718 = vadd.f32 0.0, %v1717
        %v1719 = vpop.f32.mrb[0].mxu0
        %1720 = vmatprep.mubr.f32.mxu0 0.0
        %1721 = vmatmul.mubr.f32.gmra.mrb[0].mxu0 %v1523
        %v1722 = vpop.f32.mrb[0].mxu0
        %v1723 = vadd.f32 0.0, %v1722
        %v1724 = vpop.f32.mrb[0].mxu0
        %1725 = vmatprep.mubr.f32.mxu0 0.0
        %1726 = vmatmul.mubr.f32.gmra.mrb[0].mxu0 %v1526
        %v1727 = vpop.f32.mrb[0].mxu0
        %v1728 = vadd.f32 0.0, %v1727
        %v1729 = vpop.f32.mrb[0].mxu0
        %1730 = vmatprep.mubr.f32.mxu0 0.0
        %1731 = vmatmul.mubr.f32.gmra.mrb[0].mxu0 %v1529
        %v1732 = vpop.f32.mrb[0].mxu0
        %v1733 = vadd.f32 0.0, %v1732
        %v1734 = vpop.f32.mrb[0].mxu0
        %1735 = vmatprep.mubr.f32.mxu0 0.0
        %1736 = vmatmul.mubr.f32.gmra.mrb[0].mxu0 %v1532
        %v1737 = vpop.f32.mrb[0].mxu0
        %v1738 = vadd.f32 0.0, %v1737
        %v1739 = vpop.f32.mrb[0].mxu0
        %1740 = vmatprep.mubr.f32.mxu0 0.0
        %1741 = vmatmul.mubr.f32.gmra.mrb[0].mxu0 %v1535
        %v1742 = vpop.f32.mrb[0].mxu0
        %v1743 = vadd.f32 0.0, %v1742
        %v1744 = vpop.f32.mrb[0].mxu0
        %1745 = vmatprep.mubr.f32.mxu0 0.0
        %1746 = vmatmul.mubr.f32.gmra.mrb[0].mxu0 %v1538
        %v1747 = vpop.f32.mrb[0].mxu0
        %v1748 = vadd.f32 0.0, %v1747
        %v1749 = vpop.f32.mrb[0].mxu0
        %1750 = vmatprep.mubr.f32.mxu0 0.0
        %1751 = vmatmul.mubr.f32.gmra.mrb[0].mxu0 %v1541
        %v1752 = vpop.f32.mrb[0].mxu0
        %v1753 = vadd.f32 0.0, %v1752
        %v1754 = vpop.f32.mrb[0].mxu0
        %1755 = vmatprep.mubr.f32.mxu0 0.0
        %1756 = vmatmul.mubr.f32.gmra.mrb[0].mxu0 %v1544
        %v1757 = vpop.f32.mrb[0].mxu0
        %v1758 = vadd.f32 0.0, %v1757
        %v1759 = vpop.f32.mrb[0].mxu0
        %1760 = vmatprep.mubr.f32.mxu0 0.0
        %1761 = vmatmul.mubr.f32.gmra.mrb[0].mxu0 %v1547
        %v1762 = vpop.f32.mrb[0].mxu0
        %v1763 = vadd.f32 0.0, %v1762
        %v1764 = vpop.f32.mrb[0].mxu0
        %1765 = vmatprep.mubr.f32.mxu0 0.0
        %1766 = vmatmul.mubr.f32.gmra.mrb[0].mxu0 %v1550
        %v1767 = vpop.f32.mrb[0].mxu0
        %v1768 = vadd.f32 0.0, %v1767
        %v1769 = vpop.f32.mrb[0].mxu0
        %1770 = vmatprep.mubr.f32.mxu0 0.0
        %1771 = vmatmul.mubr.f32.gmra.mrb[0].mxu0 %v1553
        %v1772 = vpop.f32.mrb[0].mxu0
        %v1773 = vadd.f32 0.0, %v1772
        %v1774 = vpop.f32.mrb[0].mxu0
        %1775 = vmatprep.mubr.f32.mxu0 0.0
        %1776 = vmatmul.mubr.f32.gmra.mrb[0].mxu0 %v1556
        %v1777 = vpop.f32.mrb[0].mxu0
        %v1778 = vadd.f32 0.0, %v1777
        %v1779 = vpop.f32.mrb[0].mxu0
        %1780 = vmatprep.mubr.f32.mxu0 0.0
        %1781 = vmatmul.mubr.f32.gmra.mrb[0].mxu0 %v1559
        %v1782 = vpop.f32.mrb[0].mxu0
        %v1783 = vadd.f32 0.0, %v1782
        %v1784 = vpop.f32.mrb[0].mxu0
        %1785 = vdwg.mxu0
        %s1786 = scalar_lea.vmem %s688, 768 [#allocation2]
        %v1787 = vld [vmem:[%s1786] sm:$0xff]
        %v1788 = vld [vmem:[%s1786 + $0x8] sm:$0xff]
        %v1789 = vld [vmem:[%s1786 + $0x10] sm:$0xff]
        %v1790 = vld [vmem:[%s1786 + $0x18] sm:$0xff]
        %v1791 = vld [vmem:[%s1786 + $0x20] sm:$0xff]
        %v1792 = vld [vmem:[%s1786 + $0x28] sm:$0xff]
        %v1793 = vld [vmem:[%s1786 + $0x30] sm:$0xff]
        %v1794 = vld [vmem:[%s1786 + $0x38] sm:$0xff]
        %v1795 = vld [vmem:[%s1786 + $0x40] sm:$0xff]
        %v1796 = vld [vmem:[%s1786 + $0x48] sm:$0xff]
        %v1797 = vld [vmem:[%s1786 + $0x50] sm:$0xff]
        %v1798 = vld [vmem:[%s1786 + $0x58] sm:$0xff]
        %v1799 = vld [vmem:[%s1786 + $0x60] sm:$0xff]
        %v1800 = vld [vmem:[%s1786 + $0x68] sm:$0xff]
        %v1801 = vld [vmem:[%s1786 + $0x70] sm:$0xff]
        %v1802 = vld [vmem:[%s1786 + $0x78] sm:$0xff]
        %v1803 = vld [vmem:[%s1786 + $0x80] sm:$0xff]
        %v1804 = vld [vmem:[%s1786 + $0x88] sm:$0xff]
        %v1805 = vld [vmem:[%s1786 + $0x90] sm:$0xff]
        %v1806 = vld [vmem:[%s1786 + $0x98] sm:$0xff]
        %v1807 = vld [vmem:[%s1786 + $0xa0] sm:$0xff]
        %v1808 = vld [vmem:[%s1786 + $0xa8] sm:$0xff]
        %v1809 = vld [vmem:[%s1786 + $0xb0] sm:$0xff]
        %v1810 = vld [vmem:[%s1786 + $0xb8] sm:$0xff]
        %v1811 = vld [vmem:[%s1786 + $0xc0] sm:$0xff]
        %v1812 = vld [vmem:[%s1786 + $0xc8] sm:$0xff]
        %v1813 = vld [vmem:[%s1786 + $0xd0] sm:$0xff]
        %v1814 = vld [vmem:[%s1786 + $0xd8] sm:$0xff]
        %v1815 = vld [vmem:[%s1786 + $0xe0] sm:$0xff]
        %v1816 = vld [vmem:[%s1786 + $0xe8] sm:$0xff]
        %v1817 = vld [vmem:[%s1786 + $0xf0] sm:$0xff]
        %v1818 = vld [vmem:[%s1786 + $0xf8] sm:$0xff]
        %v1820 = vsel %vm752, %v1787, 0
        %v1823 = vsel %vm752, %v1788, 0
        %v1826 = vsel %vm752, %v1789, 0
        %v1829 = vsel %vm752, %v1790, 0
        %v1832 = vsel %vm752, %v1791, 0
        %v1835 = vsel %vm752, %v1792, 0
        %v1838 = vsel %vm752, %v1793, 0
        %v1841 = vsel %vm752, %v1794, 0
        %v1844 = vsel %vm752, %v1795, 0
        %v1847 = vsel %vm752, %v1796, 0
        %v1850 = vsel %vm752, %v1797, 0
        %v1853 = vsel %vm752, %v1798, 0
        %v1856 = vsel %vm752, %v1799, 0
        %v1859 = vsel %vm752, %v1800, 0
        %v1862 = vsel %vm752, %v1801, 0
        %v1865 = vsel %vm752, %v1802, 0
        %v1868 = vsel %vm752, %v1803, 0
        %v1871 = vsel %vm752, %v1804, 0
        %v1874 = vsel %vm752, %v1805, 0
        %v1877 = vsel %vm752, %v1806, 0
        %v1880 = vsel %vm752, %v1807, 0
        %v1883 = vsel %vm752, %v1808, 0
        %v1886 = vsel %vm752, %v1809, 0
        %v1889 = vsel %vm752, %v1810, 0
        %v1892 = vsel %vm752, %v1811, 0
        %v1895 = vsel %vm752, %v1812, 0
        %v1898 = vsel %vm752, %v1813, 0
        %v1901 = vsel %vm752, %v1814, 0
        %v1904 = vsel %vm752, %v1815, 0
        %v1907 = vsel %vm752, %v1816, 0
        %v1910 = vsel %vm752, %v1817, 0
        %v1913 = vsel %vm752, %v1818, 0
        %1915 = vmatprep.subr.mxu0 0.0
        %1916 = vmatpush1.msra.mxu0 %v716
        %1917 = vmatprep.subr.mxu0 0.0
        %1918 = vmatpush1.msra.mxu0 %v717
        %1919 = vmatprep.subr.mxu0 0.0
        %1920 = vmatpush1.msra.mxu0 %v718
        %1921 = vmatprep.subr.mxu0 0.0
        %1922 = vmatpush1.msra.mxu0 %v851
        %1923 = vmatprep.subr.mxu0 0.0
        %1924 = vmatpush1.msra.mxu0 0.0
        %1925 = vmatprep.subr.mxu0 0.0
        %1926 = vmatpush1.msra.mxu0 0.0
        %1927 = vmatprep.subr.mxu0 0.0
        %1928 = vmatpush1.msra.mxu0 0.0
        %1929 = vmatprep.subr.mxu0 0.0
        %1930 = vmatpush1.msra.mxu0 0.0
        %1931 = vmatprep.subr.mxu0 0.0
        %1932 = vmatpush1.msra.mxu0 0.0
        %1933 = vmatprep.subr.mxu0 0.0
        %1934 = vmatpush1.msra.mxu0 0.0
        %1935 = vmatprep.subr.mxu0 0.0
        %1936 = vmatpush1.msra.mxu0 0.0
        %1937 = vmatprep.subr.mxu0 0.0
        %1938 = vmatpush1.msra.mxu0 0.0
        %1939 = vmatprep.subr.mxu0 0.0
        %1940 = vmatpush1.msra.mxu0 0.0
        %1941 = vmatprep.subr.mxu0 0.0
        %1942 = vmatpush1.msra.mxu0 0.0
        %1943 = vmatprep.subr.mxu0 0.0
        %1944 = vmatpush1.msra.mxu0 0.0
        %1945 = vmatprep.subr.mxu0 0.0
        %1946 = vmatpush1.msra.mxu0 0.0
        %1947 = vmatprep.subr.mxu0 0.0
        %1948 = vmatpush1.msra.mxu0 0.0
        %1949 = vmatprep.subr.mxu0 0.0
        %1950 = vmatpush1.msra.mxu0 0.0
        %1951 = vmatprep.subr.mxu0 0.0
        %1952 = vmatpush1.msra.mxu0 0.0
        %1953 = vmatprep.subr.mxu0 0.0
        %1954 = vmatpush1.msra.mxu0 0.0
        %1955 = vmatprep.subr.mxu0 0.0
        %1956 = vmatpush1.msra.mxu0 0.0
        %1957 = vmatprep.subr.mxu0 0.0
        %1958 = vmatpush1.msra.mxu0 0.0
        %1959 = vmatprep.subr.mxu0 0.0
        %1960 = vmatpush1.msra.mxu0 0.0
        %1961 = vmatprep.subr.mxu0 0.0
        %1962 = vmatpush1.msra.mxu0 0.0
        %1963 = vmatprep.subr.mxu0 0.0
        %1964 = vmatpush1.msra.mxu0 0.0
        %1965 = vmatprep.subr.mxu0 0.0
        %1966 = vmatpush1.msra.mxu0 0.0
        %1967 = vmatprep.subr.mxu0 0.0
        %1968 = vmatpush1.msra.mxu0 0.0
        %1969 = vmatprep.subr.mxu0 0.0
        %1970 = vmatpush1.msra.mxu0 0.0
        %1971 = vmatprep.subr.mxu0 0.0
        %1972 = vmatpush1.msra.mxu0 0.0
        %1973 = vmatprep.subr.mxu0 0.0
        %1974 = vmatpush1.msra.mxu0 0.0
        %1975 = vmatprep.subr.mxu0 0.0
        %1976 = vmatpush1.msra.mxu0 0.0
        %1977 = vmatprep.subr.mxu0 0.0
        %1978 = vmatpush1.msra.mxu0 0.0
        %1979 = vmatprep.mubr.f32.mxu0 0.0
        %1980 = vmatmul.mubr.f32.gmra.mrb[0].mxu0 %v1820
        %v1981 = vpop.f32.mrb[0].mxu0
        %v1982 = vadd.f32 0.0, %v1981
        %v1983 = vpop.f32.mrb[0].mxu0
        %1984 = vmatprep.mubr.f32.mxu0 0.0
        %1985 = vmatmul.mubr.f32.gmra.mrb[0].mxu0 %v1823
        %v1986 = vpop.f32.mrb[0].mxu0
        %v1987 = vadd.f32 0.0, %v1986
        %v1988 = vpop.f32.mrb[0].mxu0
        %1989 = vmatprep.mubr.f32.mxu0 0.0
        %1990 = vmatmul.mubr.f32.gmra.mrb[0].mxu0 %v1826
        %v1991 = vpop.f32.mrb[0].mxu0
        %v1992 = vadd.f32 0.0, %v1991
        %v1993 = vpop.f32.mrb[0].mxu0
        %1994 = vmatprep.mubr.f32.mxu0 0.0
        %1995 = vmatmul.mubr.f32.gmra.mrb[0].mxu0 %v1829
        %v1996 = vpop.f32.mrb[0].mxu0
        %v1997 = vadd.f32 0.0, %v1996
        %v1998 = vpop.f32.mrb[0].mxu0
        %1999 = vmatprep.mubr.f32.mxu0 0.0
        %2000 = vmatmul.mubr.f32.gmra.mrb[0].mxu0 %v1832
        %v2001 = vpop.f32.mrb[0].mxu0
        %v2002 = vadd.f32 0.0, %v2001
        %v2003 = vpop.f32.mrb[0].mxu0
        %2004 = vmatprep.mubr.f32.mxu0 0.0
        %2005 = vmatmul.mubr.f32.gmra.mrb[0].mxu0 %v1835
        %v2006 = vpop.f32.mrb[0].mxu0
        %v2007 = vadd.f32 0.0, %v2006
        %v2008 = vpop.f32.mrb[0].mxu0
        %2009 = vmatprep.mubr.f32.mxu0 0.0
        %2010 = vmatmul.mubr.f32.gmra.mrb[0].mxu0 %v1838
        %v2011 = vpop.f32.mrb[0].mxu0
        %v2012 = vadd.f32 0.0, %v2011
        %v2013 = vpop.f32.mrb[0].mxu0
        %2014 = vmatprep.mubr.f32.mxu0 0.0
        %2015 = vmatmul.mubr.f32.gmra.mrb[0].mxu0 %v1841
        %v2016 = vpop.f32.mrb[0].mxu0
        %v2017 = vadd.f32 0.0, %v2016
        %v2018 = vpop.f32.mrb[0].mxu0
        %2019 = vmatprep.mubr.f32.mxu0 0.0
        %2020 = vmatmul.mubr.f32.gmra.mrb[0].mxu0 %v1844
        %v2021 = vpop.f32.mrb[0].mxu0
        %v2022 = vadd.f32 0.0, %v2021
        %v2023 = vpop.f32.mrb[0].mxu0
        %2024 = vmatprep.mubr.f32.mxu0 0.0
        %2025 = vmatmul.mubr.f32.gmra.mrb[0].mxu0 %v1847
        %v2026 = vpop.f32.mrb[0].mxu0
        %v2027 = vadd.f32 0.0, %v2026
        %v2028 = vpop.f32.mrb[0].mxu0
        %2029 = vmatprep.mubr.f32.mxu0 0.0
        %2030 = vmatmul.mubr.f32.gmra.mrb[0].mxu0 %v1850
        %v2031 = vpop.f32.mrb[0].mxu0
        %v2032 = vadd.f32 0.0, %v2031
        %v2033 = vpop.f32.mrb[0].mxu0
        %2034 = vmatprep.mubr.f32.mxu0 0.0
        %2035 = vmatmul.mubr.f32.gmra.mrb[0].mxu0 %v1853
        %v2036 = vpop.f32.mrb[0].mxu0
        %v2037 = vadd.f32 0.0, %v2036
        %v2038 = vpop.f32.mrb[0].mxu0
        %2039 = vmatprep.mubr.f32.mxu0 0.0
        %2040 = vmatmul.mubr.f32.gmra.mrb[0].mxu0 %v1856
        %v2041 = vpop.f32.mrb[0].mxu0
        %v2042 = vadd.f32 0.0, %v2041
        %v2043 = vpop.f32.mrb[0].mxu0
        %2044 = vmatprep.mubr.f32.mxu0 0.0
        %2045 = vmatmul.mubr.f32.gmra.mrb[0].mxu0 %v1859
        %v2046 = vpop.f32.mrb[0].mxu0
        %v2047 = vadd.f32 0.0, %v2046
        %v2048 = vpop.f32.mrb[0].mxu0
        %2049 = vmatprep.mubr.f32.mxu0 0.0
        %2050 = vmatmul.mubr.f32.gmra.mrb[0].mxu0 %v1862
        %v2051 = vpop.f32.mrb[0].mxu0
        %v2052 = vadd.f32 0.0, %v2051
        %v2053 = vpop.f32.mrb[0].mxu0
        %2054 = vmatprep.mubr.f32.mxu0 0.0
        %2055 = vmatmul.mubr.f32.gmra.mrb[0].mxu0 %v1865
        %v2056 = vpop.f32.mrb[0].mxu0
        %v2057 = vadd.f32 0.0, %v2056
        %v2058 = vpop.f32.mrb[0].mxu0
        %2059 = vmatprep.mubr.f32.mxu0 0.0
        %2060 = vmatmul.mubr.f32.gmra.mrb[0].mxu0 %v1868
        %v2061 = vpop.f32.mrb[0].mxu0
        %v2062 = vadd.f32 0.0, %v2061
        %v2063 = vpop.f32.mrb[0].mxu0
        %2064 = vmatprep.mubr.f32.mxu0 0.0
        %2065 = vmatmul.mubr.f32.gmra.mrb[0].mxu0 %v1871
        %v2066 = vpop.f32.mrb[0].mxu0
        %v2067 = vadd.f32 0.0, %v2066
        %v2068 = vpop.f32.mrb[0].mxu0
        %2069 = vmatprep.mubr.f32.mxu0 0.0
        %2070 = vmatmul.mubr.f32.gmra.mrb[0].mxu0 %v1874
        %v2071 = vpop.f32.mrb[0].mxu0
        %v2072 = vadd.f32 0.0, %v2071
        %v2073 = vpop.f32.mrb[0].mxu0
        %2074 = vmatprep.mubr.f32.mxu0 0.0
        %2075 = vmatmul.mubr.f32.gmra.mrb[0].mxu0 %v1877
        %v2076 = vpop.f32.mrb[0].mxu0
        %v2077 = vadd.f32 0.0, %v2076
        %v2078 = vpop.f32.mrb[0].mxu0
        %2079 = vmatprep.mubr.f32.mxu0 0.0
        %2080 = vmatmul.mubr.f32.gmra.mrb[0].mxu0 %v1880
        %v2081 = vpop.f32.mrb[0].mxu0
        %v2082 = vadd.f32 0.0, %v2081
        %v2083 = vpop.f32.mrb[0].mxu0
        %2084 = vmatprep.mubr.f32.mxu0 0.0
        %2085 = vmatmul.mubr.f32.gmra.mrb[0].mxu0 %v1883
        %v2086 = vpop.f32.mrb[0].mxu0
        %v2087 = vadd.f32 0.0, %v2086
        %v2088 = vpop.f32.mrb[0].mxu0
        %2089 = vmatprep.mubr.f32.mxu0 0.0
        %2090 = vmatmul.mubr.f32.gmra.mrb[0].mxu0 %v1886
        %v2091 = vpop.f32.mrb[0].mxu0
        %v2092 = vadd.f32 0.0, %v2091
        %v2093 = vpop.f32.mrb[0].mxu0
        %2094 = vmatprep.mubr.f32.mxu0 0.0
        %2095 = vmatmul.mubr.f32.gmra.mrb[0].mxu0 %v1889
        %v2096 = vpop.f32.mrb[0].mxu0
        %v2097 = vadd.f32 0.0, %v2096
        %v2098 = vpop.f32.mrb[0].mxu0
        %2099 = vmatprep.mubr.f32.mxu0 0.0
        %2100 = vmatmul.mubr.f32.gmra.mrb[0].mxu0 %v1892
        %v2101 = vpop.f32.mrb[0].mxu0
        %v2102 = vadd.f32 0.0, %v2101
        %v2103 = vpop.f32.mrb[0].mxu0
        %2104 = vmatprep.mubr.f32.mxu0 0.0
        %2105 = vmatmul.mubr.f32.gmra.mrb[0].mxu0 %v1895
        %v2106 = vpop.f32.mrb[0].mxu0
        %v2107 = vadd.f32 0.0, %v2106
        %v2108 = vpop.f32.mrb[0].mxu0
        %2109 = vmatprep.mubr.f32.mxu0 0.0
        %2110 = vmatmul.mubr.f32.gmra.mrb[0].mxu0 %v1898
        %v2111 = vpop.f32.mrb[0].mxu0
        %v2112 = vadd.f32 0.0, %v2111
        %v2113 = vpop.f32.mrb[0].mxu0
        %2114 = vmatprep.mubr.f32.mxu0 0.0
        %2115 = vmatmul.mubr.f32.gmra.mrb[0].mxu0 %v1901
        %v2116 = vpop.f32.mrb[0].mxu0
        %v2117 = vadd.f32 0.0, %v2116
        %v2118 = vpop.f32.mrb[0].mxu0
        %2119 = vmatprep.mubr.f32.mxu0 0.0
        %2120 = vmatmul.mubr.f32.gmra.mrb[0].mxu0 %v1904
        %v2121 = vpop.f32.mrb[0].mxu0
        %v2122 = vadd.f32 0.0, %v2121
        %v2123 = vpop.f32.mrb[0].mxu0
        %2124 = vmatprep.mubr.f32.mxu0 0.0
        %2125 = vmatmul.mubr.f32.gmra.mrb[0].mxu0 %v1907
        %v2126 = vpop.f32.mrb[0].mxu0
        %v2127 = vadd.f32 0.0, %v2126
        %v2128 = vpop.f32.mrb[0].mxu0
        %2129 = vmatprep.mubr.f32.mxu0 0.0
        %2130 = vmatmul.mubr.f32.gmra.mrb[0].mxu0 %v1910
        %v2131 = vpop.f32.mrb[0].mxu0
        %v2132 = vadd.f32 0.0, %v2131
        %v2133 = vpop.f32.mrb[0].mxu0
        %2134 = vmatprep.mubr.f32.mxu0 0.0
        %2135 = vmatmul.mubr.f32.gmra.mrb[0].mxu0 %v1913
        %v2136 = vpop.f32.mrb[0].mxu0
        %v2137 = vadd.f32 0.0, %v2136
        %v2138 = vpop.f32.mrb[0].mxu0
        %2139 = vdwg.mxu0
        %v2140 = vmax.f32 %v920, %v1274
        %v2141 = vmax.f32 %v925, %v1279
        %v2142 = vmax.f32 %v930, %v1284
        %v2143 = vmax.f32 %v935, %v1289
        %v2144 = vmax.f32 %v940, %v1294
        %v2145 = vmax.f32 %v945, %v1299
        %v2146 = vmax.f32 %v950, %v1304
        %v2147 = vmax.f32 %v955, %v1309
        %v2148 = vmax.f32 %v960, %v1314
        %v2149 = vmax.f32 %v965, %v1319
        %v2150 = vmax.f32 %v970, %v1324
        %v2151 = vmax.f32 %v975, %v1329
        %v2152 = vmax.f32 %v980, %v1334
        %v2153 = vmax.f32 %v985, %v1339
        %v2154 = vmax.f32 %v990, %v1344
        %v2155 = vmax.f32 %v995, %v1349
        %v2156 = vmax.f32 %v1000, %v1354
        %v2157 = vmax.f32 %v1005, %v1359
        %v2158 = vmax.f32 %v1010, %v1364
        %v2159 = vmax.f32 %v1015, %v1369
        %v2160 = vmax.f32 %v1020, %v1374
        %v2161 = vmax.f32 %v1025, %v1379
        %v2162 = vmax.f32 %v1030, %v1384
        %v2163 = vmax.f32 %v1035, %v1389
        %v2164 = vmax.f32 %v1040, %v1394
        %v2165 = vmax.f32 %v1045, %v1399
        %v2166 = vmax.f32 %v1050, %v1404
        %v2167 = vmax.f32 %v1055, %v1409
        %v2168 = vmax.f32 %v1060, %v1414
        %v2169 = vmax.f32 %v1065, %v1419
        %v2170 = vmax.f32 %v1070, %v1424
        %v2171 = vmax.f32 %v1075, %v1429
        %v2172 = vmax.f32 %v1628, %v1982
        %v2173 = vmax.f32 %v1633, %v1987
        %v2174 = vmax.f32 %v1638, %v1992
        %v2175 = vmax.f32 %v1643, %v1997
        %v2176 = vmax.f32 %v1648, %v2002
        %v2177 = vmax.f32 %v1653, %v2007
        %v2178 = vmax.f32 %v1658, %v2012
        %v2179 = vmax.f32 %v1663, %v2017
        %v2180 = vmax.f32 %v1668, %v2022
        %v2181 = vmax.f32 %v1673, %v2027
        %v2182 = vmax.f32 %v1678, %v2032
        %v2183 = vmax.f32 %v1683, %v2037
        %v2184 = vmax.f32 %v1688, %v2042
        %v2185 = vmax.f32 %v1693, %v2047
        %v2186 = vmax.f32 %v1698, %v2052
        %v2187 = vmax.f32 %v1703, %v2057
        %v2188 = vmax.f32 %v1708, %v2062
        %v2189 = vmax.f32 %v1713, %v2067
        %v2190 = vmax.f32 %v1718, %v2072
        %v2191 = vmax.f32 %v1723, %v2077
        %v2192 = vmax.f32 %v1728, %v2082
        %v2193 = vmax.f32 %v1733, %v2087
        %v2194 = vmax.f32 %v1738, %v2092
        %v2195 = vmax.f32 %v1743, %v2097
        %v2196 = vmax.f32 %v1748, %v2102
        %v2197 = vmax.f32 %v1753, %v2107
        %v2198 = vmax.f32 %v1758, %v2112
        %v2199 = vmax.f32 %v1763, %v2117
        %v2200 = vmax.f32 %v1768, %v2122
        %v2201 = vmax.f32 %v1773, %v2127
        %v2202 = vmax.f32 %v1778, %v2132
        %v2203 = vmax.f32 %v1783, %v2137
        %v2204 = vmax.f32 %v2140, %v2172
        %v2205 = vmax.f32 %v2141, %v2173
        %v2206 = vmax.f32 %v2142, %v2174
        %v2207 = vmax.f32 %v2143, %v2175
        %v2208 = vmax.f32 %v2144, %v2176
        %v2209 = vmax.f32 %v2145, %v2177
        %v2210 = vmax.f32 %v2146, %v2178
        %v2211 = vmax.f32 %v2147, %v2179
        %v2212 = vmax.f32 %v2148, %v2180
        %v2213 = vmax.f32 %v2149, %v2181
        %v2214 = vmax.f32 %v2150, %v2182
        %v2215 = vmax.f32 %v2151, %v2183
        %v2216 = vmax.f32 %v2152, %v2184
        %v2217 = vmax.f32 %v2153, %v2185
        %v2218 = vmax.f32 %v2154, %v2186
        %v2219 = vmax.f32 %v2155, %v2187
        %v2220 = vmax.f32 %v2156, %v2188
        %v2221 = vmax.f32 %v2157, %v2189
        %v2222 = vmax.f32 %v2158, %v2190
        %v2223 = vmax.f32 %v2159, %v2191
        %v2224 = vmax.f32 %v2160, %v2192
        %v2225 = vmax.f32 %v2161, %v2193
        %v2226 = vmax.f32 %v2162, %v2194
        %v2227 = vmax.f32 %v2163, %v2195
        %v2228 = vmax.f32 %v2164, %v2196
        %v2229 = vmax.f32 %v2165, %v2197
        %v2230 = vmax.f32 %v2166, %v2198
        %v2231 = vmax.f32 %v2167, %v2199
        %v2232 = vmax.f32 %v2168, %v2200
        %v2233 = vmax.f32 %v2169, %v2201
        %v2234 = vmax.f32 %v2170, %v2202
        %v2235 = vmax.f32 %v2171, %v2203
        %v2236 = vld [vmem:[%s2] sm:$0x1]
        %v2238 = vlaneseq
        %v2239 = vshrl.u32 %v2238, 7
        %v2240 = vsub.s32 0, %v2239
        %v2241 = vrot.slane %v2236, %v2240
        %v2243 = vadd.f32 %v2204, %v2241
        %v2244 = vadd.f32 %v2205, %v2241
        %v2245 = vadd.f32 %v2206, %v2241
        %v2246 = vadd.f32 %v2207, %v2241
        %v2247 = vadd.f32 %v2208, %v2241
        %v2248 = vadd.f32 %v2209, %v2241
        %v2249 = vadd.f32 %v2210, %v2241
        %v2250 = vadd.f32 %v2211, %v2241
        %v2251 = vadd.f32 %v2212, %v2241
        %v2252 = vadd.f32 %v2213, %v2241
        %v2253 = vadd.f32 %v2214, %v2241
        %v2254 = vadd.f32 %v2215, %v2241
        %v2255 = vadd.f32 %v2216, %v2241
        %v2256 = vadd.f32 %v2217, %v2241
        %v2257 = vadd.f32 %v2218, %v2241
        %v2258 = vadd.f32 %v2219, %v2241
        %v2259 = vadd.f32 %v2220, %v2241
        %v2260 = vadd.f32 %v2221, %v2241
        %v2261 = vadd.f32 %v2222, %v2241
        %v2262 = vadd.f32 %v2223, %v2241
        %v2263 = vadd.f32 %v2224, %v2241
        %v2264 = vadd.f32 %v2225, %v2241
        %v2265 = vadd.f32 %v2226, %v2241
        %v2266 = vadd.f32 %v2227, %v2241
        %v2267 = vadd.f32 %v2228, %v2241
        %v2268 = vadd.f32 %v2229, %v2241
        %v2269 = vadd.f32 %v2230, %v2241
        %v2270 = vadd.f32 %v2231, %v2241
        %v2271 = vadd.f32 %v2232, %v2241
        %v2272 = vadd.f32 %v2233, %v2241
        %v2273 = vadd.f32 %v2234, %v2241
        %v2274 = vadd.f32 %v2235, %v2241
        %v2275 = vmul.f32 %v2243, 0.5
        %v2276 = vmul.f32 %v2244, 0.5
        %v2277 = vmul.f32 %v2245, 0.5
        %v2278 = vmul.f32 %v2246, 0.5
        %v2279 = vmul.f32 %v2247, 0.5
        %v2280 = vmul.f32 %v2248, 0.5
        %v2281 = vmul.f32 %v2249, 0.5
        %v2282 = vmul.f32 %v2250, 0.5
        %v2283 = vmul.f32 %v2251, 0.5
        %v2284 = vmul.f32 %v2252, 0.5
        %v2285 = vmul.f32 %v2253, 0.5
        %v2286 = vmul.f32 %v2254, 0.5
        %v2287 = vmul.f32 %v2255, 0.5
        %v2288 = vmul.f32 %v2256, 0.5
        %v2289 = vmul.f32 %v2257, 0.5
        %v2290 = vmul.f32 %v2258, 0.5
        %v2291 = vmul.f32 %v2259, 0.5
        %v2292 = vmul.f32 %v2260, 0.5
        %v2293 = vmul.f32 %v2261, 0.5
        %v2294 = vmul.f32 %v2262, 0.5
        %v2295 = vmul.f32 %v2263, 0.5
        %v2296 = vmul.f32 %v2264, 0.5
        %v2297 = vmul.f32 %v2265, 0.5
        %v2298 = vmul.f32 %v2266, 0.5
        %v2299 = vmul.f32 %v2267, 0.5
        %v2300 = vmul.f32 %v2268, 0.5
        %v2301 = vmul.f32 %v2269, 0.5
        %v2302 = vmul.f32 %v2270, 0.5
        %v2303 = vmul.f32 %v2271, 0.5
        %v2304 = vmul.f32 %v2272, 0.5
        %v2305 = vmul.f32 %v2273, 0.5
        %v2306 = vmul.f32 %v2274, 0.5
        %v2307 = vtanh.pop %v2275
        %v2308 = vtanh.pop %v2276
        %v2309 = vtanh.pop %v2277
        %v2310 = vtanh.pop %v2278
        %v2311 = vtanh.pop %v2279
        %v2312 = vtanh.pop %v2280
        %v2313 = vtanh.pop %v2281
        %v2314 = vtanh.pop %v2282
        %v2315 = vtanh.pop %v2283
        %v2316 = vtanh.pop %v2284
        %v2317 = vtanh.pop %v2285
        %v2318 = vtanh.pop %v2286
        %v2319 = vtanh.pop %v2287
        %v2320 = vtanh.pop %v2288
        %v2321 = vtanh.pop %v2289
        %v2322 = vtanh.pop %v2290
        %v2323 = vtanh.pop %v2291
        %v2324 = vtanh.pop %v2292
        %v2325 = vtanh.pop %v2293
        %v2326 = vtanh.pop %v2294
        %v2327 = vtanh.pop %v2295
        %v2328 = vtanh.pop %v2296
        %v2329 = vtanh.pop %v2297
        %v2330 = vtanh.pop %v2298
        %v2331 = vtanh.pop %v2299
        %v2332 = vtanh.pop %v2300
        %v2333 = vtanh.pop %v2301
        %v2334 = vtanh.pop %v2302
        %v2335 = vtanh.pop %v2303
        %v2336 = vtanh.pop %v2304
        %v2337 = vtanh.pop %v2305
        %v2338 = vtanh.pop %v2306
        %v2339 = vadd.f32 %v2307, 1.0
        %v2340 = vadd.f32 %v2308, 1.0
        %v2341 = vadd.f32 %v2309, 1.0
        %v2342 = vadd.f32 %v2310, 1.0
        %v2343 = vadd.f32 %v2311, 1.0
        %v2344 = vadd.f32 %v2312, 1.0
        %v2345 = vadd.f32 %v2313, 1.0
        %v2346 = vadd.f32 %v2314, 1.0
        %v2347 = vadd.f32 %v2315, 1.0
        %v2348 = vadd.f32 %v2316, 1.0
        %v2349 = vadd.f32 %v2317, 1.0
        %v2350 = vadd.f32 %v2318, 1.0
        %v2351 = vadd.f32 %v2319, 1.0
        %v2352 = vadd.f32 %v2320, 1.0
        %v2353 = vadd.f32 %v2321, 1.0
        %v2354 = vadd.f32 %v2322, 1.0
        %v2355 = vadd.f32 %v2323, 1.0
        %v2356 = vadd.f32 %v2324, 1.0
        %v2357 = vadd.f32 %v2325, 1.0
        %v2358 = vadd.f32 %v2326, 1.0
        %v2359 = vadd.f32 %v2327, 1.0
        %v2360 = vadd.f32 %v2328, 1.0
        %v2361 = vadd.f32 %v2329, 1.0
        %v2362 = vadd.f32 %v2330, 1.0
        %v2363 = vadd.f32 %v2331, 1.0
        %v2364 = vadd.f32 %v2332, 1.0
        %v2365 = vadd.f32 %v2333, 1.0
        %v2366 = vadd.f32 %v2334, 1.0
        %v2367 = vadd.f32 %v2335, 1.0
        %v2368 = vadd.f32 %v2336, 1.0
        %v2369 = vadd.f32 %v2337, 1.0
        %v2370 = vadd.f32 %v2338, 1.0
        %v2371 = vmul.f32 %v2339, 0.5
        %v2372 = vmul.f32 %v2340, 0.5
        %v2373 = vmul.f32 %v2341, 0.5
        %v2374 = vmul.f32 %v2342, 0.5
        %v2375 = vmul.f32 %v2343, 0.5
        %v2376 = vmul.f32 %v2344, 0.5
        %v2377 = vmul.f32 %v2345, 0.5
        %v2378 = vmul.f32 %v2346, 0.5
        %v2379 = vmul.f32 %v2347, 0.5
        %v2380 = vmul.f32 %v2348, 0.5
        %v2381 = vmul.f32 %v2349, 0.5
        %v2382 = vmul.f32 %v2350, 0.5
        %v2383 = vmul.f32 %v2351, 0.5
        %v2384 = vmul.f32 %v2352, 0.5
        %v2385 = vmul.f32 %v2353, 0.5
        %v2386 = vmul.f32 %v2354, 0.5
        %v2387 = vmul.f32 %v2355, 0.5
        %v2388 = vmul.f32 %v2356, 0.5
        %v2389 = vmul.f32 %v2357, 0.5
        %v2390 = vmul.f32 %v2358, 0.5
        %v2391 = vmul.f32 %v2359, 0.5
        %v2392 = vmul.f32 %v2360, 0.5
        %v2393 = vmul.f32 %v2361, 0.5
        %v2394 = vmul.f32 %v2362, 0.5
        %v2395 = vmul.f32 %v2363, 0.5
        %v2396 = vmul.f32 %v2364, 0.5
        %v2397 = vmul.f32 %v2365, 0.5
        %v2398 = vmul.f32 %v2366, 0.5
        %v2399 = vmul.f32 %v2367, 0.5
        %v2400 = vmul.f32 %v2368, 0.5
        %v2401 = vmul.f32 %v2369, 0.5
        %v2402 = vmul.f32 %v2370, 0.5
        %2403 = vst [vmem:[%s714] sm:$0xff] %v2371
        %2404 = vst [vmem:[%s714 + $0x8] sm:$0xff] %v2372
        %2405 = vst [vmem:[%s714 + $0x10] sm:$0xff] %v2373
        %2406 = vst [vmem:[%s714 + $0x18] sm:$0xff] %v2374
        %2407 = vst [vmem:[%s714 + $0x20] sm:$0xff] %v2375
        %2408 = vst [vmem:[%s714 + $0x28] sm:$0xff] %v2376
        %2409 = vst [vmem:[%s714 + $0x30] sm:$0xff] %v2377
        %2410 = vst [vmem:[%s714 + $0x38] sm:$0xff] %v2378
        %2411 = vst [vmem:[%s714 + $0x40] sm:$0xff] %v2379
        %2412 = vst [vmem:[%s714 + $0x48] sm:$0xff] %v2380
        %2413 = vst [vmem:[%s714 + $0x50] sm:$0xff] %v2381
        %2414 = vst [vmem:[%s714 + $0x58] sm:$0xff] %v2382
        %2415 = vst [vmem:[%s714 + $0x60] sm:$0xff] %v2383
        %2416 = vst [vmem:[%s714 + $0x68] sm:$0xff] %v2384
        %2417 = vst [vmem:[%s714 + $0x70] sm:$0xff] %v2385
        %2418 = vst [vmem:[%s714 + $0x78] sm:$0xff] %v2386
        %2419 = vst [vmem:[%s714 + $0x80] sm:$0xff] %v2387
        %2420 = vst [vmem:[%s714 + $0x88] sm:$0xff] %v2388
        %2421 = vst [vmem:[%s714 + $0x90] sm:$0xff] %v2389
        %2422 = vst [vmem:[%s714 + $0x98] sm:$0xff] %v2390
        %2423 = vst [vmem:[%s714 + $0xa0] sm:$0xff] %v2391
        %2424 = vst [vmem:[%s714 + $0xa8] sm:$0xff] %v2392
        %2425 = vst [vmem:[%s714 + $0xb0] sm:$0xff] %v2393
        %2426 = vst [vmem:[%s714 + $0xb8] sm:$0xff] %v2394
        %2427 = vst [vmem:[%s714 + $0xc0] sm:$0xff] %v2395
        %2428 = vst [vmem:[%s714 + $0xc8] sm:$0xff] %v2396
        %2429 = vst [vmem:[%s714 + $0xd0] sm:$0xff] %v2397
        %2430 = vst [vmem:[%s714 + $0xd8] sm:$0xff] %v2398
        %2431 = vst [vmem:[%s714 + $0xe0] sm:$0xff] %v2399
        %2432 = vst [vmem:[%s714 + $0xe8] sm:$0xff] %v2400
        %2433 = vst [vmem:[%s714 + $0xf0] sm:$0xff] %v2401
        %2434 = vst [vmem:[%s714 + $0xf8] sm:$0xff] %v2402
        %s2435 = smul.u32 32, %s14
        %p2436 = scmp.lt.s32.totalorder %s2435, 63
        %s2437 = scalar_select %p2436, %s2435, 63
        %s2438 = smul.addr %s2437, 8
        %s2439 = scalar_lea.vmem %s3, %s2438
        // Predicated region
        $region71: #{lenet5_forward.3} parent=65 // pred_check
          %p2440 = pneg %p100
        $region72: #{lenet5_forward.3} parent=65 // pred_check_branch
          %2442 = sbr.rel (%p2440) target = $region74
        $region73: #{lenet5_forward.3} parent=65 // pred_region
          %s2443 = smul.u32 32, %s14
        $region74: #{lenet5_forward.3} parent=65 // pred_fallthru
          _
      $region66: #{lenet5_forward.3} parent=5 // pred_fallthru
        _
      %p2444 = scmp.le.s32.totalorder 2, %s9
      // Predicated region
      $region75: #{lenet5_forward.3} parent=5 // pred_check
        %p2445 = pneg %p2444
      $region76: #{lenet5_forward.3} parent=5 // pred_check_branch
        %2447 = sbr.rel (%p2445) target = $region78
      $region77: #{lenet5_forward.3} parent=5 // pred_region
        %s2448 = ssub.s32 %s9, 2
        // Predicated region
        $region79: #{lenet5_forward.3} parent=77 // pred_check
          %p2449 = pneg %p106
        $region80: #{lenet5_forward.3} parent=77 // pred_check_branch
          %2451 = sbr.rel (%p2449) target = $region82
        $region81: #{lenet5_forward.3} parent=77 // pred_region
          %s2452 = smul.u32 32, %s15
          %p2453 = scmp.lt.s32.totalorder %s2452, 63
          %s2454 = scalar_select %p2453, %s2452, 63
          %s2455 = smul.addr %s2454, 8
          %s2456 = scalar_lea.vmem %s3, %s2455
        $region82: #{lenet5_forward.3} parent=77 // pred_fallthru
          _
      $region78: #{lenet5_forward.3} parent=5 // pred_fallthru
        _
    $region6: #{lenet5_forward.3} parent=1 // loop_footer
      %s13 = sadd.s32 1, %s9
    $region7: #{lenet5_forward.3} parent=1 // loop_footer_branch
      %8 = sbr.rel target = $region3
    $region8: #{lenet5_forward.3} parent=1 // loop_exit
      _

// kernel: lenet5_forward.4
$region0: #{lenet5_forward.4}
  #allocation0 [shape = 'u32[]', space=smem, size = 0x4, offset = 0x4, fixed_abs, tag = 'smem constant byte address 0x4 - core index']
  #allocation1 [shape = 'u32[144,128]{1,0:T(1,128)}', space=vmem, size = 0x12000, scoped, tag = 'internal scratch']
  %s0 = inlined_call_operand.vmem [shape: f32[4,50,150], index: 0, kind: input, shape index: {}]
  %s1 = inlined_call_operand.vmem [shape: f32[150,128], index: 1, kind: input, shape index: {}]
  %s2 = inlined_call_operand.vmem [shape: f32[1,128], index: 2, kind: input, shape index: {}]
  %s3 = inlined_call_operand.vmem [shape: f32[50,128], index: 3, kind: output, shape index: {}]
  %s4 = sld [smem:[#allocation0]]
  $region22: #{lenet5_forward.4} parent=0
    _
  %s6 = ssub.s32 1, %s4
  %s7 = scalar_select 0, %s6, %s4
  // Predicated region
  $region2: #{lenet5_forward.4} parent=0 // pred_check
    _
  $region3: #{lenet5_forward.4} parent=0 // pred_check_branch
    %9 = sbr.rel (0) target = $region5
  $region4: #{lenet5_forward.4} parent=0 // pred_region
    _
  $region5: #{lenet5_forward.4} parent=0 // pred_fallthru
    _
  // Predicated region
  $region6: #{lenet5_forward.4} parent=0 // pred_check
    _
  $region7: #{lenet5_forward.4} parent=0 // pred_check_branch
    %11 = sbr.rel (0) target = $region9
  $region8: #{lenet5_forward.4} parent=0 // pred_region
    _
  $region9: #{lenet5_forward.4} parent=0 // pred_fallthru
    _
  // Predicated region
  $region10: #{lenet5_forward.4} parent=0 // pred_check
    _
  $region11: #{lenet5_forward.4} parent=0 // pred_check_branch
    %13 = sbr.rel (0) target = $region13
  $region12: #{lenet5_forward.4} parent=0 // pred_region
    _
  $region13: #{lenet5_forward.4} parent=0 // pred_fallthru
    _
  %v14 = vld [vmem:[%s1] sm:$0xff]
  %v15 = vld [vmem:[%s1 + $0x8] sm:$0xff]
  %v16 = vld [vmem:[%s1 + $0x10] sm:$0xff]
  %v17 = vld [vmem:[%s1 + $0x18] sm:$0xff]
  %v18 = vld [vmem:[%s1 + $0x20] sm:$0xff]
  %v19 = vld [vmem:[%s1 + $0x28] sm:$0xff]
  %v20 = vld [vmem:[%s1 + $0x30] sm:$0xff]
  %v21 = vld [vmem:[%s1 + $0x38] sm:$0xff]
  %v22 = vld [vmem:[%s1 + $0x40] sm:$0xff]
  %v23 = vld [vmem:[%s1 + $0x48] sm:$0xff]
  %v24 = vld [vmem:[%s1 + $0x50] sm:$0xff]
  %v25 = vld [vmem:[%s1 + $0x58] sm:$0xff]
  %v26 = vld [vmem:[%s1 + $0x60] sm:$0xff]
  %v27 = vld [vmem:[%s1 + $0x68] sm:$0xff]
  %v28 = vld [vmem:[%s1 + $0x70] sm:$0xff]
  %v29 = vld [vmem:[%s1 + $0x78] sm:$0xff]
  %v30 = vld [vmem:[%s1 + $0x80] sm:$0xff]
  %v31 = vld [vmem:[%s1 + $0x88] sm:$0xff]
  %v32 = vld [vmem:[%s1 + $0x90] sm:$0x3f]
  %v33 = vld [vmem:[%s0] sm:$0xff]
  %v34 = vld [vmem:[%s0 + $0x8] sm:$0xff]
  %v35 = vld [vmem:[%s0 + $0x10] sm:$0xff]
  %v36 = vld [vmem:[%s0 + $0x18] sm:$0xff]
  %v37 = vld [vmem:[%s0 + $0x20] sm:$0xff]
  %v38 = vld [vmem:[%s0 + $0x28] sm:$0xff]
  %v39 = vld [vmem:[%s0 + $0x30] sm:$0xff]
  %v40 = vld [vmem:[%s0 + $0x38] sm:$0xff]
  %v41 = vld [vmem:[%s0 + $0x40] sm:$0xff]
  %v42 = vld [vmem:[%s0 + $0x48] sm:$0xff]
  %v43 = vld [vmem:[%s0 + $0x50] sm:$0xff]
  %v44 = vld [vmem:[%s0 + $0x58] sm:$0xff]
  %v45 = vld [vmem:[%s0 + $0x60] sm:$0x3]
  %v46 = vld [vmem:[%s0 + $0x68] sm:$0x3]
  %vm47 = vcmask 179200
  %v49 = vsel %vm47, %v34, 0
  %v52 = vsel %vm47, %v36, 0
  %v55 = vsel %vm47, %v38, 0
  %v58 = vsel %vm47, %v40, 0
  %v61 = vsel %vm47, %v42, 0
  %v64 = vsel %vm47, %v44, 0
  %v67 = vsel %vm47, %v46, 0
  %vm69 = vcmask 1045504
  %v71 = vsel %vm69, %v32, 0
  %73 = vmatprep.subr.mxu0 0.0
  %74 = vmatpush1.msra.mxu0 %v14
  %75 = vmatprep.subr.mxu0 0.0
  %76 = vmatpush1.msra.mxu0 %v15
  %77 = vmatprep.subr.mxu0 0.0
  %78 = vmatpush1.msra.mxu0 %v16
  %79 = vmatprep.subr.mxu0 0.0
  %80 = vmatpush1.msra.mxu0 %v17
  %81 = vmatprep.subr.mxu0 0.0
  %82 = vmatpush1.msra.mxu0 %v18
  %83 = vmatprep.subr.mxu0 0.0
  %84 = vmatpush1.msra.mxu0 %v19
  %85 = vmatprep.subr.mxu0 0.0
  %86 = vmatpush1.msra.mxu0 %v20
  %87 = vmatprep.subr.mxu0 0.0
  %88 = vmatpush1.msra.mxu0 %v21
  %89 = vmatprep.subr.mxu0 0.0
  %90 = vmatpush1.msra.mxu0 %v22
  %91 = vmatprep.subr.mxu0 0.0
  %92 = vmatpush1.msra.mxu0 %v23
  %93 = vmatprep.subr.mxu0 0.0
  %94 = vmatpush1.msra.mxu0 %v24
  %95 = vmatprep.subr.mxu0 0.0
  %96 = vmatpush1.msra.mxu0 %v25
  %97 = vmatprep.subr.mxu0 0.0
  %98 = vmatpush1.msra.mxu0 %v26
  %99 = vmatprep.subr.mxu0 0.0
  %100 = vmatpush1.msra.mxu0 %v27
  %101 = vmatprep.subr.mxu0 0.0
  %102 = vmatpush1.msra.mxu0 %v28
  %103 = vmatprep.subr.mxu0 0.0
  %104 = vmatpush1.msra.mxu0 %v29
  %105 = vmatprep.subr.mxu0 0.0
  %106 = vmatpush1.msra.mxu0 %v30
  %107 = vmatprep.subr.mxu0 0.0
  %108 = vmatpush1.msra.mxu0 %v31
  %109 = vmatprep.subr.mxu0 0.0
  %110 = vmatpush1.msra.mxu0 %v71
  %111 = vmatprep.subr.mxu0 0.0
  %112 = vmatpush1.msra.mxu0 0.0
  %113 = vmatprep.subr.mxu0 0.0
  %114 = vmatpush1.msra.mxu0 0.0
  %115 = vmatprep.subr.mxu0 0.0
  %116 = vmatpush1.msra.mxu0 0.0
  %117 = vmatprep.subr.mxu0 0.0
  %118 = vmatpush1.msra.mxu0 0.0
  %119 = vmatprep.subr.mxu0 0.0
  %120 = vmatpush1.msra.mxu0 0.0
  %121 = vmatprep.subr.mxu0 0.0
  %122 = vmatpush1.msra.mxu0 0.0
  %123 = vmatprep.subr.mxu0 0.0
  %124 = vmatpush1.msra.mxu0 0.0
  %125 = vmatprep.subr.mxu0 0.0
  %126 = vmatpush1.msra.mxu0 0.0
  %127 = vmatprep.subr.mxu0 0.0
  %128 = vmatpush1.msra.mxu0 0.0
  %129 = vmatprep.subr.mxu0 0.0
  %130 = vmatpush1.msra.mxu0 0.0
  %131 = vmatprep.subr.mxu0 0.0
  %132 = vmatpush1.msra.mxu0 0.0
  %133 = vmatprep.subr.mxu0 0.0
  %134 = vmatpush1.msra.mxu0 0.0
  %135 = vmatprep.subr.mxu0 0.0
  %136 = vmatpush1.msra.mxu0 0.0
  %137 = vmatprep.mubr.f32.mxu0 %v49
  %138 = vmatmul.mubr.f32.gmra.mrb[0].mxu0 %v33
  %v139 = vpop.f32.mrb[0].mxu0
  %v140 = vadd.f32 0.0, %v139
  %v141 = vpop.f32.mrb[0].mxu0
  %142 = vmatprep.mubr.f32.mxu0 %v52
  %143 = vmatmul.mubr.f32.gmra.mrb[0].mxu0 %v35
  %v144 = vpop.f32.mrb[0].mxu0
  %v145 = vadd.f32 0.0, %v144
  %v146 = vpop.f32.mrb[0].mxu0
  %147 = vmatprep.mubr.f32.mxu0 %v55
  %148 = vmatmul.mubr.f32.gmra.mrb[0].mxu0 %v37
  %v149 = vpop.f32.mrb[0].mxu0
  %v150 = vadd.f32 0.0, %v149
  %v151 = vpop.f32.mrb[0].mxu0
  %152 = vmatprep.mubr.f32.mxu0 %v58
  %153 = vmatmul.mubr.f32.gmra.mrb[0].mxu0 %v39
  %v154 = vpop.f32.mrb[0].mxu0
  %v155 = vadd.f32 0.0, %v154
  %v156 = vpop.f32.mrb[0].mxu0
  %157 = vmatprep.mubr.f32.mxu0 %v61
  %158 = vmatmul.mubr.f32.gmra.mrb[0].mxu0 %v41
  %v159 = vpop.f32.mrb[0].mxu0
  %v160 = vadd.f32 0.0, %v159
  %v161 = vpop.f32.mrb[0].mxu0
  %162 = vmatprep.mubr.f32.mxu0 %v64
  %163 = vmatmul.mubr.f32.gmra.mrb[0].mxu0 %v43
  %v164 = vpop.f32.mrb[0].mxu0
  %v165 = vadd.f32 0.0, %v164
  %v166 = vpop.f32.mrb[0].mxu0
  %167 = vmatprep.mubr.f32.mxu0 %v67
  %168 = vmatmul.mubr.f32.gmra.mrb[0].mxu0 %v45
  %v169 = vpop.f32.mrb[0].mxu0
  %v170 = vadd.f32 0.0, %v169
  %v171 = vpop.f32.mrb[0].mxu0
  %172 = vdwg.mxu0
  %s173 = scalar_lea.vmem %s0, 112
  %v174 = vld [vmem:[%s173] sm:$0xff]
  %v175 = vld [vmem:[%s173 + $0x8] sm:$0xff]
  %v176 = vld [vmem:[%s173 + $0x10] sm:$0xff]
  %v177 = vld [vmem:[%s173 + $0x18] sm:$0xff]
  %v178 = vld [vmem:[%s173 + $0x20] sm:$0xff]
  %v179 = vld [vmem:[%s173 + $0x28] sm:$0xff]
  %v180 = vld [vmem:[%s173 + $0x30] sm:$0xff]
  %v181 = vld [vmem:[%s173 + $0x38] sm:$0xff]
  %v182 = vld [vmem:[%s173 + $0x40] sm:$0xff]
  %v183 = vld [vmem:[%s173 + $0x48] sm:$0xff]
  %v184 = vld [vmem:[%s173 + $0x50] sm:$0xff]
  %v185 = vld [vmem:[%s173 + $0x58] sm:$0xff]
  %v186 = vld [vmem:[%s173 + $0x60] sm:$0x3]
  %v187 = vld [vmem:[%s173 + $0x68] sm:$0x3]
  %v189 = vsel %vm47, %v175, 0
  %v192 = vsel %vm47, %v177, 0
  %v195 = vsel %vm47, %v179, 0
  %v198 = vsel %vm47, %v181, 0
  %v201 = vsel %vm47, %v183, 0
  %v204 = vsel %vm47, %v185, 0
  %v207 = vsel %vm47, %v187, 0
  %209 = vmatprep.subr.mxu0 0.0
  %210 = vmatpush1.msra.mxu0 %v14
  %211 = vmatprep.subr.mxu0 0.0
  %212 = vmatpush1.msra.mxu0 %v15
  %213 = vmatprep.subr.mxu0 0.0
  %214 = vmatpush1.msra.mxu0 %v16
  %215 = vmatprep.subr.mxu0 0.0
  %216 = vmatpush1.msra.mxu0 %v17
  %217 = vmatprep.subr.mxu0 0.0
  %218 = vmatpush1.msra.mxu0 %v18
  %219 = vmatprep.subr.mxu0 0.0
  %220 = vmatpush1.msra.mxu0 %v19
  %221 = vmatprep.subr.mxu0 0.0
  %222 = vmatpush1.msra.mxu0 %v20
  %223 = vmatprep.subr.mxu0 0.0
  %224 = vmatpush1.msra.mxu0 %v21
  %225 = vmatprep.subr.mxu0 0.0
  %226 = vmatpush1.msra.mxu0 %v22
  %227 = vmatprep.subr.mxu0 0.0
  %228 = vmatpush1.msra.mxu0 %v23
  %229 = vmatprep.subr.mxu0 0.0
  %230 = vmatpush1.msra.mxu0 %v24
  %231 = vmatprep.subr.mxu0 0.0
  %232 = vmatpush1.msra.mxu0 %v25
  %233 = vmatprep.subr.mxu0 0.0
  %234 = vmatpush1.msra.mxu0 %v26
  %235 = vmatprep.subr.mxu0 0.0
  %236 = vmatpush1.msra.mxu0 %v27
  %237 = vmatprep.subr.mxu0 0.0
  %238 = vmatpush1.msra.mxu0 %v28
  %239 = vmatprep.subr.mxu0 0.0
  %240 = vmatpush1.msra.mxu0 %v29
  %241 = vmatprep.subr.mxu0 0.0
  %242 = vmatpush1.msra.mxu0 %v30
  %243 = vmatprep.subr.mxu0 0.0
  %244 = vmatpush1.msra.mxu0 %v31
  %245 = vmatprep.subr.mxu0 0.0
  %246 = vmatpush1.msra.mxu0 %v71
  %247 = vmatprep.subr.mxu0 0.0
  %248 = vmatpush1.msra.mxu0 0.0
  %249 = vmatprep.subr.mxu0 0.0
  %250 = vmatpush1.msra.mxu0 0.0
  %251 = vmatprep.subr.mxu0 0.0
  %252 = vmatpush1.msra.mxu0 0.0
  %253 = vmatprep.subr.mxu0 0.0
  %254 = vmatpush1.msra.mxu0 0.0
  %255 = vmatprep.subr.mxu0 0.0
  %256 = vmatpush1.msra.mxu0 0.0
  %257 = vmatprep.subr.mxu0 0.0
  %258 = vmatpush1.msra.mxu0 0.0
  %259 = vmatprep.subr.mxu0 0.0
  %260 = vmatpush1.msra.mxu0 0.0
  %261 = vmatprep.subr.mxu0 0.0
  %262 = vmatpush1.msra.mxu0 0.0
  %263 = vmatprep.subr.mxu0 0.0
  %264 = vmatpush1.msra.mxu0 0.0
  %265 = vmatprep.subr.mxu0 0.0
  %266 = vmatpush1.msra.mxu0 0.0
  %267 = vmatprep.subr.mxu0 0.0
  %268 = vmatpush1.msra.mxu0 0.0
  %269 = vmatprep.subr.mxu0 0.0
  %270 = vmatpush1.msra.mxu0 0.0
  %271 = vmatprep.subr.mxu0 0.0
  %272 = vmatpush1.msra.mxu0 0.0
  %273 = vmatprep.mubr.f32.mxu0 %v189
  %274 = vmatmul.mubr.f32.gmra.mrb[0].mxu0 %v174
  %v275 = vpop.f32.mrb[0].mxu0
  %v276 = vadd.f32 0.0, %v275
  %v277 = vpop.f32.mrb[0].mxu0
  %278 = vmatprep.mubr.f32.mxu0 %v192
  %279 = vmatmul.mubr.f32.gmra.mrb[0].mxu0 %v176
  %v280 = vpop.f32.mrb[0].mxu0
  %v281 = vadd.f32 0.0, %v280
  %v282 = vpop.f32.mrb[0].mxu0
  %283 = vmatprep.mubr.f32.mxu0 %v195
  %284 = vmatmul.mubr.f32.gmra.mrb[0].mxu0 %v178
  %v285 = vpop.f32.mrb[0].mxu0
  %v286 = vadd.f32 0.0, %v285
  %v287 = vpop.f32.mrb[0].mxu0
  %288 = vmatprep.mubr.f32.mxu0 %v198
  %289 = vmatmul.mubr.f32.gmra.mrb[0].mxu0 %v180
  %v290 = vpop.f32.mrb[0].mxu0
  %v291 = vadd.f32 0.0, %v290
  %v292 = vpop.f32.mrb[0].mxu0
  %293 = vmatprep.mubr.f32.mxu0 %v201
  %294 = vmatmul.mubr.f32.gmra.mrb[0].mxu0 %v182
  %v295 = vpop.f32.mrb[0].mxu0
  %v296 = vadd.f32 0.0, %v295
  %v297 = vpop.f32.mrb[0].mxu0
  %298 = vmatprep.mubr.f32.mxu0 %v204
  %299 = vmatmul.mubr.f32.gmra.mrb[0].mxu0 %v184
  %v300 = vpop.f32.mrb[0].mxu0
  %v301 = vadd.f32 0.0, %v300
  %v302 = vpop.f32.mrb[0].mxu0
  %303 = vmatprep.mubr.f32.mxu0 %v207
  %304 = vmatmul.mubr.f32.gmra.mrb[0].mxu0 %v186
  %v305 = vpop.f32.mrb[0].mxu0
  %v306 = vadd.f32 0.0, %v305
  %v307 = vpop.f32.mrb[0].mxu0
  %308 = vdwg.mxu0
  %s309 = scalar_lea.vmem %s0, 224
  %v310 = vld [vmem:[%s309] sm:$0xff]
  %v311 = vld [vmem:[%s309 + $0x8] sm:$0xff]
  %v312 = vld [vmem:[%s309 + $0x10] sm:$0xff]
  %v313 = vld [vmem:[%s309 + $0x18] sm:$0xff]
  %v314 = vld [vmem:[%s309 + $0x20] sm:$0xff]
  %v315 = vld [vmem:[%s309 + $0x28] sm:$0xff]
  %v316 = vld [vmem:[%s309 + $0x30] sm:$0xff]
  %v317 = vld [vmem:[%s309 + $0x38] sm:$0xff]
  %v318 = vld [vmem:[%s309 + $0x40] sm:$0xff]
  %v319 = vld [vmem:[%s309 + $0x48] sm:$0xff]
  %v320 = vld [vmem:[%s309 + $0x50] sm:$0xff]
  %v321 = vld [vmem:[%s309 + $0x58] sm:$0xff]
  %v322 = vld [vmem:[%s309 + $0x60] sm:$0x3]
  %v323 = vld [vmem:[%s309 + $0x68] sm:$0x3]
  %v325 = vsel %vm47, %v311, 0
  %v328 = vsel %vm47, %v313, 0
  %v331 = vsel %vm47, %v315, 0
  %v334 = vsel %vm47, %v317, 0
  %v337 = vsel %vm47, %v319, 0
  %v340 = vsel %vm47, %v321, 0
  %v343 = vsel %vm47, %v323, 0
  %345 = vmatprep.subr.mxu0 0.0
  %346 = vmatpush1.msra.mxu0 %v14
  %347 = vmatprep.subr.mxu0 0.0
  %348 = vmatpush1.msra.mxu0 %v15
  %349 = vmatprep.subr.mxu0 0.0
  %350 = vmatpush1.msra.mxu0 %v16
  %351 = vmatprep.subr.mxu0 0.0
  %352 = vmatpush1.msra.mxu0 %v17
  %353 = vmatprep.subr.mxu0 0.0
  %354 = vmatpush1.msra.mxu0 %v18
  %355 = vmatprep.subr.mxu0 0.0
  %356 = vmatpush1.msra.mxu0 %v19
  %357 = vmatprep.subr.mxu0 0.0
  %358 = vmatpush1.msra.mxu0 %v20
  %359 = vmatprep.subr.mxu0 0.0
  %360 = vmatpush1.msra.mxu0 %v21
  %361 = vmatprep.subr.mxu0 0.0
  %362 = vmatpush1.msra.mxu0 %v22
  %363 = vmatprep.subr.mxu0 0.0
  %364 = vmatpush1.msra.mxu0 %v23
  %365 = vmatprep.subr.mxu0 0.0
  %366 = vmatpush1.msra.mxu0 %v24
  %367 = vmatprep.subr.mxu0 0.0
  %368 = vmatpush1.msra.mxu0 %v25
  %369 = vmatprep.subr.mxu0 0.0
  %370 = vmatpush1.msra.mxu0 %v26
  %371 = vmatprep.subr.mxu0 0.0
  %372 = vmatpush1.msra.mxu0 %v27
  %373 = vmatprep.subr.mxu0 0.0
  %374 = vmatpush1.msra.mxu0 %v28
  %375 = vmatprep.subr.mxu0 0.0
  %376 = vmatpush1.msra.mxu0 %v29
  %377 = vmatprep.subr.mxu0 0.0
  %378 = vmatpush1.msra.mxu0 %v30
  %379 = vmatprep.subr.mxu0 0.0
  %380 = vmatpush1.msra.mxu0 %v31
  %381 = vmatprep.subr.mxu0 0.0
  %382 = vmatpush1.msra.mxu0 %v71
  %383 = vmatprep.subr.mxu0 0.0
  %384 = vmatpush1.msra.mxu0 0.0
  %385 = vmatprep.subr.mxu0 0.0
  %386 = vmatpush1.msra.mxu0 0.0
  %387 = vmatprep.subr.mxu0 0.0
  %388 = vmatpush1.msra.mxu0 0.0
  %389 = vmatprep.subr.mxu0 0.0
  %390 = vmatpush1.msra.mxu0 0.0
  %391 = vmatprep.subr.mxu0 0.0
  %392 = vmatpush1.msra.mxu0 0.0
  %393 = vmatprep.subr.mxu0 0.0
  %394 = vmatpush1.msra.mxu0 0.0
  %395 = vmatprep.subr.mxu0 0.0
  %396 = vmatpush1.msra.mxu0 0.0
  %397 = vmatprep.subr.mxu0 0.0
  %398 = vmatpush1.msra.mxu0 0.0
  %399 = vmatprep.subr.mxu0 0.0
  %400 = vmatpush1.msra.mxu0 0.0
  %401 = vmatprep.subr.mxu0 0.0
  %402 = vmatpush1.msra.mxu0 0.0
  %403 = vmatprep.subr.mxu0 0.0
  %404 = vmatpush1.msra.mxu0 0.0
  %405 = vmatprep.subr.mxu0 0.0
  %406 = vmatpush1.msra.mxu0 0.0
  %407 = vmatprep.subr.mxu0 0.0
  %408 = vmatpush1.msra.mxu0 0.0
  %409 = vmatprep.mubr.f32.mxu0 %v325
  %410 = vmatmul.mubr.f32.gmra.mrb[0].mxu0 %v310
  %v411 = vpop.f32.mrb[0].mxu0
  %v412 = vadd.f32 0.0, %v411
  %v413 = vpop.f32.mrb[0].mxu0
  %414 = vmatprep.mubr.f32.mxu0 %v328
  %415 = vmatmul.mubr.f32.gmra.mrb[0].mxu0 %v312
  %v416 = vpop.f32.mrb[0].mxu0
  %v417 = vadd.f32 0.0, %v416
  %v418 = vpop.f32.mrb[0].mxu0
  %419 = vmatprep.mubr.f32.mxu0 %v331
  %420 = vmatmul.mubr.f32.gmra.mrb[0].mxu0 %v314
  %v421 = vpop.f32.mrb[0].mxu0
  %v422 = vadd.f32 0.0, %v421
  %v423 = vpop.f32.mrb[0].mxu0
  %424 = vmatprep.mubr.f32.mxu0 %v334
  %425 = vmatmul.mubr.f32.gmra.mrb[0].mxu0 %v316
  %v426 = vpop.f32.mrb[0].mxu0
  %v427 = vadd.f32 0.0, %v426
  %v428 = vpop.f32.mrb[0].mxu0
  %429 = vmatprep.mubr.f32.mxu0 %v337
  %430 = vmatmul.mubr.f32.gmra.mrb[0].mxu0 %v318
  %v431 = vpop.f32.mrb[0].mxu0
  %v432 = vadd.f32 0.0, %v431
  %v433 = vpop.f32.mrb[0].mxu0
  %434 = vmatprep.mubr.f32.mxu0 %v340
  %435 = vmatmul.mubr.f32.gmra.mrb[0].mxu0 %v320
  %v436 = vpop.f32.mrb[0].mxu0
  %v437 = vadd.f32 0.0, %v436
  %v438 = vpop.f32.mrb[0].mxu0
  %439 = vmatprep.mubr.f32.mxu0 %v343
  %440 = vmatmul.mubr.f32.gmra.mrb[0].mxu0 %v322
  %v441 = vpop.f32.mrb[0].mxu0
  %v442 = vadd.f32 0.0, %v441
  %v443 = vpop.f32.mrb[0].mxu0
  %444 = vdwg.mxu0
  %s445 = scalar_lea.vmem %s0, 336
  %v446 = vld [vmem:[%s445] sm:$0xff]
  %v447 = vld [vmem:[%s445 + $0x8] sm:$0xff]
  %v448 = vld [vmem:[%s445 + $0x10] sm:$0xff]
  %v449 = vld [vmem:[%s445 + $0x18] sm:$0xff]
  %v450 = vld [vmem:[%s445 + $0x20] sm:$0xff]
  %v451 = vld [vmem:[%s445 + $0x28] sm:$0xff]
  %v452 = vld [vmem:[%s445 + $0x30] sm:$0xff]
  %v453 = vld [vmem:[%s445 + $0x38] sm:$0xff]
  %v454 = vld [vmem:[%s445 + $0x40] sm:$0xff]
  %v455 = vld [vmem:[%s445 + $0x48] sm:$0xff]
  %v456 = vld [vmem:[%s445 + $0x50] sm:$0xff]
  %v457 = vld [vmem:[%s445 + $0x58] sm:$0xff]
  %v458 = vld [vmem:[%s445 + $0x60] sm:$0x3]
  %v459 = vld [vmem:[%s445 + $0x68] sm:$0x3]
  %v461 = vsel %vm47, %v447, 0
  %v464 = vsel %vm47, %v449, 0
  %v467 = vsel %vm47, %v451, 0
  %v470 = vsel %vm47, %v453, 0
  %v473 = vsel %vm47, %v455, 0
  %v476 = vsel %vm47, %v457, 0
  %v479 = vsel %vm47, %v459, 0
  %481 = vmatprep.subr.mxu0 0.0
  %482 = vmatpush1.msra.mxu0 %v14
  %483 = vmatprep.subr.mxu0 0.0
  %484 = vmatpush1.msra.mxu0 %v15
  %485 = vmatprep.subr.mxu0 0.0
  %486 = vmatpush1.msra.mxu0 %v16
  %487 = vmatprep.subr.mxu0 0.0
  %488 = vmatpush1.msra.mxu0 %v17
  %489 = vmatprep.subr.mxu0 0.0
  %490 = vmatpush1.msra.mxu0 %v18
  %491 = vmatprep.subr.mxu0 0.0
  %492 = vmatpush1.msra.mxu0 %v19
  %493 = vmatprep.subr.mxu0 0.0
  %494 = vmatpush1.msra.mxu0 %v20
  %495 = vmatprep.subr.mxu0 0.0
  %496 = vmatpush1.msra.mxu0 %v21
  %497 = vmatprep.subr.mxu0 0.0
  %498 = vmatpush1.msra.mxu0 %v22
  %499 = vmatprep.subr.mxu0 0.0
  %500 = vmatpush1.msra.mxu0 %v23
  %501 = vmatprep.subr.mxu0 0.0
  %502 = vmatpush1.msra.mxu0 %v24
  %503 = vmatprep.subr.mxu0 0.0
  %504 = vmatpush1.msra.mxu0 %v25
  %505 = vmatprep.subr.mxu0 0.0
  %506 = vmatpush1.msra.mxu0 %v26
  %507 = vmatprep.subr.mxu0 0.0
  %508 = vmatpush1.msra.mxu0 %v27
  %509 = vmatprep.subr.mxu0 0.0
  %510 = vmatpush1.msra.mxu0 %v28
  %511 = vmatprep.subr.mxu0 0.0
  %512 = vmatpush1.msra.mxu0 %v29
  %513 = vmatprep.subr.mxu0 0.0
  %514 = vmatpush1.msra.mxu0 %v30
  %515 = vmatprep.subr.mxu0 0.0
  %516 = vmatpush1.msra.mxu0 %v31
  %517 = vmatprep.subr.mxu0 0.0
  %518 = vmatpush1.msra.mxu0 %v71
  %519 = vmatprep.subr.mxu0 0.0
  %520 = vmatpush1.msra.mxu0 0.0
  %521 = vmatprep.subr.mxu0 0.0
  %522 = vmatpush1.msra.mxu0 0.0
  %523 = vmatprep.subr.mxu0 0.0
  %524 = vmatpush1.msra.mxu0 0.0
  %525 = vmatprep.subr.mxu0 0.0
  %526 = vmatpush1.msra.mxu0 0.0
  %527 = vmatprep.subr.mxu0 0.0
  %528 = vmatpush1.msra.mxu0 0.0
  %529 = vmatprep.subr.mxu0 0.0
  %530 = vmatpush1.msra.mxu0 0.0
  %531 = vmatprep.subr.mxu0 0.0
  %532 = vmatpush1.msra.mxu0 0.0
  %533 = vmatprep.subr.mxu0 0.0
  %534 = vmatpush1.msra.mxu0 0.0
  %535 = vmatprep.subr.mxu0 0.0
  %536 = vmatpush1.msra.mxu0 0.0
  %537 = vmatprep.subr.mxu0 0.0
  %538 = vmatpush1.msra.mxu0 0.0
  %539 = vmatprep.subr.mxu0 0.0
  %540 = vmatpush1.msra.mxu0 0.0
  %541 = vmatprep.subr.mxu0 0.0
  %542 = vmatpush1.msra.mxu0 0.0
  %543 = vmatprep.subr.mxu0 0.0
  %544 = vmatpush1.msra.mxu0 0.0
  %545 = vmatprep.mubr.f32.mxu0 %v461
  %546 = vmatmul.mubr.f32.gmra.mrb[0].mxu0 %v446
  %v547 = vpop.f32.mrb[0].mxu0
  %v548 = vadd.f32 0.0, %v547
  %v549 = vpop.f32.mrb[0].mxu0
  %550 = vmatprep.mubr.f32.mxu0 %v464
  %551 = vmatmul.mubr.f32.gmra.mrb[0].mxu0 %v448
  %v552 = vpop.f32.mrb[0].mxu0
  %v553 = vadd.f32 0.0, %v552
  %v554 = vpop.f32.mrb[0].mxu0
  %555 = vmatprep.mubr.f32.mxu0 %v467
  %556 = vmatmul.mubr.f32.gmra.mrb[0].mxu0 %v450
  %v557 = vpop.f32.mrb[0].mxu0
  %v558 = vadd.f32 0.0, %v557
  %v559 = vpop.f32.mrb[0].mxu0
  %560 = vmatprep.mubr.f32.mxu0 %v470
  %561 = vmatmul.mubr.f32.gmra.mrb[0].mxu0 %v452
  %v562 = vpop.f32.mrb[0].mxu0
  %v563 = vadd.f32 0.0, %v562
  %v564 = vpop.f32.mrb[0].mxu0
  %565 = vmatprep.mubr.f32.mxu0 %v473
  %566 = vmatmul.mubr.f32.gmra.mrb[0].mxu0 %v454
  %v567 = vpop.f32.mrb[0].mxu0
  %v568 = vadd.f32 0.0, %v567
  %v569 = vpop.f32.mrb[0].mxu0
  %570 = vmatprep.mubr.f32.mxu0 %v476
  %571 = vmatmul.mubr.f32.gmra.mrb[0].mxu0 %v456
  %v572 = vpop.f32.mrb[0].mxu0
  %v573 = vadd.f32 0.0, %v572
  %v574 = vpop.f32.mrb[0].mxu0
  %575 = vmatprep.mubr.f32.mxu0 %v479
  %576 = vmatmul.mubr.f32.gmra.mrb[0].mxu0 %v458
  %v577 = vpop.f32.mrb[0].mxu0
  %v578 = vadd.f32 0.0, %v577
  %v579 = vpop.f32.mrb[0].mxu0
  %580 = vdwg.mxu0
  %v581 = vmax.f32 %v140, %v276
  %v582 = vmax.f32 %v145, %v281
  %v583 = vmax.f32 %v150, %v286
  %v584 = vmax.f32 %v155, %v291
  %v585 = vmax.f32 %v160, %v296
  %v586 = vmax.f32 %v165, %v301
  %v587 = vmax.f32 %v170, %v306
  %v588 = vmax.f32 %v412, %v548
  %v589 = vmax.f32 %v417, %v553
  %v590 = vmax.f32 %v422, %v558
  %v591 = vmax.f32 %v427, %v563
  %v592 = vmax.f32 %v432, %v568
  %v593 = vmax.f32 %v437, %v573
  %v594 = vmax.f32 %v442, %v578
  %v595 = vmax.f32 %v581, %v588
  %v596 = vmax.f32 %v582, %v589
  %v597 = vmax.f32 %v583, %v590
  %v598 = vmax.f32 %v584, %v591
  %v599 = vmax.f32 %v585, %v592
  %v600 = vmax.f32 %v586, %v593
  %v601 = vmax.f32 %v587, %v594
  %v602 = vld [vmem:[%s2] sm:$0x1]
  %v604 = vlaneseq
  %v605 = vshrl.u32 %v604, 7
  %v606 = vsub.s32 0, %v605
  %v607 = vrot.slane %v602, %v606
  %v609 = vadd.f32 %v595, %v607
  %v610 = vadd.f32 %v596, %v607
  %v611 = vadd.f32 %v597, %v607
  %v612 = vadd.f32 %v598, %v607
  %v613 = vadd.f32 %v599, %v607
  %v614 = vadd.f32 %v600, %v607
  %v615 = vadd.f32 %v601, %v607
  %v616 = vmul.f32 %v609, 0.5
  %v617 = vmul.f32 %v610, 0.5
  %v618 = vmul.f32 %v611, 0.5
  %v619 = vmul.f32 %v612, 0.5
  %v620 = vmul.f32 %v613, 0.5
  %v621 = vmul.f32 %v614, 0.5
  %v622 = vmul.f32 %v615, 0.5
  %v623 = vtanh.pop %v616
  %v624 = vtanh.pop %v617
  %v625 = vtanh.pop %v618
  %v626 = vtanh.pop %v619
  %v627 = vtanh.pop %v620
  %v628 = vtanh.pop %v621
  %v629 = vtanh.pop %v622
  %v630 = vadd.f32 %v623, 1.0
  %v631 = vadd.f32 %v624, 1.0
  %v632 = vadd.f32 %v625, 1.0
  %v633 = vadd.f32 %v626, 1.0
  %v634 = vadd.f32 %v627, 1.0
  %v635 = vadd.f32 %v628, 1.0
  %v636 = vadd.f32 %v629, 1.0
  %v637 = vmul.f32 %v630, 0.5
  %v638 = vmul.f32 %v631, 0.5
  %v639 = vmul.f32 %v632, 0.5
  %v640 = vmul.f32 %v633, 0.5
  %v641 = vmul.f32 %v634, 0.5
  %v642 = vmul.f32 %v635, 0.5
  %v643 = vmul.f32 %v636, 0.5
  %644 = vst [vmem:[%s3] sm:$0xff] %v637
  %645 = vst [vmem:[%s3 + $0x8] sm:$0xff] %v638
  %646 = vst [vmem:[%s3 + $0x10] sm:$0xff] %v639
  %647 = vst [vmem:[%s3 + $0x18] sm:$0xff] %v640
  %648 = vst [vmem:[%s3 + $0x20] sm:$0xff] %v641
  %649 = vst [vmem:[%s3 + $0x28] sm:$0xff] %v642
  %650 = vst [vmem:[%s3 + $0x30] sm:$0x3] %v643
  // Predicated region
  $region14: #{lenet5_forward.4} parent=0 // pred_check
    _
  $region15: #{lenet5_forward.4} parent=0 // pred_check_branch
    %652 = sbr.rel (0) target = $region17
  $region16: #{lenet5_forward.4} parent=0 // pred_region
    _
  $region17: #{lenet5_forward.4} parent=0 // pred_fallthru
    _
  // Predicated region
  $region18: #{lenet5_forward.4} parent=0 // pred_check
    _
  $region19: #{lenet5_forward.4} parent=0 // pred_check_branch
    %654 = sbr.rel (0) target = $region21
  $region20: #{lenet5_forward.4} parent=0 // pred_region
    _
  $region21: #{lenet5_forward.4} parent=0 // pred_fallthru
    _

// kernel: lenet5_forward.5
$region0: #{lenet5_forward.5}
  #allocation0 [shape = 'u32[]', space=smem, size = 0x4, offset = 0x4, fixed_abs, tag = 'smem constant byte address 0x4 - core index']
  #allocation1 [shape = 'u32[144,128]{1,0:T(1,128)}', space=vmem, size = 0x12000, scoped, tag = 'internal scratch']
  %s0 = inlined_call_operand.vmem [shape: f32[2,400], index: 0, kind: input, shape index: {}]
  %s1 = inlined_call_operand.vmem [shape: f32[400,128], index: 1, kind: input, shape index: {}]
  %s2 = inlined_call_operand.vmem [shape: f32[1,128], index: 2, kind: input, shape index: {}]
  %s3 = inlined_call_operand.vmem [shape: f32[128,128], index: 3, kind: input, shape index: {}]
  %s4 = inlined_call_operand.vmem [shape: f32[1,128], index: 4, kind: input, shape index: {}]
  %s5 = inlined_call_operand.vmem [shape: f32[128,128], index: 5, kind: input, shape index: {}]
  %s6 = inlined_call_operand.vmem [shape: f32[1,128], index: 6, kind: input, shape index: {}]
  %s7 = inlined_call_operand.hbm [shape: f32[2,128], index: 7, kind: output, shape index: {}]
  %s8 = sld [smem:[#allocation0]]
  $region38: #{lenet5_forward.5} parent=0
    _
  %s10 = ssub.s32 1, %s8
  %s11 = scalar_select 0, %s10, %s8
  $region1: #{lenet5_forward.5} parent=0
    #allocation2 [shape = 'u8[1024]{0}', space=vmem, size = 0x400, scoped, tag = 'output window, operand 0, single buffered']
    #allocation3 [shape = 's32[1]{0}', space=sflag, size = 0x4, scoped, tag = 'scoped memory for lenet5_forward.5']
    %12 = vsyncpa [#allocation3], 0
    // Predicated region
    $region2: #{lenet5_forward.5} parent=1 // pred_check
      _
    $region3: #{lenet5_forward.5} parent=1 // pred_check_branch
      %14 = sbr.rel (0) target = $region5
    $region4: #{lenet5_forward.5} parent=1 // pred_region
      _
    $region5: #{lenet5_forward.5} parent=1 // pred_fallthru
      _
    // Predicated region
    $region6: #{lenet5_forward.5} parent=1 // pred_check
      _
    $region7: #{lenet5_forward.5} parent=1 // pred_check_branch
      %16 = sbr.rel (0) target = $region9
    $region8: #{lenet5_forward.5} parent=1 // pred_region
      _
    $region9: #{lenet5_forward.5} parent=1 // pred_fallthru
      _
    // Predicated region
    $region10: #{lenet5_forward.5} parent=1 // pred_check
      _
    $region11: #{lenet5_forward.5} parent=1 // pred_check_branch
      %18 = sbr.rel (0) target = $region13
    $region12: #{lenet5_forward.5} parent=1 // pred_region
      _
    $region13: #{lenet5_forward.5} parent=1 // pred_fallthru
      _
    // Predicated region
    $region14: #{lenet5_forward.5} parent=1 // pred_check
      _
    $region15: #{lenet5_forward.5} parent=1 // pred_check_branch
      %20 = sbr.rel (0) target = $region17
    $region16: #{lenet5_forward.5} parent=1 // pred_region
      _
    $region17: #{lenet5_forward.5} parent=1 // pred_fallthru
      _
    // Predicated region
    $region18: #{lenet5_forward.5} parent=1 // pred_check
      _
    $region19: #{lenet5_forward.5} parent=1 // pred_check_branch
      %22 = sbr.rel (0) target = $region21
    $region20: #{lenet5_forward.5} parent=1 // pred_region
      _
    $region21: #{lenet5_forward.5} parent=1 // pred_fallthru
      _
    // Predicated region
    $region22: #{lenet5_forward.5} parent=1 // pred_check
      _
    $region23: #{lenet5_forward.5} parent=1 // pred_check_branch
      %24 = sbr.rel (0) target = $region25
    $region24: #{lenet5_forward.5} parent=1 // pred_region
      _
    $region25: #{lenet5_forward.5} parent=1 // pred_fallthru
      _
    // Predicated region
    $region26: #{lenet5_forward.5} parent=1 // pred_check
      _
    $region27: #{lenet5_forward.5} parent=1 // pred_check_branch
      %26 = sbr.rel (0) target = $region29
    $region28: #{lenet5_forward.5} parent=1 // pred_region
      _
    $region29: #{lenet5_forward.5} parent=1 // pred_fallthru
      _
    %v27 = vld [vmem:[%s0] sm:$0xff]
    %v28 = vld [vmem:[%s1] sm:$0xff]
    %v29 = vld [vmem:[%s1 + $0x8] sm:$0xff]
    %v30 = vld [vmem:[%s1 + $0x10] sm:$0xff]
    %v31 = vld [vmem:[%s1 + $0x18] sm:$0xff]
    %v32 = vld [vmem:[%s1 + $0x20] sm:$0xff]
    %v33 = vld [vmem:[%s1 + $0x28] sm:$0xff]
    %v34 = vld [vmem:[%s1 + $0x30] sm:$0xff]
    %v35 = vld [vmem:[%s1 + $0x38] sm:$0xff]
    %v36 = vld [vmem:[%s1 + $0x40] sm:$0xff]
    %v37 = vld [vmem:[%s1 + $0x48] sm:$0xff]
    %v38 = vld [vmem:[%s1 + $0x50] sm:$0xff]
    %v39 = vld [vmem:[%s1 + $0x58] sm:$0xff]
    %v40 = vld [vmem:[%s1 + $0x60] sm:$0xff]
    %v41 = vld [vmem:[%s1 + $0x68] sm:$0xff]
    %v42 = vld [vmem:[%s1 + $0x70] sm:$0xff]
    %v43 = vld [vmem:[%s1 + $0x78] sm:$0xff]
    %v44 = vld [vmem:[%s1 + $0x80] sm:$0xff]
    %v45 = vld [vmem:[%s1 + $0x88] sm:$0xff]
    %v46 = vld [vmem:[%s1 + $0x90] sm:$0xff]
    %v47 = vld [vmem:[%s1 + $0x98] sm:$0xff]
    %v48 = vld [vmem:[%s1 + $0xa0] sm:$0xff]
    %v49 = vld [vmem:[%s1 + $0xa8] sm:$0xff]
    %v50 = vld [vmem:[%s1 + $0xb0] sm:$0xff]
    %v51 = vld [vmem:[%s1 + $0xb8] sm:$0xff]
    %v52 = vld [vmem:[%s1 + $0xc0] sm:$0xff]
    %v53 = vld [vmem:[%s1 + $0xc8] sm:$0xff]
    %v54 = vld [vmem:[%s1 + $0xd0] sm:$0xff]
    %v55 = vld [vmem:[%s1 + $0xd8] sm:$0xff]
    %v56 = vld [vmem:[%s1 + $0xe0] sm:$0xff]
    %v57 = vld [vmem:[%s1 + $0xe8] sm:$0xff]
    %v58 = vld [vmem:[%s1 + $0xf0] sm:$0xff]
    %v59 = vld [vmem:[%s1 + $0xf8] sm:$0xff]
    %v60 = vld [vmem:[%s1 + $0x100] sm:$0xff]
    %v61 = vld [vmem:[%s1 + $0x108] sm:$0xff]
    %v62 = vld [vmem:[%s1 + $0x110] sm:$0xff]
    %v63 = vld [vmem:[%s1 + $0x118] sm:$0xff]
    %v64 = vld [vmem:[%s1 + $0x120] sm:$0xff]
    %v65 = vld [vmem:[%s1 + $0x128] sm:$0xff]
    %v66 = vld [vmem:[%s1 + $0x130] sm:$0xff]
    %v67 = vld [vmem:[%s1 + $0x138] sm:$0xff]
    %v68 = vld [vmem:[%s1 + $0x140] sm:$0xff]
    %v69 = vld [vmem:[%s1 + $0x148] sm:$0xff]
    %v70 = vld [vmem:[%s1 + $0x150] sm:$0xff]
    %v71 = vld [vmem:[%s1 + $0x158] sm:$0xff]
    %v72 = vld [vmem:[%s1 + $0x160] sm:$0xff]
    %v73 = vld [vmem:[%s1 + $0x168] sm:$0xff]
    %v74 = vld [vmem:[%s1 + $0x170] sm:$0xff]
    %v75 = vld [vmem:[%s1 + $0x178] sm:$0xff]
    %v76 = vld [vmem:[%s1 + $0x180] sm:$0xff]
    %v77 = vld [vmem:[%s1 + $0x188] sm:$0xff]
    %v78 = vld [vmem:[%s2] sm:$0x1]
    %v80 = vlaneseq
    %v81 = vshrl.u32 %v80, 7
    %v82 = vsub.s32 0, %v81
    %v83 = vrot.slane %v78, %v82
    %v86 = vcombine.high %v27, %v27
    %v88 = vunpack.c.l.s4 1983009808
    %v89 = vunpack.c.0.s8 %v88
    %v90 = vlaneseq
    %v91 = vshrl.u32 %v90, 7
    %v92 = vsub.s32 %v89, %v91
    %v93 = vrot.slane %v27, %v92
    %v95 = vunpack.c.l.s4 1983009808
    %v96 = vunpack.c.0.s8 %v95
    %v97 = vlaneseq
    %v98 = vshrl.u32 %v97, 7
    %v99 = vsub.s32 %v96, %v98
    %v100 = vrot.slane %v86, %v99
    %v101 = vcombine.high %v93, %v93
    %v102 = vcombine.high %v100, %v100
    %vm106 = vcmask 130048
    %v107 = vsel %vm106, %v102, 0
    %109 = vmatprep.subr.mxu0 0.0
    %110 = vmatpush1.msra.mxu0 %v28
    %111 = vmatprep.subr.mxu0 0.0
    %112 = vmatpush1.msra.mxu0 %v29
    %113 = vmatprep.subr.mxu0 0.0
    %114 = vmatpush1.msra.mxu0 %v30
    %115 = vmatprep.subr.mxu0 0.0
    %116 = vmatpush1.msra.mxu0 %v31
    %117 = vmatprep.subr.mxu0 0.0
    %118 = vmatpush1.msra.mxu0 %v32
    %119 = vmatprep.subr.mxu0 0.0
    %120 = vmatpush1.msra.mxu0 %v33
    %121 = vmatprep.subr.mxu0 0.0
    %122 = vmatpush1.msra.mxu0 %v34
    %123 = vmatprep.subr.mxu0 0.0
    %124 = vmatpush1.msra.mxu0 %v35
    %125 = vmatprep.subr.mxu0 0.0
    %126 = vmatpush1.msra.mxu0 %v36
    %127 = vmatprep.subr.mxu0 0.0
    %128 = vmatpush1.msra.mxu0 %v37
    %129 = vmatprep.subr.mxu0 0.0
    %130 = vmatpush1.msra.mxu0 %v38
    %131 = vmatprep.subr.mxu0 0.0
    %132 = vmatpush1.msra.mxu0 %v39
    %133 = vmatprep.subr.mxu0 0.0
    %134 = vmatpush1.msra.mxu0 %v40
    %135 = vmatprep.subr.mxu0 0.0
    %136 = vmatpush1.msra.mxu0 %v41
    %137 = vmatprep.subr.mxu0 0.0
    %138 = vmatpush1.msra.mxu0 %v42
    %139 = vmatprep.subr.mxu0 0.0
    %140 = vmatpush1.msra.mxu0 %v43
    %141 = vmatprep.subr.mxu0 0.0
    %142 = vmatpush1.msra.mxu0 %v44
    %143 = vmatprep.subr.mxu0 0.0
    %144 = vmatpush1.msra.mxu0 %v45
    %145 = vmatprep.subr.mxu0 0.0
    %146 = vmatpush1.msra.mxu0 %v46
    %147 = vmatprep.subr.mxu0 0.0
    %148 = vmatpush1.msra.mxu0 %v47
    %149 = vmatprep.subr.mxu0 0.0
    %150 = vmatpush1.msra.mxu0 %v48
    %151 = vmatprep.subr.mxu0 0.0
    %152 = vmatpush1.msra.mxu0 %v49
    %153 = vmatprep.subr.mxu0 0.0
    %154 = vmatpush1.msra.mxu0 %v50
    %155 = vmatprep.subr.mxu0 0.0
    %156 = vmatpush1.msra.mxu0 %v51
    %157 = vmatprep.subr.mxu0 0.0
    %158 = vmatpush1.msra.mxu0 %v52
    %159 = vmatprep.subr.mxu0 0.0
    %160 = vmatpush1.msra.mxu0 %v53
    %161 = vmatprep.subr.mxu0 0.0
    %162 = vmatpush1.msra.mxu0 %v54
    %163 = vmatprep.subr.mxu0 0.0
    %164 = vmatpush1.msra.mxu0 %v55
    %165 = vmatprep.subr.mxu0 0.0
    %166 = vmatpush1.msra.mxu0 %v56
    %167 = vmatprep.subr.mxu0 0.0
    %168 = vmatpush1.msra.mxu0 %v57
    %169 = vmatprep.subr.mxu0 0.0
    %170 = vmatpush1.msra.mxu0 %v58
    %171 = vmatprep.subr.mxu0 0.0
    %172 = vmatpush1.msra.mxu0 %v59
    %173 = vmatprep.mubr.f32.mxu0 %v101
    %174 = vmatmul.mubr.f32.gmra.mrb[0].mxu0 %v93
    %v175 = vpop.f32.mrb[0].mxu0
    %v176 = vadd.f32 %v83, %v175
    %v177 = vpop.f32.mrb[0].mxu0
    %178 = vdwg.mxu0
    %179 = vmatprep.subr.mxu0 0.0
    %180 = vmatpush1.msra.mxu0 %v60
    %181 = vmatprep.subr.mxu0 0.0
    %182 = vmatpush1.msra.mxu0 %v61
    %183 = vmatprep.subr.mxu0 0.0
    %184 = vmatpush1.msra.mxu0 %v62
    %185 = vmatprep.subr.mxu0 0.0
    %186 = vmatpush1.msra.mxu0 %v63
    %187 = vmatprep.subr.mxu0 0.0
    %188 = vmatpush1.msra.mxu0 %v64
    %189 = vmatprep.subr.mxu0 0.0
    %190 = vmatpush1.msra.mxu0 %v65
    %191 = vmatprep.subr.mxu0 0.0
    %192 = vmatpush1.msra.mxu0 %v66
    %193 = vmatprep.subr.mxu0 0.0
    %194 = vmatpush1.msra.mxu0 %v67
    %195 = vmatprep.subr.mxu0 0.0
    %196 = vmatpush1.msra.mxu0 %v68
    %197 = vmatprep.subr.mxu0 0.0
    %198 = vmatpush1.msra.mxu0 %v69
    %199 = vmatprep.subr.mxu0 0.0
    %200 = vmatpush1.msra.mxu0 %v70
    %201 = vmatprep.subr.mxu0 0.0
    %202 = vmatpush1.msra.mxu0 %v71
    %203 = vmatprep.subr.mxu0 0.0
    %204 = vmatpush1.msra.mxu0 %v72
    %205 = vmatprep.subr.mxu0 0.0
    %206 = vmatpush1.msra.mxu0 %v73
    %207 = vmatprep.subr.mxu0 0.0
    %208 = vmatpush1.msra.mxu0 %v74
    %209 = vmatprep.subr.mxu0 0.0
    %210 = vmatpush1.msra.mxu0 %v75
    %211 = vmatprep.subr.mxu0 0.0
    %212 = vmatpush1.msra.mxu0 %v76
    %213 = vmatprep.subr.mxu0 0.0
    %214 = vmatpush1.msra.mxu0 %v77
    %215 = vmatprep.subr.mxu0 0.0
    %216 = vmatpush1.msra.mxu0 0.0
    %217 = vmatprep.subr.mxu0 0.0
    %218 = vmatpush1.msra.mxu0 0.0
    %219 = vmatprep.subr.mxu0 0.0
    %220 = vmatpush1.msra.mxu0 0.0
    %221 = vmatprep.subr.mxu0 0.0
    %222 = vmatpush1.msra.mxu0 0.0
    %223 = vmatprep.subr.mxu0 0.0
    %224 = vmatpush1.msra.mxu0 0.0
    %225 = vmatprep.subr.mxu0 0.0
    %226 = vmatpush1.msra.mxu0 0.0
    %227 = vmatprep.subr.mxu0 0.0
    %228 = vmatpush1.msra.mxu0 0.0
    %229 = vmatprep.subr.mxu0 0.0
    %230 = vmatpush1.msra.mxu0 0.0
    %231 = vmatprep.subr.mxu0 0.0
    %232 = vmatpush1.msra.mxu0 0.0
    %233 = vmatprep.subr.mxu0 0.0
    %234 = vmatpush1.msra.mxu0 0.0
    %235 = vmatprep.subr.mxu0 0.0
    %236 = vmatpush1.msra.mxu0 0.0
    %237 = vmatprep.subr.mxu0 0.0
    %238 = vmatpush1.msra.mxu0 0.0
    %239 = vmatprep.subr.mxu0 0.0
    %240 = vmatpush1.msra.mxu0 0.0
    %241 = vmatprep.subr.mxu0 0.0
    %242 = vmatpush1.msra.mxu0 0.0
    %243 = vmatprep.mubr.f32.mxu0 %v107
    %244 = vmatmul.mubr.f32.gmra.mrb[0].mxu0 %v100
    %v245 = vpop.f32.mrb[0].mxu0
    %v246 = vadd.f32 %v176, %v245
    %v247 = vpop.f32.mrb[0].mxu0
    %248 = vdwg.mxu0
    %v249 = vmul.f32 %v246, 0.5
    %v250 = vtanh.pop %v249
    %v251 = vadd.f32 %v250, 1.0
    %v252 = vmul.f32 %v251, 0.5
    %v253 = vld [vmem:[%s3] sm:$0xff]
    %v254 = vld [vmem:[%s3 + $0x8] sm:$0xff]
    %v255 = vld [vmem:[%s3 + $0x10] sm:$0xff]
    %v256 = vld [vmem:[%s3 + $0x18] sm:$0xff]
    %v257 = vld [vmem:[%s3 + $0x20] sm:$0xff]
    %v258 = vld [vmem:[%s3 + $0x28] sm:$0xff]
    %v259 = vld [vmem:[%s3 + $0x30] sm:$0xff]
    %v260 = vld [vmem:[%s3 + $0x38] sm:$0xff]
    %v261 = vld [vmem:[%s3 + $0x40] sm:$0xff]
    %v262 = vld [vmem:[%s3 + $0x48] sm:$0xff]
    %v263 = vld [vmem:[%s3 + $0x50] sm:$0xff]
    %v264 = vld [vmem:[%s3 + $0x58] sm:$0xff]
    %v265 = vld [vmem:[%s3 + $0x60] sm:$0xff]
    %v266 = vld [vmem:[%s3 + $0x68] sm:$0xff]
    %v267 = vld [vmem:[%s3 + $0x70] sm:$0xff]
    %v268 = vld [vmem:[%s3 + $0x78] sm:$0xff]
    %v269 = vld [vmem:[%s4] sm:$0x1]
    %v271 = vlaneseq
    %v272 = vshrl.u32 %v271, 7
    %v273 = vsub.s32 0, %v272
    %v274 = vrot.slane %v269, %v273
    %276 = vmatprep.subr.mxu0 0.0
    %277 = vmatpush1.msra.mxu0 %v253
    %278 = vmatprep.subr.mxu0 0.0
    %279 = vmatpush1.msra.mxu0 %v254
    %280 = vmatprep.subr.mxu0 0.0
    %281 = vmatpush1.msra.mxu0 %v255
    %282 = vmatprep.subr.mxu0 0.0
    %283 = vmatpush1.msra.mxu0 %v256
    %284 = vmatprep.subr.mxu0 0.0
    %285 = vmatpush1.msra.mxu0 %v257
    %286 = vmatprep.subr.mxu0 0.0
    %287 = vmatpush1.msra.mxu0 %v258
    %288 = vmatprep.subr.mxu0 0.0
    %289 = vmatpush1.msra.mxu0 %v259
    %290 = vmatprep.subr.mxu0 0.0
    %291 = vmatpush1.msra.mxu0 %v260
    %292 = vmatprep.subr.mxu0 0.0
    %293 = vmatpush1.msra.mxu0 %v261
    %294 = vmatprep.subr.mxu0 0.0
    %295 = vmatpush1.msra.mxu0 %v262
    %296 = vmatprep.subr.mxu0 0.0
    %297 = vmatpush1.msra.mxu0 %v263
    %298 = vmatprep.subr.mxu0 0.0
    %299 = vmatpush1.msra.mxu0 %v264
    %300 = vmatprep.subr.mxu0 0.0
    %301 = vmatpush1.msra.mxu0 %v265
    %302 = vmatprep.subr.mxu0 0.0
    %303 = vmatpush1.msra.mxu0 %v266
    %304 = vmatprep.subr.mxu0 0.0
    %305 = vmatpush1.msra.mxu0 %v267
    %306 = vmatprep.subr.mxu0 0.0
    %307 = vmatpush1.msra.mxu0 %v268
    %308 = vmatprep.subr.mxu0 0.0
    %309 = vmatpush1.msra.mxu0 0.0
    %310 = vmatprep.subr.mxu0 0.0
    %311 = vmatpush1.msra.mxu0 0.0
    %312 = vmatprep.subr.mxu0 0.0
    %313 = vmatpush1.msra.mxu0 0.0
    %314 = vmatprep.subr.mxu0 0.0
    %315 = vmatpush1.msra.mxu0 0.0
    %316 = vmatprep.subr.mxu0 0.0
    %317 = vmatpush1.msra.mxu0 0.0
    %318 = vmatprep.subr.mxu0 0.0
    %319 = vmatpush1.msra.mxu0 0.0
    %320 = vmatprep.subr.mxu0 0.0
    %321 = vmatpush1.msra.mxu0 0.0
    %322 = vmatprep.subr.mxu0 0.0
    %323 = vmatpush1.msra.mxu0 0.0
    %324 = vmatprep.subr.mxu0 0.0
    %325 = vmatpush1.msra.mxu0 0.0
    %326 = vmatprep.subr.mxu0 0.0
    %327 = vmatpush1.msra.mxu0 0.0
    %328 = vmatprep.subr.mxu0 0.0
    %329 = vmatpush1.msra.mxu0 0.0
    %330 = vmatprep.subr.mxu0 0.0
    %331 = vmatpush1.msra.mxu0 0.0
    %332 = vmatprep.subr.mxu0 0.0
    %333 = vmatpush1.msra.mxu0 0.0
    %334 = vmatprep.subr.mxu0 0.0
    %335 = vmatpush1.msra.mxu0 0.0
    %336 = vmatprep.subr.mxu0 0.0
    %337 = vmatpush1.msra.mxu0 0.0
    %338 = vmatprep.subr.mxu0 0.0
    %339 = vmatpush1.msra.mxu0 0.0
    %340 = vmatprep.mubr.f32.mxu0 0.0
    %341 = vmatmul.mubr.f32.gmra.mrb[0].mxu0 %v252
    %v342 = vpop.f32.mrb[0].mxu0
    %v343 = vadd.f32 %v274, %v342
    %v344 = vpop.f32.mrb[0].mxu0
    %345 = vdwg.mxu0
    %v346 = vmul.f32 %v343, 0.5
    %v347 = vtanh.pop %v346
    %v348 = vadd.f32 %v347, 1.0
    %v349 = vmul.f32 %v348, 0.5
    %v350 = vld [vmem:[%s5] sm:$0xff]
    %v351 = vld [vmem:[%s5 + $0x8] sm:$0xff]
    %v352 = vld [vmem:[%s5 + $0x10] sm:$0xff]
    %v353 = vld [vmem:[%s5 + $0x18] sm:$0xff]
    %v354 = vld [vmem:[%s5 + $0x20] sm:$0xff]
    %v355 = vld [vmem:[%s5 + $0x28] sm:$0xff]
    %v356 = vld [vmem:[%s5 + $0x30] sm:$0xff]
    %v357 = vld [vmem:[%s5 + $0x38] sm:$0xff]
    %v358 = vld [vmem:[%s5 + $0x40] sm:$0xff]
    %v359 = vld [vmem:[%s5 + $0x48] sm:$0xff]
    %v360 = vld [vmem:[%s5 + $0x50] sm:$0xff]
    %v361 = vld [vmem:[%s5 + $0x58] sm:$0xff]
    %v362 = vld [vmem:[%s5 + $0x60] sm:$0xff]
    %v363 = vld [vmem:[%s5 + $0x68] sm:$0xff]
    %v364 = vld [vmem:[%s5 + $0x70] sm:$0xff]
    %v365 = vld [vmem:[%s5 + $0x78] sm:$0xff]
    %v366 = vld [vmem:[%s6] sm:$0x1]
    %v368 = vlaneseq
    %v369 = vshrl.u32 %v368, 7
    %v370 = vsub.s32 0, %v369
    %v371 = vrot.slane %v366, %v370
    %373 = vmatprep.subr.mxu0 0.0
    %374 = vmatpush1.msra.mxu0 %v350
    %375 = vmatprep.subr.mxu0 0.0
    %376 = vmatpush1.msra.mxu0 %v351
    %377 = vmatprep.subr.mxu0 0.0
    %378 = vmatpush1.msra.mxu0 %v352
    %379 = vmatprep.subr.mxu0 0.0
    %380 = vmatpush1.msra.mxu0 %v353
    %381 = vmatprep.subr.mxu0 0.0
    %382 = vmatpush1.msra.mxu0 %v354
    %383 = vmatprep.subr.mxu0 0.0
    %384 = vmatpush1.msra.mxu0 %v355
    %385 = vmatprep.subr.mxu0 0.0
    %386 = vmatpush1.msra.mxu0 %v356
    %387 = vmatprep.subr.mxu0 0.0
    %388 = vmatpush1.msra.mxu0 %v357
    %389 = vmatprep.subr.mxu0 0.0
    %390 = vmatpush1.msra.mxu0 %v358
    %391 = vmatprep.subr.mxu0 0.0
    %392 = vmatpush1.msra.mxu0 %v359
    %393 = vmatprep.subr.mxu0 0.0
    %394 = vmatpush1.msra.mxu0 %v360
    %395 = vmatprep.subr.mxu0 0.0
    %396 = vmatpush1.msra.mxu0 %v361
    %397 = vmatprep.subr.mxu0 0.0
    %398 = vmatpush1.msra.mxu0 %v362
    %399 = vmatprep.subr.mxu0 0.0
    %400 = vmatpush1.msra.mxu0 %v363
    %401 = vmatprep.subr.mxu0 0.0
    %402 = vmatpush1.msra.mxu0 %v364
    %403 = vmatprep.subr.mxu0 0.0
    %404 = vmatpush1.msra.mxu0 %v365
    %405 = vmatprep.subr.mxu0 0.0
    %406 = vmatpush1.msra.mxu0 0.0
    %407 = vmatprep.subr.mxu0 0.0
    %408 = vmatpush1.msra.mxu0 0.0
    %409 = vmatprep.subr.mxu0 0.0
    %410 = vmatpush1.msra.mxu0 0.0
    %411 = vmatprep.subr.mxu0 0.0
    %412 = vmatpush1.msra.mxu0 0.0
    %413 = vmatprep.subr.mxu0 0.0
    %414 = vmatpush1.msra.mxu0 0.0
    %415 = vmatprep.subr.mxu0 0.0
    %416 = vmatpush1.msra.mxu0 0.0
    %417 = vmatprep.subr.mxu0 0.0
    %418 = vmatpush1.msra.mxu0 0.0
    %419 = vmatprep.subr.mxu0 0.0
    %420 = vmatpush1.msra.mxu0 0.0
    %421 = vmatprep.subr.mxu0 0.0
    %422 = vmatpush1.msra.mxu0 0.0
    %423 = vmatprep.subr.mxu0 0.0
    %424 = vmatpush1.msra.mxu0 0.0
    %425 = vmatprep.subr.mxu0 0.0
    %426 = vmatpush1.msra.mxu0 0.0
    %427 = vmatprep.subr.mxu0 0.0
    %428 = vmatpush1.msra.mxu0 0.0
    %429 = vmatprep.subr.mxu0 0.0
    %430 = vmatpush1.msra.mxu0 0.0
    %431 = vmatprep.subr.mxu0 0.0
    %432 = vmatpush1.msra.mxu0 0.0
    %433 = vmatprep.subr.mxu0 0.0
    %434 = vmatpush1.msra.mxu0 0.0
    %435 = vmatprep.subr.mxu0 0.0
    %436 = vmatpush1.msra.mxu0 0.0
    %437 = vmatprep.mubr.f32.mxu0 0.0
    %438 = vmatmul.mubr.f32.gmra.mrb[0].mxu0 %v349
    %v439 = vpop.f32.mrb[0].mxu0
    %v440 = vadd.f32 %v371, %v439
    %v441 = vpop.f32.mrb[0].mxu0
    %442 = vdwg.mxu0
    %v443 = vlaneseq
    %v444 = vand.u32 %v443, 127
    %vm445 = vcmp.lt.s32.totalorder %v444, 10
    %v446 = vsel %vm445, %v440, -1e+30
    %vm447 = vcmask 1041408
    %v448 = vsel %vm447, %v446, -inf
    %449 = vmax.xlane.f32.xlu0 %v448
    %v450 = vpop.xlane.xlu0 %449
    %v451 = vsub.f32 %v446, %v450
    %v452 = vmul.f32 %v451, 1.442695
    %v453 = vpow.pop %v452
    %v454 = vsel %vm447, %v453, 0.0
    %455 = vadd.xlane.f32.xlu0 %v454
    %v456 = vpop.xlane.xlu0 %455
    %v457 = vlog2.pop %v456
    %v458 = vmul.f32 %v457, 0.6931472
    %v459 = vsub.f32 %v451, %v458
    %460 = vst [vmem:[#allocation2] sm:$0x3] %v459
    // Predicated region
    $region30: #{lenet5_forward.5} parent=1 // pred_check
      _
    $region31: #{lenet5_forward.5} parent=1 // pred_check_branch
      %462 = sbr.rel (0) target = $region33
    $region32: #{lenet5_forward.5} parent=1 // pred_region
      %s464 = ssub.s32 32, 32
      %465 = vsyncadd [#allocation3], %s464
      %s467 = sshll.u32 [#allocation2], 4
      %s468 = int_to_ptr.vmem [resolvable:$true] %s467
      %470 = dma.vmem_to_hbm [thread:$0]  %s468, 32, %s7, [#allocation3]
    $region33: #{lenet5_forward.5} parent=1 // pred_fallthru
      _
    // Predicated region
    $region34: #{lenet5_forward.5} parent=1 // pred_check
      _
    $region35: #{lenet5_forward.5} parent=1 // pred_check_branch
      %472 = sbr.rel (0) target = $region37
    $region36: #{lenet5_forward.5} parent=1 // pred_region
      %473 = dma.done [#allocation3], 32
    $region37: #{lenet5_forward.5} parent=1 // pred_fallthru
      _
    %474 = vsyncpa [#allocation3], 1

</llo_original>
